<compile_context>
chip_gen: v7x
topology: tpu7x:2x2x1
jax: 0.10.0
libtpu: 0.0.40
codegen_flags: <defaults>
</compile_context>

<pallas_src>
import functools

import jax
import jax.numpy as jnp
from jax.experimental import pallas as pl
from jax.experimental.pallas import tpu as pltpu


def _double_conv_kernel(x_ref, w1_ref, b1_ref, w2_ref, b2_ref, o_ref, xpad_ref,
                        *, H, W, TILE_H):
    """One (batch element, output row-tile) grid step.

    x_ref:   (1, Cin, H*W)        whole input image, flat spatial (lane-dense DMA)
    w1_ref:  (Cout, 9*Cin)        im2col weights, row order (kh, kw, ci)
    b1_ref:  (Cout, 1)
    w2_ref:  (Cout, 9*Cout)
    b2_ref:  (Cout, 1)
    o_ref:   (1, Cout, TILE_H*W)  flat spatial output tile (lane-dense store)
    xpad_ref:(Cin, H+4, W+2)      VMEM scratch: zero-padded input image (filled at i==0)
    """
    i = pl.program_id(1)
    Cin = xpad_ref.shape[0]
    Cout = o_ref.shape[1]
    HT2 = TILE_H + 2                      # intermediate rows needed (1-row halo each side)

    # --- once per batch element: stage the zero-padded image in VMEM (no HBM pad copy) ---
    @pl.when(i == 0)
    def _():
        xpad_ref[...] = jnp.zeros_like(xpad_ref)
        xpad_ref[:, 2:H + 2, 1:W + 1] = x_ref[0].reshape(Cin, H, W).astype(xpad_ref.dtype)

    # Output rows [t, t+TILE_H); needs x rows [t-2, t+TILE_H+2) == xpad rows [t, t+TILE_H+4).
    t = pl.multiple_of(i * TILE_H, TILE_H)
    xt = xpad_ref[:, pl.ds(t, TILE_H + 4), :]                      # (Cin, TILE_H+4, W+2)

    # --- conv1 + bias + ReLU over TILE_H+2 rows (halo for conv2): single im2col matmul ---
    m1 = HT2 * W
    cols = []
    for kh in range(3):
        for kw in range(3):
            cols.append(xt[:, kh:kh + HT2, kw:kw + W].reshape(Cin, m1))
    patch1 = jnp.concatenate(cols, axis=0)                         # (9*Cin, HT2*W)
    h = jnp.dot(w1_ref[...], patch1, preferred_element_type=jnp.float32)
    h = jnp.maximum(h + b1_ref[...], 0.0)                          # (Cout, HT2*W)

    # Rows outside the image act as conv2's zero padding -> force them to exactly 0
    # (conv1 on padded rows produces relu(bias) != 0, so masking is required).
    h = h.reshape(Cout, HT2, W)
    row_g = t - 1 + jax.lax.broadcasted_iota(jnp.int32, (1, HT2, 1), 1)
    h = jnp.where((row_g >= 0) & (row_g < H), h, 0.0)
    zcol = jnp.zeros((Cout, HT2, 1), h.dtype)
    hp = jnp.concatenate([zcol, h, zcol], axis=2)                  # (Cout, HT2, W+2)

    # --- conv2 + bias + ReLU over the TILE_H output rows ---
    m2 = TILE_H * W
    cols2 = []
    for kh in range(3):
        for kw in range(3):
            cols2.append(hp[:, kh:kh + TILE_H, kw:kw + W].reshape(Cout, m2))
    patch2 = jnp.concatenate(cols2, axis=0)                        # (9*Cout, TILE_H*W)
    y = jnp.dot(w2_ref[...], patch2, preferred_element_type=jnp.float32)
    y = jnp.maximum(y + b2_ref[...], 0.0)
    o_ref[0] = y.astype(o_ref.dtype)                               # lane-dense store


def _pick_tile_h(H, W, cin, cout, vmem_budget_bytes=8 * 1024 * 1024):
    """Largest TILE_H that (a) divides H, (b) gives a lane-dense output tile
    (TILE_H*W multiple of 128 -> unmasked vst), and (c) keeps the per-step in-kernel
    intermediates (im2col patches + activations, all f32) under a VMEM budget.
    Falls back to the whole image (block == full dims, always legal)."""
    # f32 bytes per output-tile element across the dominant temporaries:
    #   patch1 (9*cin) + h/hp/y (~3*cout) + patch2 (9*cout)
    per_elem = 4 * (9 * cin + 9 * cout + 3 * cout)
    max_elems = max(128, vmem_budget_bytes // per_elem)
    for d in range(H, 0, -1):                     # includes d == H: no halo recompute at all
        if H % d == 0 and (d * W) % 128 == 0 and d * W <= max_elems:
            return d
    return H


def double_conv(x, params, *, tile_h=None):
    """Fused DoubleConv forward. x: (N, Cin, H, W) -> (N, Cout, H, W). NCHW throughout."""
    w1, b1, w2, b2 = params                  # OIHW weights, (Cout,) biases (PyTorch layout)
    N, Cin, H, W = x.shape
    Cout, _, KH, KW = w1.shape
    assert (KH, KW) == (3, 3), "kernel written for kernel_size=3, padding=1"

    TILE_H = tile_h if tile_h is not None else _pick_tile_h(H, W, Cin, Cout)
    T = H // TILE_H

    # im2col weight layout: (Cout, KH*KW*C), row order (kh, kw, c) to match patch build.
    w1m = jnp.transpose(w1, (0, 2, 3, 1)).reshape(Cout, KH * KW * Cin)
    w2m = jnp.transpose(w2, (0, 2, 3, 1)).reshape(Cout, KH * KW * Cout)
    b1c = b1.reshape(Cout, 1)
    b2c = b2.reshape(Cout, 1)
    x_flat = x.reshape(N, Cin, H * W)        # free reshape -> lane-dense input DMA

    kernel = functools.partial(_double_conv_kernel, H=H, W=W, TILE_H=TILE_H)
    y_flat = pl.pallas_call(
        kernel,
        out_shape=jax.ShapeDtypeStruct((N, Cout, H * W), x.dtype),
        grid_spec=pltpu.PrefetchScalarGridSpec(
            num_scalar_prefetch=0,
            grid=(N, T),
            in_specs=[
                pl.BlockSpec((1, Cin, H * W), lambda n, i: (n, 0, 0)),   # fetched once per n
                pl.BlockSpec((Cout, KH * KW * Cin), lambda n, i: (0, 0)),
                pl.BlockSpec((Cout, 1), lambda n, i: (0, 0)),
                pl.BlockSpec((Cout, KH * KW * Cout), lambda n, i: (0, 0)),
                pl.BlockSpec((Cout, 1), lambda n, i: (0, 0)),
            ],
            out_specs=pl.BlockSpec((1, Cout, TILE_H * W), lambda n, i: (n, 0, i)),
            scratch_shapes=[pltpu.VMEM((Cin, H + 4, W + 2), jnp.float32)],
        ),
        compiler_params=pltpu.CompilerParams(
            # row-tile axis is "arbitrary": the padded-image scratch is carried across it.
            dimension_semantics=("parallel", "arbitrary"),
            vmem_limit_bytes=32 * 1024 * 1024,
        ),
    )(x_flat, w1m, b1c, w2m, b2c)
    return y_flat.reshape(N, Cout, H, W)


def init_params(key, in_channels, out_channels, kernel_size=3):
    """PyTorch-style init: uniform(-1/sqrt(fan_in), 1/sqrt(fan_in)); weights in OIHW."""
    k1, k2, k3, k4 = jax.random.split(key, 4)
    bd1 = 1.0 / float(in_channels * kernel_size * kernel_size) ** 0.5
    bd2 = 1.0 / float(out_channels * kernel_size * kernel_size) ** 0.5
    w1 = jax.random.uniform(k1, (out_channels, in_channels, kernel_size, kernel_size),
                            jnp.float32, -bd1, bd1)
    b1 = jax.random.uniform(k2, (out_channels,), jnp.float32, -bd1, bd1)
    w2 = jax.random.uniform(k3, (out_channels, out_channels, kernel_size, kernel_size),
                            jnp.float32, -bd2, bd2)
    b2 = jax.random.uniform(k4, (out_channels,), jnp.float32, -bd2, bd2)
    return w1, b1, w2, b2


def _reference_double_conv(x, params):
    """Pure-JAX reference (NCHW, OIHW)."""
    w1, b1, w2, b2 = params
    dn = ("NCHW", "OIHW", "NCHW")
    h = jax.lax.conv_general_dilated(x, w1, (1, 1), ((1, 1), (1, 1)), dimension_numbers=dn)
    h = jnp.maximum(h + b1[None, :, None, None], 0.0)
    y = jax.lax.conv_general_dilated(h, w2, (1, 1), ((1, 1), (1, 1)), dimension_numbers=dn)
    return jnp.maximum(y + b2[None, :, None, None], 0.0)


if __name__ == "__main__":
    key = jax.random.PRNGKey(0)
    kx, kp = jax.random.split(key)

    N, Cin, H, W = 2, 4, 16, 16
    Cout = 8

    x = jax.random.normal(kx, (N, Cin, H, W), jnp.float32)
    params = init_params(kp, Cin, Cout, kernel_size=3)

    out = jax.block_until_ready(jax.jit(double_conv)(x, params))
    ref = _reference_double_conv(x, params)

    assert out.shape == (N, Cout, H, W)
    assert jnp.allclose(out, ref, atol=2e-3, rtol=2e-3), "mismatch vs reference"

    print("KERNEL_OK")
</pallas_src>

<mosaic_0001>
module attributes {stable_mosaic.version = 11 : i64} {
  func.func @_double_conv_kernel(%arg0: i32, %arg1: i32, %arg2: memref<1x4x256xf32, #tpu.memory_space<vmem>>, %arg3: memref<8x36xf32, #tpu.memory_space<vmem>>, %arg4: memref<8x1xf32, #tpu.memory_space<vmem>>, %arg5: memref<8x72xf32, #tpu.memory_space<vmem>>, %arg6: memref<8x1xf32, #tpu.memory_space<vmem>>, %arg7: memref<1x8x256xf32, #tpu.memory_space<vmem>>, %arg8: memref<4x20x18xf32, #tpu.memory_space<vmem>>) attributes {dimension_semantics = [#tpu.dimension_semantics<parallel>, #tpu.dimension_semantics<arbitrary>], iteration_bounds = array<i64: 2, 1>, scalar_prefetch = 0 : i64, scratch_operands = 1 : i64, tpu.core_type = #tpu.core_type<tc>, window_params = [{transform_indices = @transform_0, window_bounds = array<i64: 1, 4, 256>}, {pipeline_mode = #tpu.pipeline_mode<synchronous>, transform_indices = @transform_1, window_bounds = array<i64: 8, 36>}, {pipeline_mode = #tpu.pipeline_mode<synchronous>, transform_indices = @transform_2, window_bounds = array<i64: 8, 1>}, {pipeline_mode = #tpu.pipeline_mode<synchronous>, transform_indices = @transform_3, window_bounds = array<i64: 8, 72>}, {pipeline_mode = #tpu.pipeline_mode<synchronous>, transform_indices = @transform_4, window_bounds = array<i64: 8, 1>}, {transform_indices = @transform_5, window_bounds = array<i64: 1, 8, 256>}]} {
    %c0_i32 = arith.constant 0 : i32
    %0 = arith.cmpi eq, %arg1, %c0_i32 : i32
    %1 = arith.extui %0 : i1 to i32
    %c0_i32_0 = arith.constant 0 : i32
    %2 = arith.cmpi ne, %1, %c0_i32_0 : i32
    scf.if %2 {
      %cst_20 = arith.constant 0.000000e+00 : f32
      %78 = vector.broadcast %cst_20 : f32 to vector<4x20x18xf32>
      %c0_21 = arith.constant 0 : index
      %c0_22 = arith.constant 0 : index
      %c0_23 = arith.constant 0 : index
      %79 = vector.load %arg8[%c0_21, %c0_22, %c0_23] : memref<4x20x18xf32, #tpu.memory_space<vmem>>, vector<4x20x18xf32>
      tpu.vector_store %arg8[%c0_21, %c0_22, %c0_23], %78 {strides = array<i32>} : memref<4x20x18xf32, #tpu.memory_space<vmem>>, vector<4x20x18xf32>,
      %c0_24 = arith.constant 0 : index
      %c0_25 = arith.constant 0 : index
      %c0_26 = arith.constant 0 : index
      %80 = vector.load %arg2[%c0_24, %c0_25, %c0_26] : memref<1x4x256xf32, #tpu.memory_space<vmem>>, vector<1x4x256xf32>
      %81 = vector.shape_cast %80 : vector<1x4x256xf32> to vector<4x256xf32>
      %82 = vector.shape_cast %81 : vector<4x256xf32> to vector<4x16x16xf32>
      %c0_27 = arith.constant 0 : index
      %c2 = arith.constant 2 : index
      %c1 = arith.constant 1 : index
      %83 = vector.load %arg8[%c0_27, %c2, %c1] : memref<4x20x18xf32, #tpu.memory_space<vmem>>, vector<4x16x16xf32>
      tpu.vector_store %arg8[%c0_27, %c2, %c1], %82 {strides = array<i32>} : memref<4x20x18xf32, #tpu.memory_space<vmem>>, vector<4x16x16xf32>,
    } else {
    }
    %c16_i32 = arith.constant 16 : i32
    %3 = arith.muli %arg1, %c16_i32 : i32
    %4 = tpu.assume_multiple %3, 16 : i32
    %c0 = arith.constant 0 : index
    %5 = arith.index_cast %4 : i32 to index
    %c0_1 = arith.constant 0 : index
    %6 = vector.load %arg8[%c0, %5, %c0_1] : memref<4x20x18xf32, #tpu.memory_space<vmem>>, vector<4x20x18xf32>
    %7 = vector.extract_strided_slice %6 {offsets = [0, 0, 0], sizes = [4, 18, 16], strides = [1, 1, 1]} : vector<4x20x18xf32> to vector<4x18x16xf32>
    %8 = vector.shape_cast %7 : vector<4x18x16xf32> to vector<4x288xf32>
    %9 = vector.extract_strided_slice %6 {offsets = [0, 0, 1], sizes = [4, 18, 16], strides = [1, 1, 1]} : vector<4x20x18xf32> to vector<4x18x16xf32>
    %10 = vector.shape_cast %9 : vector<4x18x16xf32> to vector<4x288xf32>
    %11 = vector.extract_strided_slice %6 {offsets = [0, 0, 2], sizes = [4, 18, 16], strides = [1, 1, 1]} : vector<4x20x18xf32> to vector<4x18x16xf32>
    %12 = vector.shape_cast %11 : vector<4x18x16xf32> to vector<4x288xf32>
    %13 = vector.extract_strided_slice %6 {offsets = [0, 1, 0], sizes = [4, 18, 16], strides = [1, 1, 1]} : vector<4x20x18xf32> to vector<4x18x16xf32>
    %14 = vector.shape_cast %13 : vector<4x18x16xf32> to vector<4x288xf32>
    %15 = vector.extract_strided_slice %6 {offsets = [0, 1, 1], sizes = [4, 18, 16], strides = [1, 1, 1]} : vector<4x20x18xf32> to vector<4x18x16xf32>
    %16 = vector.shape_cast %15 : vector<4x18x16xf32> to vector<4x288xf32>
    %17 = vector.extract_strided_slice %6 {offsets = [0, 1, 2], sizes = [4, 18, 16], strides = [1, 1, 1]} : vector<4x20x18xf32> to vector<4x18x16xf32>
    %18 = vector.shape_cast %17 : vector<4x18x16xf32> to vector<4x288xf32>
    %19 = vector.extract_strided_slice %6 {offsets = [0, 2, 0], sizes = [4, 18, 16], strides = [1, 1, 1]} : vector<4x20x18xf32> to vector<4x18x16xf32>
    %20 = vector.shape_cast %19 : vector<4x18x16xf32> to vector<4x288xf32>
    %21 = vector.extract_strided_slice %6 {offsets = [0, 2, 1], sizes = [4, 18, 16], strides = [1, 1, 1]} : vector<4x20x18xf32> to vector<4x18x16xf32>
    %22 = vector.shape_cast %21 : vector<4x18x16xf32> to vector<4x288xf32>
    %23 = vector.extract_strided_slice %6 {offsets = [0, 2, 2], sizes = [4, 18, 16], strides = [1, 1, 1]} : vector<4x20x18xf32> to vector<4x18x16xf32>
    %24 = vector.shape_cast %23 : vector<4x18x16xf32> to vector<4x288xf32>
    %25 = tpu.concatenate %8, %10, %12, %14, %16, %18, %20, %22, %24 in 0 : vector<4x288xf32>, vector<4x288xf32>, vector<4x288xf32>, vector<4x288xf32>, vector<4x288xf32>, vector<4x288xf32>, vector<4x288xf32>, vector<4x288xf32>, vector<4x288xf32> -> vector<36x288xf32>
    %c0_2 = arith.constant 0 : index
    %c0_3 = arith.constant 0 : index
    %26 = vector.load %arg3[%c0_2, %c0_3] : memref<8x36xf32, #tpu.memory_space<vmem>>, vector<8x36xf32>
    %cst = arith.constant dense<0.000000e+00> : vector<8x288xf32>
    %27 = tpu.matmul %26, %25, %cst {dimension_numbers = #tpu.dot_dimension_numbers<[1], [0], [0], [1], [0, 0, 1, 1], [], []>} : vector<8x36xf32>, vector<36x288xf32>, vector<8x288xf32> -> vector<8x288xf32>
    %c0_4 = arith.constant 0 : index
    %c0_5 = arith.constant 0 : index
    %28 = vector.load %arg4[%c0_4, %c0_5] : memref<8x1xf32, #tpu.memory_space<vmem>>, vector<8x1xf32>
    %29 = vector.broadcast %28 : vector<8x1xf32> to vector<8x288xf32>
    %30 = arith.addf %27, %29 : vector<8x288xf32>
    %cst_6 = arith.constant 0.000000e+00 : f32
    %31 = vector.broadcast %cst_6 : f32 to vector<8x288xf32>
    %32 = arith.maximumf %30, %31 : vector<8x288xf32>
    %33 = vector.shape_cast %32 : vector<8x288xf32> to vector<8x18x16xf32>
    %c1_i32 = arith.constant 1 : i32
    %34 = arith.subi %4, %c1_i32 : i32
    %35 = tpu.iota {dimensions = array<i32: 1>} : vector<1x18x1xi32>
    %36 = vector.broadcast %34 : i32 to vector<1x18x1xi32>
    %37 = arith.addi %36, %35 : vector<1x18x1xi32>
    %c0_i32_7 = arith.constant 0 : i32
    %38 = vector.broadcast %c0_i32_7 : i32 to vector<1x18x1xi32>
    %39 = arith.cmpi sge, %37, %38 : vector<1x18x1xi32>
    %c16_i32_8 = arith.constant 16 : i32
    %40 = vector.broadcast %c16_i32_8 : i32 to vector<1x18x1xi32>
    %41 = arith.cmpi slt, %37, %40 : vector<1x18x1xi32>
    %42 = arith.andi %39, %41 : vector<1x18x1xi1>
    %cst_9 = arith.constant 0.000000e+00 : f32
    %43 = vector.shape_cast %42 : vector<1x18x1xi1> to vector<1x18x1xi1>
    %44 = vector.broadcast %43 : vector<1x18x1xi1> to vector<8x18x16xi1>
    %45 = vector.broadcast %cst_9 : f32 to vector<8x18x16xf32>
    %46 = arith.select %44, %33, %45 : vector<8x18x16xi1>, vector<8x18x16xf32>
    %cst_10 = arith.constant 0.000000e+00 : f32
    %47 = vector.broadcast %cst_10 : f32 to vector<8x18x1xf32>
    %48 = tpu.concatenate %47, %46, %47 in 2 : vector<8x18x1xf32>, vector<8x18x16xf32>, vector<8x18x1xf32> -> vector<8x18x18xf32>
    %49 = vector.extract_strided_slice %48 {offsets = [0, 0, 0], sizes = [8, 16, 16], strides = [1, 1, 1]} : vector<8x18x18xf32> to vector<8x16x16xf32>
    %50 = vector.shape_cast %49 : vector<8x16x16xf32> to vector<8x256xf32>
    %51 = vector.extract_strided_slice %48 {offsets = [0, 0, 1], sizes = [8, 16, 16], strides = [1, 1, 1]} : vector<8x18x18xf32> to vector<8x16x16xf32>
    %52 = vector.shape_cast %51 : vector<8x16x16xf32> to vector<8x256xf32>
    %53 = vector.extract_strided_slice %48 {offsets = [0, 0, 2], sizes = [8, 16, 16], strides = [1, 1, 1]} : vector<8x18x18xf32> to vector<8x16x16xf32>
    %54 = vector.shape_cast %53 : vector<8x16x16xf32> to vector<8x256xf32>
    %55 = vector.extract_strided_slice %48 {offsets = [0, 1, 0], sizes = [8, 16, 16], strides = [1, 1, 1]} : vector<8x18x18xf32> to vector<8x16x16xf32>
    %56 = vector.shape_cast %55 : vector<8x16x16xf32> to vector<8x256xf32>
    %57 = vector.extract_strided_slice %48 {offsets = [0, 1, 1], sizes = [8, 16, 16], strides = [1, 1, 1]} : vector<8x18x18xf32> to vector<8x16x16xf32>
    %58 = vector.shape_cast %57 : vector<8x16x16xf32> to vector<8x256xf32>
    %59 = vector.extract_strided_slice %48 {offsets = [0, 1, 2], sizes = [8, 16, 16], strides = [1, 1, 1]} : vector<8x18x18xf32> to vector<8x16x16xf32>
    %60 = vector.shape_cast %59 : vector<8x16x16xf32> to vector<8x256xf32>
    %61 = vector.extract_strided_slice %48 {offsets = [0, 2, 0], sizes = [8, 16, 16], strides = [1, 1, 1]} : vector<8x18x18xf32> to vector<8x16x16xf32>
    %62 = vector.shape_cast %61 : vector<8x16x16xf32> to vector<8x256xf32>
    %63 = vector.extract_strided_slice %48 {offsets = [0, 2, 1], sizes = [8, 16, 16], strides = [1, 1, 1]} : vector<8x18x18xf32> to vector<8x16x16xf32>
    %64 = vector.shape_cast %63 : vector<8x16x16xf32> to vector<8x256xf32>
    %65 = vector.extract_strided_slice %48 {offsets = [0, 2, 2], sizes = [8, 16, 16], strides = [1, 1, 1]} : vector<8x18x18xf32> to vector<8x16x16xf32>
    %66 = vector.shape_cast %65 : vector<8x16x16xf32> to vector<8x256xf32>
    %67 = tpu.concatenate %50, %52, %54, %56, %58, %60, %62, %64, %66 in 0 : vector<8x256xf32>, vector<8x256xf32>, vector<8x256xf32>, vector<8x256xf32>, vector<8x256xf32>, vector<8x256xf32>, vector<8x256xf32>, vector<8x256xf32>, vector<8x256xf32> -> vector<72x256xf32>
    %c0_11 = arith.constant 0 : index
    %c0_12 = arith.constant 0 : index
    %68 = vector.load %arg5[%c0_11, %c0_12] : memref<8x72xf32, #tpu.memory_space<vmem>>, vector<8x72xf32>
    %cst_13 = arith.constant dense<0.000000e+00> : vector<8x256xf32>
    %69 = tpu.matmul %68, %67, %cst_13 {dimension_numbers = #tpu.dot_dimension_numbers<[1], [0], [0], [1], [0, 0, 1, 1], [], []>} : vector<8x72xf32>, vector<72x256xf32>, vector<8x256xf32> -> vector<8x256xf32>
    %c0_14 = arith.constant 0 : index
    %c0_15 = arith.constant 0 : index
    %70 = vector.load %arg6[%c0_14, %c0_15] : memref<8x1xf32, #tpu.memory_space<vmem>>, vector<8x1xf32>
    %71 = vector.broadcast %70 : vector<8x1xf32> to vector<8x256xf32>
    %72 = arith.addf %69, %71 : vector<8x256xf32>
    %cst_16 = arith.constant 0.000000e+00 : f32
    %73 = vector.broadcast %cst_16 : f32 to vector<8x256xf32>
    %74 = arith.maximumf %72, %73 : vector<8x256xf32>
    %c0_17 = arith.constant 0 : index
    %c0_18 = arith.constant 0 : index
    %c0_19 = arith.constant 0 : index
    %75 = vector.load %arg7[%c0_17, %c0_18, %c0_19] : memref<1x8x256xf32, #tpu.memory_space<vmem>>, vector<1x8x256xf32>
    %76 = vector.shape_cast %75 : vector<1x8x256xf32> to vector<8x256xf32>
    %77 = vector.shape_cast %74 : vector<8x256xf32> to vector<1x8x256xf32>
    tpu.vector_store %arg7[%c0_17, %c0_18, %c0_19], %77 {strides = array<i32>} : memref<1x8x256xf32, #tpu.memory_space<vmem>>, vector<1x8x256xf32>,
    return
  }
  func.func @transform_0(%arg0: i32, %arg1: i32) -> (i32, i32, i32) {
    %c0_i32 = arith.constant 0 : i32
    %c0_i32_0 = arith.constant 0 : i32
    %c0_i32_1 = arith.constant 0 : i32
    return %arg0, %c0_i32, %c0_i32_0 : i32, i32, i32
  }
  func.func @transform_1(%arg0: i32, %arg1: i32) -> (i32, i32) {
    %c0_i32 = arith.constant 0 : i32
    %c0_i32_0 = arith.constant 0 : i32
    %c0_i32_1 = arith.constant 0 : i32
    return %c0_i32, %c0_i32_0 : i32, i32
  }
  func.func @transform_2(%arg0: i32, %arg1: i32) -> (i32, i32) {
    %c0_i32 = arith.constant 0 : i32
    %c0_i32_0 = arith.constant 0 : i32
    %c0_i32_1 = arith.constant 0 : i32
    return %c0_i32, %c0_i32_0 : i32, i32
  }
  func.func @transform_3(%arg0: i32, %arg1: i32) -> (i32, i32) {
    %c0_i32 = arith.constant 0 : i32
    %c0_i32_0 = arith.constant 0 : i32
    %c0_i32_1 = arith.constant 0 : i32
    return %c0_i32, %c0_i32_0 : i32, i32
  }
  func.func @transform_4(%arg0: i32, %arg1: i32) -> (i32, i32) {
    %c0_i32 = arith.constant 0 : i32
    %c0_i32_0 = arith.constant 0 : i32
    %c0_i32_1 = arith.constant 0 : i32
    return %c0_i32, %c0_i32_0 : i32, i32
  }
  func.func @transform_5(%arg0: i32, %arg1: i32) -> (i32, i32, i32) {
    %c0_i32 = arith.constant 0 : i32
    %c0_i32_0 = arith.constant 0 : i32
    return %arg0, %c0_i32, %arg1 : i32, i32, i32
  }
}

</mosaic_0001>

<llo_original>
// kernel: double_conv.1
$region0: #{double_conv.1}
  #allocation0 [shape = 'u32[]', space=smem, size = 0x4, offset = 0x4, fixed_abs, tag = 'smem constant byte address 0x4 - core index']
  #allocation1 [shape = 'u32[144,128]{1,0:T(1,128)}', space=vmem, size = 0x12000, scoped, tag = 'internal scratch']
  #allocation2 [shape = 'f32[4,20,18]{2,1,0:T(8,128)}', space=vmem, size = 0xc000, scoped, tag = 'scratch operand']
  %s0 = inlined_call_operand.vmem [shape: f32[2,4,256], index: 0, kind: input, shape index: {}]
  %s1 = inlined_call_operand.vmem [shape: f32[8,36], index: 1, kind: input, shape index: {}]
  %s2 = inlined_call_operand.vmem [shape: f32[8,1], index: 2, kind: input, shape index: {}]
  %s3 = inlined_call_operand.vmem [shape: f32[8,72], index: 3, kind: input, shape index: {}]
  %s4 = inlined_call_operand.vmem [shape: f32[8,1], index: 4, kind: input, shape index: {}]
  %s5 = inlined_call_operand.vmem [shape: f32[2,8,256], index: 5, kind: output, shape index: {}]
  %s6 = sld [smem:[#allocation0]]
  $region57: #{double_conv.1} parent=0
    _
  %s8 = ssub.s32 1, %s6
  %s9 = scalar_select 0, %s8, %s6
  loop: start=0, step=1, limit=4
  $region2: #{double_conv.1} parent=0 // loop_pre_header
    _
  $region3: #{double_conv.1} parent=0 // loop_header
    %s11 = sphi 0, %s15
    %p12 = scmp.ge.s32.totalorder %s11, 4
    %s18 = sphi 0, %s30
    %s19 = sphi 0, %s26
    %s20 = sphi 0, %s18
    %s21 = sphi 0, %s19
    %s22 = sphi 0, %s20
    %s23 = sphi 0, %s21
    %s33 = sphi 0, %s35
    %s36 = sphi 0, %s33
    %s37 = sphi 0, %s36
    %s53 = sphi 0, %s37
    %s57 = sphi 0, %s57
    %s59 = sphi 0, %s57
    %s60 = sphi 0, %s59
    %s74 = sphi 0, %s60
    %s78 = sphi 0, %s78
    %s80 = sphi 0, %s78
    %s81 = sphi 0, %s80
    %s95 = sphi 0, %s81
    %s99 = sphi 0, %s99
    %s101 = sphi 0, %s99
    %s102 = sphi 0, %s101
    %s116 = sphi 0, %s102
    %s120 = sphi 0, %s120
    %s122 = sphi 0, %s120
    %s123 = sphi 0, %s122
    %s137 = sphi 0, %s123
    %s145 = sphi 0, %s147
    %s148 = sphi 0, %s145
    %s149 = sphi 0, %s148
    %s165 = sphi 0, %s149
  $region4: #{double_conv.1} parent=0 // loop_header_branch
    %14 = sbr.rel (%p12) target = $region8
  $region5: #{double_conv.1} parent=0 // loop_body
    %s16 = ssub.s32 %s11, 1
    %s17 = ssub.s32 %s11, 2
    %s24 = sadd.s32 1, %s19
    %p25 = scmp.ge.s32.totalorder %s24, 1
    %s26 = scalar_select %p25, 0, %s24
    %s27 = sadd.s32 1, %s18
    %s28 = scalar_select %p25, %s27, %s18
    %p29 = scmp.ge.s32.totalorder %s28, 2
    %s30 = scalar_select %p29, 0, %s28
    %s31 = ssub.s32 %s18, %s30
    %p32 = scmp.eq.s32.totalorder %s31, 0
    %s34 = sadd.s32 %s33, 1
    %s35 = scalar_select %p32, %s33, %s34
    %p38 = pneg %p32
    %p39 = scmp.eq.s32.totalorder %s11, 1
    %p40 = por %p38, %p39
    %p41 = scmp.ne.s32.totalorder %s33, %s36
    %p42 = scmp.eq.s32.totalorder %s11, 0
    %p43 = por %p41, %p42
    %p44 = scmp.ne.s32.totalorder %s33, %s36
    %p45 = scmp.eq.s32.totalorder %s16, 1
    %p46 = por %p44, %p45
    %p47 = scmp.ne.s32.totalorder %s36, %s37
    %p48 = scmp.eq.s32.totalorder %s16, 0
    %p49 = por %p47, %p48
    %p50 = scmp.ne.s32.totalorder %s36, %s37
    %p51 = scmp.eq.s32.totalorder %s17, 1
    %p52 = por %p50, %p51
    %p54 = scmp.ne.s32.totalorder %s37, %s53
    %p55 = scmp.eq.s32.totalorder %s17, 0
    %p56 = por %p54, %p55
    %s58 = sadd.s32 %s57, 1
    %p61 = scmp.eq.s32.totalorder %s11, 1
    %p62 = scmp.ne.s32.totalorder %s57, %s59
    %p63 = scmp.eq.s32.totalorder %s11, 0
    %p64 = por %p62, %p63
    %p65 = scmp.ne.s32.totalorder %s57, %s59
    %p66 = scmp.eq.s32.totalorder %s16, 1
    %p67 = por %p65, %p66
    %p68 = scmp.ne.s32.totalorder %s59, %s60
    %p69 = scmp.eq.s32.totalorder %s16, 0
    %p70 = por %p68, %p69
    %p71 = scmp.ne.s32.totalorder %s59, %s60
    %p72 = scmp.eq.s32.totalorder %s17, 1
    %p73 = por %p71, %p72
    %p75 = scmp.ne.s32.totalorder %s60, %s74
    %p76 = scmp.eq.s32.totalorder %s17, 0
    %p77 = por %p75, %p76
    %s79 = sadd.s32 %s78, 1
    %p82 = scmp.eq.s32.totalorder %s11, 1
    %p83 = scmp.ne.s32.totalorder %s78, %s80
    %p84 = scmp.eq.s32.totalorder %s11, 0
    %p85 = por %p83, %p84
    %p86 = scmp.ne.s32.totalorder %s78, %s80
    %p87 = scmp.eq.s32.totalorder %s16, 1
    %p88 = por %p86, %p87
    %p89 = scmp.ne.s32.totalorder %s80, %s81
    %p90 = scmp.eq.s32.totalorder %s16, 0
    %p91 = por %p89, %p90
    %p92 = scmp.ne.s32.totalorder %s80, %s81
    %p93 = scmp.eq.s32.totalorder %s17, 1
    %p94 = por %p92, %p93
    %p96 = scmp.ne.s32.totalorder %s81, %s95
    %p97 = scmp.eq.s32.totalorder %s17, 0
    %p98 = por %p96, %p97
    %s100 = sadd.s32 %s99, 1
    %p103 = scmp.eq.s32.totalorder %s11, 1
    %p104 = scmp.ne.s32.totalorder %s99, %s101
    %p105 = scmp.eq.s32.totalorder %s11, 0
    %p106 = por %p104, %p105
    %p107 = scmp.ne.s32.totalorder %s99, %s101
    %p108 = scmp.eq.s32.totalorder %s16, 1
    %p109 = por %p107, %p108
    %p110 = scmp.ne.s32.totalorder %s101, %s102
    %p111 = scmp.eq.s32.totalorder %s16, 0
    %p112 = por %p110, %p111
    %p113 = scmp.ne.s32.totalorder %s101, %s102
    %p114 = scmp.eq.s32.totalorder %s17, 1
    %p115 = por %p113, %p114
    %p117 = scmp.ne.s32.totalorder %s102, %s116
    %p118 = scmp.eq.s32.totalorder %s17, 0
    %p119 = por %p117, %p118
    %s121 = sadd.s32 %s120, 1
    %p124 = scmp.eq.s32.totalorder %s11, 1
    %p125 = scmp.ne.s32.totalorder %s120, %s122
    %p126 = scmp.eq.s32.totalorder %s11, 0
    %p127 = por %p125, %p126
    %p128 = scmp.ne.s32.totalorder %s120, %s122
    %p129 = scmp.eq.s32.totalorder %s16, 1
    %p130 = por %p128, %p129
    %p131 = scmp.ne.s32.totalorder %s122, %s123
    %p132 = scmp.eq.s32.totalorder %s16, 0
    %p133 = por %p131, %p132
    %p134 = scmp.ne.s32.totalorder %s122, %s123
    %p135 = scmp.eq.s32.totalorder %s17, 1
    %p136 = por %p134, %p135
    %p138 = scmp.ne.s32.totalorder %s123, %s137
    %p139 = scmp.eq.s32.totalorder %s17, 0
    %p140 = por %p138, %p139
    %s141 = ssub.s32 %s18, %s30
    %s142 = ssub.s32 %s19, %s26
    %s143 = sor.u32 %s141, %s142
    %p144 = scmp.eq.s32.totalorder %s143, 0
    %s146 = sadd.s32 %s145, 1
    %s147 = scalar_select %p144, %s145, %s146
    %p150 = pneg %p144
    %p151 = scmp.eq.s32.totalorder %s11, 1
    %p152 = por %p150, %p151
    %p153 = scmp.ne.s32.totalorder %s145, %s148
    %p154 = scmp.eq.s32.totalorder %s11, 0
    %p155 = por %p153, %p154
    %p156 = scmp.ne.s32.totalorder %s145, %s148
    %p157 = scmp.eq.s32.totalorder %s16, 1
    %p158 = por %p156, %p157
    %p159 = scmp.ne.s32.totalorder %s148, %s149
    %p160 = scmp.eq.s32.totalorder %s16, 0
    %p161 = por %p159, %p160
    %p162 = scmp.ne.s32.totalorder %s148, %s149
    %p163 = scmp.eq.s32.totalorder %s17, 1
    %p164 = por %p162, %p163
    %p166 = scmp.ne.s32.totalorder %s149, %s165
    %p167 = scmp.eq.s32.totalorder %s17, 0
    %p168 = por %p166, %p167
    %p169 = scmp.le.s32.totalorder 1, %s11
    %p170 = scmp.lt.s32.totalorder %s11, 3
    %p171 = pnand %p169, %p170
    %p172 = pneg %p171
    // Predicated region
    $region9: #{double_conv.1} parent=5 // pred_check
      _
    $region10: #{double_conv.1} parent=5 // pred_check_branch
      %174 = sbr.rel (%p171) target = $region12
    $region11: #{double_conv.1} parent=5 // pred_region
      %s175 = ssub.s32 %s11, 1
      // Predicated region
      $region13: #{double_conv.1} parent=11 // pred_check
        %p176 = pneg %p70
      $region14: #{double_conv.1} parent=11 // pred_check_branch
        %178 = sbr.rel (%p176) target = $region16
      $region15: #{double_conv.1} parent=11 // pred_region
        _
      $region16: #{double_conv.1} parent=11 // pred_fallthru
        _
      // Predicated region
      $region17: #{double_conv.1} parent=11 // pred_check
        %p179 = pneg %p91
      $region18: #{double_conv.1} parent=11 // pred_check_branch
        %181 = sbr.rel (%p179) target = $region20
      $region19: #{double_conv.1} parent=11 // pred_region
        _
      $region20: #{double_conv.1} parent=11 // pred_fallthru
        _
      // Predicated region
      $region21: #{double_conv.1} parent=11 // pred_check
        %p182 = pneg %p112
      $region22: #{double_conv.1} parent=11 // pred_check_branch
        %184 = sbr.rel (%p182) target = $region24
      $region23: #{double_conv.1} parent=11 // pred_region
        _
      $region24: #{double_conv.1} parent=11 // pred_fallthru
        _
      // Predicated region
      $region25: #{double_conv.1} parent=11 // pred_check
        %p185 = pneg %p133
      $region26: #{double_conv.1} parent=11 // pred_check_branch
        %187 = sbr.rel (%p185) target = $region28
      $region27: #{double_conv.1} parent=11 // pred_region
        _
      $region28: #{double_conv.1} parent=11 // pred_fallthru
        _
    $region12: #{double_conv.1} parent=5 // pred_fallthru
      _
    %p188 = scmp.lt.s32.totalorder %s11, 2
    // Predicated region
    $region29: #{double_conv.1} parent=5 // pred_check
      %p189 = pneg %p188
    $region30: #{double_conv.1} parent=5 // pred_check_branch
      %191 = sbr.rel (%p189) target = $region32
    $region31: #{double_conv.1} parent=5 // pred_region
      // Predicated region
      $region33: #{double_conv.1} parent=31 // pred_check
        %p192 = pneg %p43
      $region34: #{double_conv.1} parent=31 // pred_check_branch
        %194 = sbr.rel (%p192) target = $region36
      $region35: #{double_conv.1} parent=31 // pred_region
        %p195 = scmp.lt.s32.totalorder %s18, 1
        %s196 = scalar_select %p195, %s18, 1
        %s197 = smul.addr %s196, 2
        %s198 = smul.addr %s197, 4
        %s199 = scalar_lea.vmem %s0, %s198
      $region36: #{double_conv.1} parent=31 // pred_fallthru
        _
    $region32: #{double_conv.1} parent=5 // pred_fallthru
      _
    %p200 = scmp.le.s32.totalorder 1, %s11
    %p201 = scmp.lt.s32.totalorder %s11, 3
    %p202 = pnand %p200, %p201
    %p203 = pneg %p202
    // Predicated region
    $region37: #{double_conv.1} parent=5 // pred_check
      _
    $region38: #{double_conv.1} parent=5 // pred_check_branch
      %205 = sbr.rel (%p202) target = $region40
    $region39: #{double_conv.1} parent=5 // pred_region
      %s206 = ssub.s32 %s11, 1
      %p207 = scmp.lt.s32.totalorder %s20, 1
      %s208 = scalar_select %p207, %s20, 1
      %s209 = smul.addr %s208, 2
      %s210 = smul.addr %s209, 4
      %s211 = scalar_lea.vmem %s0, %s210
      %p212 = pneg %p49
      %p213 = pneg %p46
      %p214 = pneg %p70
      %p215 = pneg %p67
      %p216 = pneg %p91
      %p217 = pneg %p88
      %p218 = pneg %p112
      %p219 = pneg %p109
      %p220 = pneg %p133
      %p221 = pneg %p130
      %p222 = pneg %p161
      %p223 = pneg %p158
      %s224 = smul.u32 2, %s21
      %p225 = scmp.lt.s32.totalorder %s20, 1
      %s226 = scalar_select %p225, %s20, 1
      %p227 = scmp.lt.s32.totalorder %s224, 1
      %s228 = scalar_select %p227, %s224, 1
      %s229 = smul.addr %s226, 2
      %s230 = sadd.s32 %s228, %s229
      %s231 = smul.addr %s230, 8
      %s232 = scalar_lea.vmem %s5, %s231
      %p233 = scmp.lt.s32.totalorder %s20, 1
      %s234 = scalar_select %p233, %s20, 1
      %s235 = smul.addr %s234, 2
      %s236 = smul.addr %s235, 4
      %s237 = scalar_lea.vmem %s0, %s236
      %s238 = smul.u32 2, %s21
      %p239 = scmp.lt.s32.totalorder %s20, 1
      %s240 = scalar_select %p239, %s20, 1
      %p241 = scmp.lt.s32.totalorder %s238, 1
      %s242 = scalar_select %p241, %s238, 1
      %s243 = smul.addr %s240, 2
      %s244 = sadd.s32 %s242, %s243
      %s245 = smul.addr %s244, 8
      %s246 = scalar_lea.vmem %s5, %s245
      %s247 = smul.u32 2, %s21
      %p248 = scmp.eq.s32.totalorder %s21, 0
      // Predicated region
      $region41: #{double_conv.1} parent=39 // pred_check
        %p249 = pneg %p248
      $region42: #{double_conv.1} parent=39 // pred_check_branch
        %251 = sbr.rel (%p249) target = $region44
      $region43: #{double_conv.1} parent=39 // pred_region
        %vm252 = vcmask 146432
        %253 = vst.msk [vmem:[#allocation2] sm:$0xff] %vm252, 0.0
        %254 = vst.msk [vmem:[#allocation2 + $0x8] sm:$0xff] %vm252, 0.0
        %vm255 = vcmask 142336
        %256 = vst.msk [vmem:[#allocation2 + $0x10] sm:$0xf] %vm255, 0.0
        %257 = vst.msk [vmem:[#allocation2 + $0x18] sm:$0xff] %vm252, 0.0
        %258 = vst.msk [vmem:[#allocation2 + $0x20] sm:$0xff] %vm252, 0.0
        %259 = vst.msk [vmem:[#allocation2 + $0x28] sm:$0xf] %vm255, 0.0
        %260 = vst.msk [vmem:[#allocation2 + $0x30] sm:$0xff] %vm252, 0.0
        %261 = vst.msk [vmem:[#allocation2 + $0x38] sm:$0xff] %vm252, 0.0
        %262 = vst.msk [vmem:[#allocation2 + $0x40] sm:$0xf] %vm255, 0.0
        %263 = vst.msk [vmem:[#allocation2 + $0x48] sm:$0xff] %vm252, 0.0
        %264 = vst.msk [vmem:[#allocation2 + $0x50] sm:$0xff] %vm252, 0.0
        %265 = vst.msk [vmem:[#allocation2 + $0x58] sm:$0xf] %vm255, 0.0
        %v266 = vld [vmem:[%s237] sm:$0xff]
        %v268 = vrot.slane %v266, 4
        %270 = vrot.lane.b32.xlu0 %v266, 112
        %v271 = vpop.permute.xlu0 %270
        %v272 = vrot.slane %v271, 4
        %274 = vrot.lane.b32.xlu0 %v266, 96
        %v275 = vpop.permute.xlu0 %274
        %v276 = vrot.slane %v275, 4
        %278 = vrot.lane.b32.xlu0 %v266, 80
        %v279 = vpop.permute.xlu0 %278
        %v280 = vrot.slane %v279, 4
        %282 = vrot.lane.b32.xlu0 %v266, 64
        %v283 = vpop.permute.xlu0 %282
        %v284 = vrot.slane %v283, 4
        %286 = vrot.lane.b32.xlu0 %v266, 48
        %v287 = vpop.permute.xlu0 %286
        %v288 = vrot.slane %v287, 4
        %290 = vrot.lane.b32.xlu0 %v266, 32
        %v291 = vpop.permute.xlu0 %290
        %v292 = vrot.slane %v291, 4
        %294 = vrot.lane.b32.xlu0 %v266, 16
        %v295 = vpop.permute.xlu0 %294
        %v296 = vrot.slane %v295, 4
        %v305 = vcombine.low %v266, %v275
        %v307 = vunpack.c.l.s4 1983009808
        %v308 = vunpack.c.0.s8 %v307
        %v309 = vlaneseq
        %v310 = vshrl.u32 %v309, 7
        %v311 = vsub.s32 %v308, %v310
        %v312 = vrot.slane %v305, %v311
        %v313 = vcombine.low %v271, %v279
        %v315 = vunpack.c.l.s4 1983009808
        %v316 = vunpack.c.0.s8 %v315
        %v317 = vlaneseq
        %v318 = vshrl.u32 %v317, 7
        %v319 = vsub.s32 %v316, %v318
        %v320 = vrot.slane %v313, %v319
        %v321 = vcombine.low %v312, %v320
        %v322 = vcombine.high %v312, %v320
        %v324 = vunpack.c.l.s4 1934713408
        %v325 = vunpack.c.0.s8 %v324
        %v326 = vlaneseq
        %v327 = vshrl.u32 %v326, 7
        %v328 = vsub.s32 %v325, %v327
        %v329 = vrot.slane %v321, %v328
        %v331 = vunpack.c.l.s4 1934713408
        %v332 = vunpack.c.0.s8 %v331
        %v333 = vlaneseq
        %v334 = vshrl.u32 %v333, 7
        %v335 = vsub.s32 %v332, %v334
        %v336 = vrot.slane %v322, %v335
        %v337 = vcombine.high %v329, 0.0
        %v338 = vcombine.high %v336, 0.0
        %v339 = vcombine.low %v283, %v291
        %v341 = vunpack.c.l.s4 1983009808
        %v342 = vunpack.c.0.s8 %v341
        %v343 = vlaneseq
        %v344 = vshrl.u32 %v343, 7
        %v345 = vsub.s32 %v342, %v344
        %v346 = vrot.slane %v339, %v345
        %v347 = vcombine.low %v287, %v295
        %v349 = vunpack.c.l.s4 1983009808
        %v350 = vunpack.c.0.s8 %v349
        %v351 = vlaneseq
        %v352 = vshrl.u32 %v351, 7
        %v353 = vsub.s32 %v350, %v352
        %v354 = vrot.slane %v347, %v353
        %v355 = vcombine.low %v346, %v354
        %v356 = vcombine.high %v346, %v354
        %v358 = vunpack.c.l.s4 1934713408
        %v359 = vunpack.c.0.s8 %v358
        %v360 = vlaneseq
        %v361 = vshrl.u32 %v360, 7
        %v362 = vsub.s32 %v359, %v361
        %v363 = vrot.slane %v355, %v362
        %v365 = vunpack.c.l.s4 1934713408
        %v366 = vunpack.c.0.s8 %v365
        %v367 = vlaneseq
        %v368 = vshrl.u32 %v367, 7
        %v369 = vsub.s32 %v366, %v368
        %v370 = vrot.slane %v356, %v369
        %v371 = vcombine.high %v363, 0.0
        %v372 = vcombine.high %v370, 0.0
        %v373 = vcombine.low %v268, %v276
        %v375 = vunpack.c.l.s4 1983009808
        %v376 = vunpack.c.0.s8 %v375
        %v377 = vlaneseq
        %v378 = vshrl.u32 %v377, 7
        %v379 = vsub.s32 %v376, %v378
        %v380 = vrot.slane %v373, %v379
        %v381 = vcombine.low %v272, %v280
        %v383 = vunpack.c.l.s4 1983009808
        %v384 = vunpack.c.0.s8 %v383
        %v385 = vlaneseq
        %v386 = vshrl.u32 %v385, 7
        %v387 = vsub.s32 %v384, %v386
        %v388 = vrot.slane %v381, %v387
        %v389 = vcombine.low %v380, %v388
        %v390 = vcombine.high %v380, %v388
        %v392 = vunpack.c.l.s4 1934713408
        %v393 = vunpack.c.0.s8 %v392
        %v394 = vlaneseq
        %v395 = vshrl.u32 %v394, 7
        %v396 = vsub.s32 %v393, %v395
        %v397 = vrot.slane %v389, %v396
        %v399 = vunpack.c.l.s4 1934713408
        %v400 = vunpack.c.0.s8 %v399
        %v401 = vlaneseq
        %v402 = vshrl.u32 %v401, 7
        %v403 = vsub.s32 %v400, %v402
        %v404 = vrot.slane %v390, %v403
        %v405 = vcombine.high %v397, 0.0
        %v406 = vcombine.high %v404, 0.0
        %v407 = vcombine.low %v284, %v292
        %v409 = vunpack.c.l.s4 1983009808
        %v410 = vunpack.c.0.s8 %v409
        %v411 = vlaneseq
        %v412 = vshrl.u32 %v411, 7
        %v413 = vsub.s32 %v410, %v412
        %v414 = vrot.slane %v407, %v413
        %v415 = vcombine.low %v288, %v296
        %v417 = vunpack.c.l.s4 1983009808
        %v418 = vunpack.c.0.s8 %v417
        %v419 = vlaneseq
        %v420 = vshrl.u32 %v419, 7
        %v421 = vsub.s32 %v418, %v420
        %v422 = vrot.slane %v415, %v421
        %v423 = vcombine.low %v414, %v422
        %v424 = vcombine.high %v414, %v422
        %v426 = vunpack.c.l.s4 1934713408
        %v427 = vunpack.c.0.s8 %v426
        %v428 = vlaneseq
        %v429 = vshrl.u32 %v428, 7
        %v430 = vsub.s32 %v427, %v429
        %v431 = vrot.slane %v423, %v430
        %v433 = vunpack.c.l.s4 1934713408
        %v434 = vunpack.c.0.s8 %v433
        %v435 = vlaneseq
        %v436 = vshrl.u32 %v435, 7
        %v437 = vsub.s32 %v434, %v436
        %v438 = vrot.slane %v424, %v437
        %v439 = vcombine.high %v431, 0.0
        %v440 = vcombine.high %v438, 0.0
        %v457 = vcombine.low %v329, %v363
        %v458 = vcombine.low %v397, %v431
        %v459 = vcombine.low %v337, %v371
        %v460 = vcombine.low %v405, %v439
        %v461 = vcombine.low %v336, %v370
        %v462 = vcombine.low %v404, %v438
        %v463 = vcombine.low %v338, %v372
        %v464 = vcombine.low %v406, %v440
        %465 = vrot.lane.b32.xlu0 %v457, 1
        %v466 = vpop.permute.xlu0 %465
        %467 = vrot.lane.b32.xlu0 %v458, 1
        %v468 = vpop.permute.xlu0 %467
        %469 = vrot.lane.b32.xlu0 %v459, 1
        %v470 = vpop.permute.xlu0 %469
        %471 = vrot.lane.b32.xlu0 %v460, 1
        %v472 = vpop.permute.xlu0 %471
        %473 = vrot.lane.b32.xlu0 %v461, 1
        %v474 = vpop.permute.xlu0 %473
        %475 = vrot.lane.b32.xlu0 %v462, 1
        %v476 = vpop.permute.xlu0 %475
        %477 = vrot.lane.b32.xlu0 %v463, 1
        %v478 = vpop.permute.xlu0 %477
        %479 = vrot.lane.b32.xlu0 %v464, 1
        %v480 = vpop.permute.xlu0 %479
        %vm489 = vcmask 138248
        %490 = vst.msk [vmem:[#allocation2 + $0x2] sm:$0xff] %vm489, %v466
        %491 = vst.msk [vmem:[#allocation2 + $0xa] sm:$0xff] %vm489, %v468
        %492 = vst.msk [vmem:[#allocation2 + $0x1a] sm:$0xff] %vm489, %v470
        %493 = vst.msk [vmem:[#allocation2 + $0x22] sm:$0xff] %vm489, %v472
        %494 = vst.msk [vmem:[#allocation2 + $0x32] sm:$0xff] %vm489, %v474
        %495 = vst.msk [vmem:[#allocation2 + $0x3a] sm:$0xff] %vm489, %v476
        %496 = vst.msk [vmem:[#allocation2 + $0x4a] sm:$0xff] %vm489, %v478
        %497 = vst.msk [vmem:[#allocation2 + $0x52] sm:$0xff] %vm489, %v480
      $region44: #{double_conv.1} parent=39 // pred_fallthru
        _
      %s498 = smul.u32 %s21, 16
      %s499 = scalar_lea.vmem [#allocation2], %s498
      %v500 = vld [vmem:[%s499] sm:$0xff]
      %v501 = vld [vmem:[%s499 + $0x8] sm:$0xff]
      %v502 = vld [vmem:[%s499 + $0x10] sm:$0xf]
      %v503 = vld [vmem:[%s499 + $0x18] sm:$0xff]
      %v504 = vld [vmem:[%s499 + $0x20] sm:$0xff]
      %v505 = vld [vmem:[%s499 + $0x28] sm:$0xf]
      %v506 = vld [vmem:[%s499 + $0x30] sm:$0xff]
      %v507 = vld [vmem:[%s499 + $0x38] sm:$0xff]
      %v508 = vld [vmem:[%s499 + $0x40] sm:$0xf]
      %v509 = vld [vmem:[%s499 + $0x48] sm:$0xff]
      %v510 = vld [vmem:[%s499 + $0x50] sm:$0xff]
      %v511 = vld [vmem:[%s499 + $0x58] sm:$0xf]
      %v512 = vcombine.low %v500, %v506
      %v513 = vcombine.high %v500, %v506
      %v515 = vunpack.c.l.s4 1983009808
      %v516 = vunpack.c.0.s8 %v515
      %v517 = vlaneseq
      %v518 = vshrl.u32 %v517, 7
      %v519 = vsub.s32 %v516, %v518
      %v520 = vrot.slane %v512, %v519
      %v522 = vunpack.c.l.s4 1983009808
      %v523 = vunpack.c.0.s8 %v522
      %v524 = vlaneseq
      %v525 = vshrl.u32 %v524, 7
      %v526 = vsub.s32 %v523, %v525
      %v527 = vrot.slane %v513, %v526
      %v528 = vcombine.low %v503, %v509
      %v529 = vcombine.high %v503, %v509
      %v531 = vunpack.c.l.s4 1983009808
      %v532 = vunpack.c.0.s8 %v531
      %v533 = vlaneseq
      %v534 = vshrl.u32 %v533, 7
      %v535 = vsub.s32 %v532, %v534
      %v536 = vrot.slane %v528, %v535
      %v538 = vunpack.c.l.s4 1983009808
      %v539 = vunpack.c.0.s8 %v538
      %v540 = vlaneseq
      %v541 = vshrl.u32 %v540, 7
      %v542 = vsub.s32 %v539, %v541
      %v543 = vrot.slane %v529, %v542
      %v544 = vcombine.low %v520, %v536
      %v545 = vcombine.high %v520, %v536
      %v547 = vunpack.c.l.s4 1934713408
      %v548 = vunpack.c.0.s8 %v547
      %v549 = vlaneseq
      %v550 = vshrl.u32 %v549, 7
      %v551 = vsub.s32 %v548, %v550
      %v552 = vrot.slane %v544, %v551
      %v554 = vunpack.c.l.s4 1934713408
      %v555 = vunpack.c.0.s8 %v554
      %v556 = vlaneseq
      %v557 = vshrl.u32 %v556, 7
      %v558 = vsub.s32 %v555, %v557
      %v559 = vrot.slane %v545, %v558
      %v560 = vcombine.low %v527, %v543
      %v561 = vcombine.high %v527, %v543
      %v563 = vunpack.c.l.s4 1934713408
      %v564 = vunpack.c.0.s8 %v563
      %v565 = vlaneseq
      %v566 = vshrl.u32 %v565, 7
      %v567 = vsub.s32 %v564, %v566
      %v568 = vrot.slane %v560, %v567
      %v570 = vunpack.c.l.s4 1934713408
      %v571 = vunpack.c.0.s8 %v570
      %v572 = vlaneseq
      %v573 = vshrl.u32 %v572, 7
      %v574 = vsub.s32 %v571, %v573
      %v575 = vrot.slane %v561, %v574
      %v576 = vcombine.high %v552, 0.0
      %v577 = vcombine.high %v559, 0.0
      %v578 = vcombine.high %v568, 0.0
      %v579 = vcombine.high %v575, 0.0
      %v580 = vcombine.low %v501, %v507
      %v581 = vcombine.high %v501, %v507
      %v583 = vunpack.c.l.s4 1983009808
      %v584 = vunpack.c.0.s8 %v583
      %v585 = vlaneseq
      %v586 = vshrl.u32 %v585, 7
      %v587 = vsub.s32 %v584, %v586
      %v588 = vrot.slane %v580, %v587
      %v590 = vunpack.c.l.s4 1983009808
      %v591 = vunpack.c.0.s8 %v590
      %v592 = vlaneseq
      %v593 = vshrl.u32 %v592, 7
      %v594 = vsub.s32 %v591, %v593
      %v595 = vrot.slane %v581, %v594
      %v596 = vcombine.low %v504, %v510
      %v597 = vcombine.high %v504, %v510
      %v599 = vunpack.c.l.s4 1983009808
      %v600 = vunpack.c.0.s8 %v599
      %v601 = vlaneseq
      %v602 = vshrl.u32 %v601, 7
      %v603 = vsub.s32 %v600, %v602
      %v604 = vrot.slane %v596, %v603
      %v606 = vunpack.c.l.s4 1983009808
      %v607 = vunpack.c.0.s8 %v606
      %v608 = vlaneseq
      %v609 = vshrl.u32 %v608, 7
      %v610 = vsub.s32 %v607, %v609
      %v611 = vrot.slane %v597, %v610
      %v612 = vcombine.low %v588, %v604
      %v613 = vcombine.high %v588, %v604
      %v615 = vunpack.c.l.s4 1934713408
      %v616 = vunpack.c.0.s8 %v615
      %v617 = vlaneseq
      %v618 = vshrl.u32 %v617, 7
      %v619 = vsub.s32 %v616, %v618
      %v620 = vrot.slane %v612, %v619
      %v622 = vunpack.c.l.s4 1934713408
      %v623 = vunpack.c.0.s8 %v622
      %v624 = vlaneseq
      %v625 = vshrl.u32 %v624, 7
      %v626 = vsub.s32 %v623, %v625
      %v627 = vrot.slane %v613, %v626
      %v628 = vcombine.low %v595, %v611
      %v629 = vcombine.high %v595, %v611
      %v631 = vunpack.c.l.s4 1934713408
      %v632 = vunpack.c.0.s8 %v631
      %v633 = vlaneseq
      %v634 = vshrl.u32 %v633, 7
      %v635 = vsub.s32 %v632, %v634
      %v636 = vrot.slane %v628, %v635
      %v638 = vunpack.c.l.s4 1934713408
      %v639 = vunpack.c.0.s8 %v638
      %v640 = vlaneseq
      %v641 = vshrl.u32 %v640, 7
      %v642 = vsub.s32 %v639, %v641
      %v643 = vrot.slane %v629, %v642
      %v644 = vcombine.high %v620, 0.0
      %v645 = vcombine.high %v627, 0.0
      %v646 = vcombine.high %v636, 0.0
      %v647 = vcombine.high %v643, 0.0
      %v648 = vcombine.low %v502, %v508
      %v650 = vunpack.c.l.s4 1983009808
      %v651 = vunpack.c.0.s8 %v650
      %v652 = vlaneseq
      %v653 = vshrl.u32 %v652, 7
      %v654 = vsub.s32 %v651, %v653
      %v655 = vrot.slane %v648, %v654
      %v656 = vcombine.low %v505, %v511
      %v658 = vunpack.c.l.s4 1983009808
      %v659 = vunpack.c.0.s8 %v658
      %v660 = vlaneseq
      %v661 = vshrl.u32 %v660, 7
      %v662 = vsub.s32 %v659, %v661
      %v663 = vrot.slane %v656, %v662
      %v664 = vcombine.low %v655, %v663
      %v666 = vunpack.c.l.s4 1934713408
      %v667 = vunpack.c.0.s8 %v666
      %v668 = vlaneseq
      %v669 = vshrl.u32 %v668, 7
      %v670 = vsub.s32 %v667, %v669
      %v671 = vrot.slane %v664, %v670
      %v672 = vcombine.high %v671, 0.0
      %674 = vrot.lane.b32.xlu0 %v576, 16
      %v675 = vpop.permute.xlu0 %674
      %678 = vrot.lane.b32.xlu0 %v559, 32
      %v679 = vpop.permute.xlu0 %678
      %682 = vrot.lane.b32.xlu0 %v577, 48
      %v683 = vpop.permute.xlu0 %682
      %686 = vrot.lane.b32.xlu0 %v568, 64
      %v687 = vpop.permute.xlu0 %686
      %690 = vrot.lane.b32.xlu0 %v578, 80
      %v691 = vpop.permute.xlu0 %690
      %694 = vrot.lane.b32.xlu0 %v575, 96
      %v695 = vpop.permute.xlu0 %694
      %698 = vrot.lane.b32.xlu0 %v579, 112
      %v699 = vpop.permute.xlu0 %698
      %702 = vrot.lane.b32.xlu0 %v644, 16
      %v703 = vpop.permute.xlu0 %702
      %706 = vrot.lane.b32.xlu0 %v627, 32
      %v707 = vpop.permute.xlu0 %706
      %710 = vrot.lane.b32.xlu0 %v645, 48
      %v711 = vpop.permute.xlu0 %710
      %714 = vrot.lane.b32.xlu0 %v636, 64
      %v715 = vpop.permute.xlu0 %714
      %718 = vrot.lane.b32.xlu0 %v646, 80
      %v719 = vpop.permute.xlu0 %718
      %722 = vrot.lane.b32.xlu0 %v643, 96
      %v723 = vpop.permute.xlu0 %722
      %726 = vrot.lane.b32.xlu0 %v647, 112
      %v727 = vpop.permute.xlu0 %726
      %730 = vrot.lane.b32.xlu0 %v672, 16
      %v731 = vpop.permute.xlu0 %730
      %vm733 = vcmask 130048
      %v734 = vsel %vm733, %v552, %v675
      %vm735 = vcmask 261120
      %v736 = vsel %vm735, %v734, %v679
      %vm737 = vcmask 392192
      %v738 = vsel %vm737, %v736, %v683
      %vm739 = vcmask 523264
      %v740 = vsel %vm739, %v738, %v687
      %vm741 = vcmask 654336
      %v742 = vsel %vm741, %v740, %v691
      %vm743 = vcmask 785408
      %v744 = vsel %vm743, %v742, %v695
      %vm745 = vcmask 916480
      %v746 = vsel %vm745, %v744, %v699
      %v747 = vsel %vm733, %v620, %v703
      %v748 = vsel %vm735, %v747, %v707
      %v749 = vsel %vm737, %v748, %v711
      %v750 = vsel %vm739, %v749, %v715
      %v751 = vsel %vm741, %v750, %v719
      %v752 = vsel %vm743, %v751, %v723
      %v753 = vsel %vm745, %v752, %v727
      %v754 = vsel %vm733, %v671, %v731
      %767 = vrot.lane.b32.xlu0 %v500, 127
      %v768 = vpop.permute.xlu0 %767
      %769 = vrot.lane.b32.xlu0 %v501, 127
      %v770 = vpop.permute.xlu0 %769
      %771 = vrot.lane.b32.xlu0 %v502, 127
      %v772 = vpop.permute.xlu0 %771
      %773 = vrot.lane.b32.xlu0 %v503, 127
      %v774 = vpop.permute.xlu0 %773
      %775 = vrot.lane.b32.xlu0 %v504, 127
      %v776 = vpop.permute.xlu0 %775
      %777 = vrot.lane.b32.xlu0 %v505, 127
      %v778 = vpop.permute.xlu0 %777
      %779 = vrot.lane.b32.xlu0 %v506, 127
      %v780 = vpop.permute.xlu0 %779
      %781 = vrot.lane.b32.xlu0 %v507, 127
      %v782 = vpop.permute.xlu0 %781
      %783 = vrot.lane.b32.xlu0 %v508, 127
      %v784 = vpop.permute.xlu0 %783
      %785 = vrot.lane.b32.xlu0 %v509, 127
      %v786 = vpop.permute.xlu0 %785
      %787 = vrot.lane.b32.xlu0 %v510, 127
      %v788 = vpop.permute.xlu0 %787
      %789 = vrot.lane.b32.xlu0 %v511, 127
      %v790 = vpop.permute.xlu0 %789
      %v803 = vcombine.low %v768, %v780
      %v804 = vcombine.high %v768, %v780
      %v806 = vunpack.c.l.s4 1983009808
      %v807 = vunpack.c.0.s8 %v806
      %v808 = vlaneseq
      %v809 = vshrl.u32 %v808, 7
      %v810 = vsub.s32 %v807, %v809
      %v811 = vrot.slane %v803, %v810
      %v813 = vunpack.c.l.s4 1983009808
      %v814 = vunpack.c.0.s8 %v813
      %v815 = vlaneseq
      %v816 = vshrl.u32 %v815, 7
      %v817 = vsub.s32 %v814, %v816
      %v818 = vrot.slane %v804, %v817
      %v819 = vcombine.low %v774, %v786
      %v820 = vcombine.high %v774, %v786
      %v822 = vunpack.c.l.s4 1983009808
      %v823 = vunpack.c.0.s8 %v822
      %v824 = vlaneseq
      %v825 = vshrl.u32 %v824, 7
      %v826 = vsub.s32 %v823, %v825
      %v827 = vrot.slane %v819, %v826
      %v829 = vunpack.c.l.s4 1983009808
      %v830 = vunpack.c.0.s8 %v829
      %v831 = vlaneseq
      %v832 = vshrl.u32 %v831, 7
      %v833 = vsub.s32 %v830, %v832
      %v834 = vrot.slane %v820, %v833
      %v835 = vcombine.low %v811, %v827
      %v836 = vcombine.high %v811, %v827
      %v838 = vunpack.c.l.s4 1934713408
      %v839 = vunpack.c.0.s8 %v838
      %v840 = vlaneseq
      %v841 = vshrl.u32 %v840, 7
      %v842 = vsub.s32 %v839, %v841
      %v843 = vrot.slane %v835, %v842
      %v845 = vunpack.c.l.s4 1934713408
      %v846 = vunpack.c.0.s8 %v845
      %v847 = vlaneseq
      %v848 = vshrl.u32 %v847, 7
      %v849 = vsub.s32 %v846, %v848
      %v850 = vrot.slane %v836, %v849
      %v851 = vcombine.low %v818, %v834
      %v852 = vcombine.high %v818, %v834
      %v854 = vunpack.c.l.s4 1934713408
      %v855 = vunpack.c.0.s8 %v854
      %v856 = vlaneseq
      %v857 = vshrl.u32 %v856, 7
      %v858 = vsub.s32 %v855, %v857
      %v859 = vrot.slane %v851, %v858
      %v861 = vunpack.c.l.s4 1934713408
      %v862 = vunpack.c.0.s8 %v861
      %v863 = vlaneseq
      %v864 = vshrl.u32 %v863, 7
      %v865 = vsub.s32 %v862, %v864
      %v866 = vrot.slane %v852, %v865
      %v867 = vcombine.high %v843, 0.0
      %v868 = vcombine.high %v850, 0.0
      %v869 = vcombine.high %v859, 0.0
      %v870 = vcombine.high %v866, 0.0
      %v871 = vcombine.low %v770, %v782
      %v872 = vcombine.high %v770, %v782
      %v874 = vunpack.c.l.s4 1983009808
      %v875 = vunpack.c.0.s8 %v874
      %v876 = vlaneseq
      %v877 = vshrl.u32 %v876, 7
      %v878 = vsub.s32 %v875, %v877
      %v879 = vrot.slane %v871, %v878
      %v881 = vunpack.c.l.s4 1983009808
      %v882 = vunpack.c.0.s8 %v881
      %v883 = vlaneseq
      %v884 = vshrl.u32 %v883, 7
      %v885 = vsub.s32 %v882, %v884
      %v886 = vrot.slane %v872, %v885
      %v887 = vcombine.low %v776, %v788
      %v888 = vcombine.high %v776, %v788
      %v890 = vunpack.c.l.s4 1983009808
      %v891 = vunpack.c.0.s8 %v890
      %v892 = vlaneseq
      %v893 = vshrl.u32 %v892, 7
      %v894 = vsub.s32 %v891, %v893
      %v895 = vrot.slane %v887, %v894
      %v897 = vunpack.c.l.s4 1983009808
      %v898 = vunpack.c.0.s8 %v897
      %v899 = vlaneseq
      %v900 = vshrl.u32 %v899, 7
      %v901 = vsub.s32 %v898, %v900
      %v902 = vrot.slane %v888, %v901
      %v903 = vcombine.low %v879, %v895
      %v904 = vcombine.high %v879, %v895
      %v906 = vunpack.c.l.s4 1934713408
      %v907 = vunpack.c.0.s8 %v906
      %v908 = vlaneseq
      %v909 = vshrl.u32 %v908, 7
      %v910 = vsub.s32 %v907, %v909
      %v911 = vrot.slane %v903, %v910
      %v913 = vunpack.c.l.s4 1934713408
      %v914 = vunpack.c.0.s8 %v913
      %v915 = vlaneseq
      %v916 = vshrl.u32 %v915, 7
      %v917 = vsub.s32 %v914, %v916
      %v918 = vrot.slane %v904, %v917
      %v919 = vcombine.low %v886, %v902
      %v920 = vcombine.high %v886, %v902
      %v922 = vunpack.c.l.s4 1934713408
      %v923 = vunpack.c.0.s8 %v922
      %v924 = vlaneseq
      %v925 = vshrl.u32 %v924, 7
      %v926 = vsub.s32 %v923, %v925
      %v927 = vrot.slane %v919, %v926
      %v929 = vunpack.c.l.s4 1934713408
      %v930 = vunpack.c.0.s8 %v929
      %v931 = vlaneseq
      %v932 = vshrl.u32 %v931, 7
      %v933 = vsub.s32 %v930, %v932
      %v934 = vrot.slane %v920, %v933
      %v935 = vcombine.high %v911, 0.0
      %v936 = vcombine.high %v918, 0.0
      %v937 = vcombine.high %v927, 0.0
      %v938 = vcombine.high %v934, 0.0
      %v939 = vcombine.low %v772, %v784
      %v941 = vunpack.c.l.s4 1983009808
      %v942 = vunpack.c.0.s8 %v941
      %v943 = vlaneseq
      %v944 = vshrl.u32 %v943, 7
      %v945 = vsub.s32 %v942, %v944
      %v946 = vrot.slane %v939, %v945
      %v947 = vcombine.low %v778, %v790
      %v949 = vunpack.c.l.s4 1983009808
      %v950 = vunpack.c.0.s8 %v949
      %v951 = vlaneseq
      %v952 = vshrl.u32 %v951, 7
      %v953 = vsub.s32 %v950, %v952
      %v954 = vrot.slane %v947, %v953
      %v955 = vcombine.low %v946, %v954
      %v957 = vunpack.c.l.s4 1934713408
      %v958 = vunpack.c.0.s8 %v957
      %v959 = vlaneseq
      %v960 = vshrl.u32 %v959, 7
      %v961 = vsub.s32 %v958, %v960
      %v962 = vrot.slane %v955, %v961
      %v963 = vcombine.high %v962, 0.0
      %965 = vrot.lane.b32.xlu0 %v867, 16
      %v966 = vpop.permute.xlu0 %965
      %969 = vrot.lane.b32.xlu0 %v850, 32
      %v970 = vpop.permute.xlu0 %969
      %973 = vrot.lane.b32.xlu0 %v868, 48
      %v974 = vpop.permute.xlu0 %973
      %977 = vrot.lane.b32.xlu0 %v859, 64
      %v978 = vpop.permute.xlu0 %977
      %981 = vrot.lane.b32.xlu0 %v869, 80
      %v982 = vpop.permute.xlu0 %981
      %985 = vrot.lane.b32.xlu0 %v866, 96
      %v986 = vpop.permute.xlu0 %985
      %989 = vrot.lane.b32.xlu0 %v870, 112
      %v990 = vpop.permute.xlu0 %989
      %993 = vrot.lane.b32.xlu0 %v935, 16
      %v994 = vpop.permute.xlu0 %993
      %997 = vrot.lane.b32.xlu0 %v918, 32
      %v998 = vpop.permute.xlu0 %997
      %1001 = vrot.lane.b32.xlu0 %v936, 48
      %v1002 = vpop.permute.xlu0 %1001
      %1005 = vrot.lane.b32.xlu0 %v927, 64
      %v1006 = vpop.permute.xlu0 %1005
      %1009 = vrot.lane.b32.xlu0 %v937, 80
      %v1010 = vpop.permute.xlu0 %1009
      %1013 = vrot.lane.b32.xlu0 %v934, 96
      %v1014 = vpop.permute.xlu0 %1013
      %1017 = vrot.lane.b32.xlu0 %v938, 112
      %v1018 = vpop.permute.xlu0 %1017
      %1021 = vrot.lane.b32.xlu0 %v963, 16
      %v1022 = vpop.permute.xlu0 %1021
      %v1024 = vsel %vm733, %v843, %v966
      %v1025 = vsel %vm735, %v1024, %v970
      %v1026 = vsel %vm737, %v1025, %v974
      %v1027 = vsel %vm739, %v1026, %v978
      %v1028 = vsel %vm741, %v1027, %v982
      %v1029 = vsel %vm743, %v1028, %v986
      %v1030 = vsel %vm745, %v1029, %v990
      %v1031 = vsel %vm733, %v911, %v994
      %v1032 = vsel %vm735, %v1031, %v998
      %v1033 = vsel %vm737, %v1032, %v1002
      %v1034 = vsel %vm739, %v1033, %v1006
      %v1035 = vsel %vm741, %v1034, %v1010
      %v1036 = vsel %vm743, %v1035, %v1014
      %v1037 = vsel %vm745, %v1036, %v1018
      %v1038 = vsel %vm733, %v962, %v1022
      %1039 = vrot.lane.b32.xlu0 %v500, 126
      %v1040 = vpop.permute.xlu0 %1039
      %1041 = vrot.lane.b32.xlu0 %v501, 126
      %v1042 = vpop.permute.xlu0 %1041
      %1043 = vrot.lane.b32.xlu0 %v502, 126
      %v1044 = vpop.permute.xlu0 %1043
      %1045 = vrot.lane.b32.xlu0 %v503, 126
      %v1046 = vpop.permute.xlu0 %1045
      %1047 = vrot.lane.b32.xlu0 %v504, 126
      %v1048 = vpop.permute.xlu0 %1047
      %1049 = vrot.lane.b32.xlu0 %v505, 126
      %v1050 = vpop.permute.xlu0 %1049
      %1051 = vrot.lane.b32.xlu0 %v506, 126
      %v1052 = vpop.permute.xlu0 %1051
      %1053 = vrot.lane.b32.xlu0 %v507, 126
      %v1054 = vpop.permute.xlu0 %1053
      %1055 = vrot.lane.b32.xlu0 %v508, 126
      %v1056 = vpop.permute.xlu0 %1055
      %1057 = vrot.lane.b32.xlu0 %v509, 126
      %v1058 = vpop.permute.xlu0 %1057
      %1059 = vrot.lane.b32.xlu0 %v510, 126
      %v1060 = vpop.permute.xlu0 %1059
      %1061 = vrot.lane.b32.xlu0 %v511, 126
      %v1062 = vpop.permute.xlu0 %1061
      %v1075 = vcombine.low %v1040, %v1052
      %v1076 = vcombine.high %v1040, %v1052
      %v1078 = vunpack.c.l.s4 1983009808
      %v1079 = vunpack.c.0.s8 %v1078
      %v1080 = vlaneseq
      %v1081 = vshrl.u32 %v1080, 7
      %v1082 = vsub.s32 %v1079, %v1081
      %v1083 = vrot.slane %v1075, %v1082
      %v1085 = vunpack.c.l.s4 1983009808
      %v1086 = vunpack.c.0.s8 %v1085
      %v1087 = vlaneseq
      %v1088 = vshrl.u32 %v1087, 7
      %v1089 = vsub.s32 %v1086, %v1088
      %v1090 = vrot.slane %v1076, %v1089
      %v1091 = vcombine.low %v1046, %v1058
      %v1092 = vcombine.high %v1046, %v1058
      %v1094 = vunpack.c.l.s4 1983009808
      %v1095 = vunpack.c.0.s8 %v1094
      %v1096 = vlaneseq
      %v1097 = vshrl.u32 %v1096, 7
      %v1098 = vsub.s32 %v1095, %v1097
      %v1099 = vrot.slane %v1091, %v1098
      %v1101 = vunpack.c.l.s4 1983009808
      %v1102 = vunpack.c.0.s8 %v1101
      %v1103 = vlaneseq
      %v1104 = vshrl.u32 %v1103, 7
      %v1105 = vsub.s32 %v1102, %v1104
      %v1106 = vrot.slane %v1092, %v1105
      %v1107 = vcombine.low %v1083, %v1099
      %v1108 = vcombine.high %v1083, %v1099
      %v1110 = vunpack.c.l.s4 1934713408
      %v1111 = vunpack.c.0.s8 %v1110
      %v1112 = vlaneseq
      %v1113 = vshrl.u32 %v1112, 7
      %v1114 = vsub.s32 %v1111, %v1113
      %v1115 = vrot.slane %v1107, %v1114
      %v1117 = vunpack.c.l.s4 1934713408
      %v1118 = vunpack.c.0.s8 %v1117
      %v1119 = vlaneseq
      %v1120 = vshrl.u32 %v1119, 7
      %v1121 = vsub.s32 %v1118, %v1120
      %v1122 = vrot.slane %v1108, %v1121
      %v1123 = vcombine.low %v1090, %v1106
      %v1124 = vcombine.high %v1090, %v1106
      %v1126 = vunpack.c.l.s4 1934713408
      %v1127 = vunpack.c.0.s8 %v1126
      %v1128 = vlaneseq
      %v1129 = vshrl.u32 %v1128, 7
      %v1130 = vsub.s32 %v1127, %v1129
      %v1131 = vrot.slane %v1123, %v1130
      %v1133 = vunpack.c.l.s4 1934713408
      %v1134 = vunpack.c.0.s8 %v1133
      %v1135 = vlaneseq
      %v1136 = vshrl.u32 %v1135, 7
      %v1137 = vsub.s32 %v1134, %v1136
      %v1138 = vrot.slane %v1124, %v1137
      %v1139 = vcombine.high %v1115, 0.0
      %v1140 = vcombine.high %v1122, 0.0
      %v1141 = vcombine.high %v1131, 0.0
      %v1142 = vcombine.high %v1138, 0.0
      %v1143 = vcombine.low %v1042, %v1054
      %v1144 = vcombine.high %v1042, %v1054
      %v1146 = vunpack.c.l.s4 1983009808
      %v1147 = vunpack.c.0.s8 %v1146
      %v1148 = vlaneseq
      %v1149 = vshrl.u32 %v1148, 7
      %v1150 = vsub.s32 %v1147, %v1149
      %v1151 = vrot.slane %v1143, %v1150
      %v1153 = vunpack.c.l.s4 1983009808
      %v1154 = vunpack.c.0.s8 %v1153
      %v1155 = vlaneseq
      %v1156 = vshrl.u32 %v1155, 7
      %v1157 = vsub.s32 %v1154, %v1156
      %v1158 = vrot.slane %v1144, %v1157
      %v1159 = vcombine.low %v1048, %v1060
      %v1160 = vcombine.high %v1048, %v1060
      %v1162 = vunpack.c.l.s4 1983009808
      %v1163 = vunpack.c.0.s8 %v1162
      %v1164 = vlaneseq
      %v1165 = vshrl.u32 %v1164, 7
      %v1166 = vsub.s32 %v1163, %v1165
      %v1167 = vrot.slane %v1159, %v1166
      %v1169 = vunpack.c.l.s4 1983009808
      %v1170 = vunpack.c.0.s8 %v1169
      %v1171 = vlaneseq
      %v1172 = vshrl.u32 %v1171, 7
      %v1173 = vsub.s32 %v1170, %v1172
      %v1174 = vrot.slane %v1160, %v1173
      %v1175 = vcombine.low %v1151, %v1167
      %v1176 = vcombine.high %v1151, %v1167
      %v1178 = vunpack.c.l.s4 1934713408
      %v1179 = vunpack.c.0.s8 %v1178
      %v1180 = vlaneseq
      %v1181 = vshrl.u32 %v1180, 7
      %v1182 = vsub.s32 %v1179, %v1181
      %v1183 = vrot.slane %v1175, %v1182
      %v1185 = vunpack.c.l.s4 1934713408
      %v1186 = vunpack.c.0.s8 %v1185
      %v1187 = vlaneseq
      %v1188 = vshrl.u32 %v1187, 7
      %v1189 = vsub.s32 %v1186, %v1188
      %v1190 = vrot.slane %v1176, %v1189
      %v1191 = vcombine.low %v1158, %v1174
      %v1192 = vcombine.high %v1158, %v1174
      %v1194 = vunpack.c.l.s4 1934713408
      %v1195 = vunpack.c.0.s8 %v1194
      %v1196 = vlaneseq
      %v1197 = vshrl.u32 %v1196, 7
      %v1198 = vsub.s32 %v1195, %v1197
      %v1199 = vrot.slane %v1191, %v1198
      %v1201 = vunpack.c.l.s4 1934713408
      %v1202 = vunpack.c.0.s8 %v1201
      %v1203 = vlaneseq
      %v1204 = vshrl.u32 %v1203, 7
      %v1205 = vsub.s32 %v1202, %v1204
      %v1206 = vrot.slane %v1192, %v1205
      %v1207 = vcombine.high %v1183, 0.0
      %v1208 = vcombine.high %v1190, 0.0
      %v1209 = vcombine.high %v1199, 0.0
      %v1210 = vcombine.high %v1206, 0.0
      %v1211 = vcombine.low %v1044, %v1056
      %v1213 = vunpack.c.l.s4 1983009808
      %v1214 = vunpack.c.0.s8 %v1213
      %v1215 = vlaneseq
      %v1216 = vshrl.u32 %v1215, 7
      %v1217 = vsub.s32 %v1214, %v1216
      %v1218 = vrot.slane %v1211, %v1217
      %v1219 = vcombine.low %v1050, %v1062
      %v1221 = vunpack.c.l.s4 1983009808
      %v1222 = vunpack.c.0.s8 %v1221
      %v1223 = vlaneseq
      %v1224 = vshrl.u32 %v1223, 7
      %v1225 = vsub.s32 %v1222, %v1224
      %v1226 = vrot.slane %v1219, %v1225
      %v1227 = vcombine.low %v1218, %v1226
      %v1229 = vunpack.c.l.s4 1934713408
      %v1230 = vunpack.c.0.s8 %v1229
      %v1231 = vlaneseq
      %v1232 = vshrl.u32 %v1231, 7
      %v1233 = vsub.s32 %v1230, %v1232
      %v1234 = vrot.slane %v1227, %v1233
      %v1235 = vcombine.high %v1234, 0.0
      %1237 = vrot.lane.b32.xlu0 %v1139, 16
      %v1238 = vpop.permute.xlu0 %1237
      %1241 = vrot.lane.b32.xlu0 %v1122, 32
      %v1242 = vpop.permute.xlu0 %1241
      %1245 = vrot.lane.b32.xlu0 %v1140, 48
      %v1246 = vpop.permute.xlu0 %1245
      %1249 = vrot.lane.b32.xlu0 %v1131, 64
      %v1250 = vpop.permute.xlu0 %1249
      %1253 = vrot.lane.b32.xlu0 %v1141, 80
      %v1254 = vpop.permute.xlu0 %1253
      %1257 = vrot.lane.b32.xlu0 %v1138, 96
      %v1258 = vpop.permute.xlu0 %1257
      %1261 = vrot.lane.b32.xlu0 %v1142, 112
      %v1262 = vpop.permute.xlu0 %1261
      %1265 = vrot.lane.b32.xlu0 %v1207, 16
      %v1266 = vpop.permute.xlu0 %1265
      %1269 = vrot.lane.b32.xlu0 %v1190, 32
      %v1270 = vpop.permute.xlu0 %1269
      %1273 = vrot.lane.b32.xlu0 %v1208, 48
      %v1274 = vpop.permute.xlu0 %1273
      %1277 = vrot.lane.b32.xlu0 %v1199, 64
      %v1278 = vpop.permute.xlu0 %1277
      %1281 = vrot.lane.b32.xlu0 %v1209, 80
      %v1282 = vpop.permute.xlu0 %1281
      %1285 = vrot.lane.b32.xlu0 %v1206, 96
      %v1286 = vpop.permute.xlu0 %1285
      %1289 = vrot.lane.b32.xlu0 %v1210, 112
      %v1290 = vpop.permute.xlu0 %1289
      %1293 = vrot.lane.b32.xlu0 %v1235, 16
      %v1294 = vpop.permute.xlu0 %1293
      %v1296 = vsel %vm733, %v1115, %v1238
      %v1297 = vsel %vm735, %v1296, %v1242
      %v1298 = vsel %vm737, %v1297, %v1246
      %v1299 = vsel %vm739, %v1298, %v1250
      %v1300 = vsel %vm741, %v1299, %v1254
      %v1301 = vsel %vm743, %v1300, %v1258
      %v1302 = vsel %vm745, %v1301, %v1262
      %v1303 = vsel %vm733, %v1183, %v1266
      %v1304 = vsel %vm735, %v1303, %v1270
      %v1305 = vsel %vm737, %v1304, %v1274
      %v1306 = vsel %vm739, %v1305, %v1278
      %v1307 = vsel %vm741, %v1306, %v1282
      %v1308 = vsel %vm743, %v1307, %v1286
      %v1309 = vsel %vm745, %v1308, %v1290
      %v1310 = vsel %vm733, %v1234, %v1294
      %vm1311 = vcmask 1046528
      %v1312 = vrot.slane %v500, 1
      %v1313 = vrot.slane %v501, 1
      %v1314 = vsel %vm1311, %v1312, %v1313
      %v1315 = vrot.slane %v502, 1
      %v1316 = vsel %vm1311, %v1313, %v1315
      %v1317 = vrot.slane %v503, 1
      %v1318 = vrot.slane %v504, 1
      %v1319 = vsel %vm1311, %v1317, %v1318
      %v1320 = vrot.slane %v505, 1
      %v1321 = vsel %vm1311, %v1318, %v1320
      %v1322 = vrot.slane %v506, 1
      %v1323 = vrot.slane %v507, 1
      %v1324 = vsel %vm1311, %v1322, %v1323
      %v1325 = vrot.slane %v508, 1
      %v1326 = vsel %vm1311, %v1323, %v1325
      %v1327 = vrot.slane %v509, 1
      %v1328 = vrot.slane %v510, 1
      %v1329 = vsel %vm1311, %v1327, %v1328
      %v1330 = vrot.slane %v511, 1
      %v1331 = vsel %vm1311, %v1328, %v1330
      %v1344 = vcombine.low %v1314, %v1324
      %v1345 = vcombine.high %v1314, %v1324
      %v1347 = vunpack.c.l.s4 1983009808
      %v1348 = vunpack.c.0.s8 %v1347
      %v1349 = vlaneseq
      %v1350 = vshrl.u32 %v1349, 7
      %v1351 = vsub.s32 %v1348, %v1350
      %v1352 = vrot.slane %v1344, %v1351
      %v1354 = vunpack.c.l.s4 1983009808
      %v1355 = vunpack.c.0.s8 %v1354
      %v1356 = vlaneseq
      %v1357 = vshrl.u32 %v1356, 7
      %v1358 = vsub.s32 %v1355, %v1357
      %v1359 = vrot.slane %v1345, %v1358
      %v1360 = vcombine.low %v1319, %v1329
      %v1361 = vcombine.high %v1319, %v1329
      %v1363 = vunpack.c.l.s4 1983009808
      %v1364 = vunpack.c.0.s8 %v1363
      %v1365 = vlaneseq
      %v1366 = vshrl.u32 %v1365, 7
      %v1367 = vsub.s32 %v1364, %v1366
      %v1368 = vrot.slane %v1360, %v1367
      %v1370 = vunpack.c.l.s4 1983009808
      %v1371 = vunpack.c.0.s8 %v1370
      %v1372 = vlaneseq
      %v1373 = vshrl.u32 %v1372, 7
      %v1374 = vsub.s32 %v1371, %v1373
      %v1375 = vrot.slane %v1361, %v1374
      %v1376 = vcombine.low %v1352, %v1368
      %v1377 = vcombine.high %v1352, %v1368
      %v1379 = vunpack.c.l.s4 1934713408
      %v1380 = vunpack.c.0.s8 %v1379
      %v1381 = vlaneseq
      %v1382 = vshrl.u32 %v1381, 7
      %v1383 = vsub.s32 %v1380, %v1382
      %v1384 = vrot.slane %v1376, %v1383
      %v1386 = vunpack.c.l.s4 1934713408
      %v1387 = vunpack.c.0.s8 %v1386
      %v1388 = vlaneseq
      %v1389 = vshrl.u32 %v1388, 7
      %v1390 = vsub.s32 %v1387, %v1389
      %v1391 = vrot.slane %v1377, %v1390
      %v1392 = vcombine.low %v1359, %v1375
      %v1393 = vcombine.high %v1359, %v1375
      %v1395 = vunpack.c.l.s4 1934713408
      %v1396 = vunpack.c.0.s8 %v1395
      %v1397 = vlaneseq
      %v1398 = vshrl.u32 %v1397, 7
      %v1399 = vsub.s32 %v1396, %v1398
      %v1400 = vrot.slane %v1392, %v1399
      %v1402 = vunpack.c.l.s4 1934713408
      %v1403 = vunpack.c.0.s8 %v1402
      %v1404 = vlaneseq
      %v1405 = vshrl.u32 %v1404, 7
      %v1406 = vsub.s32 %v1403, %v1405
      %v1407 = vrot.slane %v1393, %v1406
      %v1408 = vcombine.high %v1384, 0.0
      %v1409 = vcombine.high %v1391, 0.0
      %v1410 = vcombine.high %v1400, 0.0
      %v1411 = vcombine.high %v1407, 0.0
      %v1412 = vcombine.low %v1316, %v1326
      %v1413 = vcombine.high %v1316, %v1326
      %v1415 = vunpack.c.l.s4 1983009808
      %v1416 = vunpack.c.0.s8 %v1415
      %v1417 = vlaneseq
      %v1418 = vshrl.u32 %v1417, 7
      %v1419 = vsub.s32 %v1416, %v1418
      %v1420 = vrot.slane %v1412, %v1419
      %v1422 = vunpack.c.l.s4 1983009808
      %v1423 = vunpack.c.0.s8 %v1422
      %v1424 = vlaneseq
      %v1425 = vshrl.u32 %v1424, 7
      %v1426 = vsub.s32 %v1423, %v1425
      %v1427 = vrot.slane %v1413, %v1426
      %v1428 = vcombine.low %v1321, %v1331
      %v1429 = vcombine.high %v1321, %v1331
      %v1431 = vunpack.c.l.s4 1983009808
      %v1432 = vunpack.c.0.s8 %v1431
      %v1433 = vlaneseq
      %v1434 = vshrl.u32 %v1433, 7
      %v1435 = vsub.s32 %v1432, %v1434
      %v1436 = vrot.slane %v1428, %v1435
      %v1438 = vunpack.c.l.s4 1983009808
      %v1439 = vunpack.c.0.s8 %v1438
      %v1440 = vlaneseq
      %v1441 = vshrl.u32 %v1440, 7
      %v1442 = vsub.s32 %v1439, %v1441
      %v1443 = vrot.slane %v1429, %v1442
      %v1444 = vcombine.low %v1420, %v1436
      %v1445 = vcombine.high %v1420, %v1436
      %v1447 = vunpack.c.l.s4 1934713408
      %v1448 = vunpack.c.0.s8 %v1447
      %v1449 = vlaneseq
      %v1450 = vshrl.u32 %v1449, 7
      %v1451 = vsub.s32 %v1448, %v1450
      %v1452 = vrot.slane %v1444, %v1451
      %v1454 = vunpack.c.l.s4 1934713408
      %v1455 = vunpack.c.0.s8 %v1454
      %v1456 = vlaneseq
      %v1457 = vshrl.u32 %v1456, 7
      %v1458 = vsub.s32 %v1455, %v1457
      %v1459 = vrot.slane %v1445, %v1458
      %v1460 = vcombine.low %v1427, %v1443
      %v1461 = vcombine.high %v1427, %v1443
      %v1463 = vunpack.c.l.s4 1934713408
      %v1464 = vunpack.c.0.s8 %v1463
      %v1465 = vlaneseq
      %v1466 = vshrl.u32 %v1465, 7
      %v1467 = vsub.s32 %v1464, %v1466
      %v1468 = vrot.slane %v1460, %v1467
      %v1470 = vunpack.c.l.s4 1934713408
      %v1471 = vunpack.c.0.s8 %v1470
      %v1472 = vlaneseq
      %v1473 = vshrl.u32 %v1472, 7
      %v1474 = vsub.s32 %v1471, %v1473
      %v1475 = vrot.slane %v1461, %v1474
      %v1476 = vcombine.high %v1452, 0.0
      %v1477 = vcombine.high %v1459, 0.0
      %v1478 = vcombine.high %v1468, 0.0
      %v1479 = vcombine.high %v1475, 0.0
      %v1480 = vcombine.low %v1315, %v1325
      %v1482 = vunpack.c.l.s4 1983009808
      %v1483 = vunpack.c.0.s8 %v1482
      %v1484 = vlaneseq
      %v1485 = vshrl.u32 %v1484, 7
      %v1486 = vsub.s32 %v1483, %v1485
      %v1487 = vrot.slane %v1480, %v1486
      %v1488 = vcombine.low %v1320, %v1330
      %v1490 = vunpack.c.l.s4 1983009808
      %v1491 = vunpack.c.0.s8 %v1490
      %v1492 = vlaneseq
      %v1493 = vshrl.u32 %v1492, 7
      %v1494 = vsub.s32 %v1491, %v1493
      %v1495 = vrot.slane %v1488, %v1494
      %v1496 = vcombine.low %v1487, %v1495
      %v1498 = vunpack.c.l.s4 1934713408
      %v1499 = vunpack.c.0.s8 %v1498
      %v1500 = vlaneseq
      %v1501 = vshrl.u32 %v1500, 7
      %v1502 = vsub.s32 %v1499, %v1501
      %v1503 = vrot.slane %v1496, %v1502
      %v1504 = vcombine.high %v1503, 0.0
      %1506 = vrot.lane.b32.xlu0 %v1408, 16
      %v1507 = vpop.permute.xlu0 %1506
      %1510 = vrot.lane.b32.xlu0 %v1391, 32
      %v1511 = vpop.permute.xlu0 %1510
      %1514 = vrot.lane.b32.xlu0 %v1409, 48
      %v1515 = vpop.permute.xlu0 %1514
      %1518 = vrot.lane.b32.xlu0 %v1400, 64
      %v1519 = vpop.permute.xlu0 %1518
      %1522 = vrot.lane.b32.xlu0 %v1410, 80
      %v1523 = vpop.permute.xlu0 %1522
      %1526 = vrot.lane.b32.xlu0 %v1407, 96
      %v1527 = vpop.permute.xlu0 %1526
      %1530 = vrot.lane.b32.xlu0 %v1411, 112
      %v1531 = vpop.permute.xlu0 %1530
      %1534 = vrot.lane.b32.xlu0 %v1476, 16
      %v1535 = vpop.permute.xlu0 %1534
      %1538 = vrot.lane.b32.xlu0 %v1459, 32
      %v1539 = vpop.permute.xlu0 %1538
      %1542 = vrot.lane.b32.xlu0 %v1477, 48
      %v1543 = vpop.permute.xlu0 %1542
      %1546 = vrot.lane.b32.xlu0 %v1468, 64
      %v1547 = vpop.permute.xlu0 %1546
      %1550 = vrot.lane.b32.xlu0 %v1478, 80
      %v1551 = vpop.permute.xlu0 %1550
      %1554 = vrot.lane.b32.xlu0 %v1475, 96
      %v1555 = vpop.permute.xlu0 %1554
      %1558 = vrot.lane.b32.xlu0 %v1479, 112
      %v1559 = vpop.permute.xlu0 %1558
      %1562 = vrot.lane.b32.xlu0 %v1504, 16
      %v1563 = vpop.permute.xlu0 %1562
      %v1565 = vsel %vm733, %v1384, %v1507
      %v1566 = vsel %vm735, %v1565, %v1511
      %v1567 = vsel %vm737, %v1566, %v1515
      %v1568 = vsel %vm739, %v1567, %v1519
      %v1569 = vsel %vm741, %v1568, %v1523
      %v1570 = vsel %vm743, %v1569, %v1527
      %v1571 = vsel %vm745, %v1570, %v1531
      %v1572 = vsel %vm733, %v1452, %v1535
      %v1573 = vsel %vm735, %v1572, %v1539
      %v1574 = vsel %vm737, %v1573, %v1543
      %v1575 = vsel %vm739, %v1574, %v1547
      %v1576 = vsel %vm741, %v1575, %v1551
      %v1577 = vsel %vm743, %v1576, %v1555
      %v1578 = vsel %vm745, %v1577, %v1559
      %v1579 = vsel %vm733, %v1503, %v1563
      %1580 = vrot.lane.b32.xlu0 %v1314, 127
      %v1581 = vpop.permute.xlu0 %1580
      %1582 = vrot.lane.b32.xlu0 %v1316, 127
      %v1583 = vpop.permute.xlu0 %1582
      %1584 = vrot.lane.b32.xlu0 %v1315, 127
      %v1585 = vpop.permute.xlu0 %1584
      %1586 = vrot.lane.b32.xlu0 %v1319, 127
      %v1587 = vpop.permute.xlu0 %1586
      %1588 = vrot.lane.b32.xlu0 %v1321, 127
      %v1589 = vpop.permute.xlu0 %1588
      %1590 = vrot.lane.b32.xlu0 %v1320, 127
      %v1591 = vpop.permute.xlu0 %1590
      %1592 = vrot.lane.b32.xlu0 %v1324, 127
      %v1593 = vpop.permute.xlu0 %1592
      %1594 = vrot.lane.b32.xlu0 %v1326, 127
      %v1595 = vpop.permute.xlu0 %1594
      %1596 = vrot.lane.b32.xlu0 %v1325, 127
      %v1597 = vpop.permute.xlu0 %1596
      %1598 = vrot.lane.b32.xlu0 %v1329, 127
      %v1599 = vpop.permute.xlu0 %1598
      %1600 = vrot.lane.b32.xlu0 %v1331, 127
      %v1601 = vpop.permute.xlu0 %1600
      %1602 = vrot.lane.b32.xlu0 %v1330, 127
      %v1603 = vpop.permute.xlu0 %1602
      %v1616 = vcombine.low %v1581, %v1593
      %v1617 = vcombine.high %v1581, %v1593
      %v1619 = vunpack.c.l.s4 1983009808
      %v1620 = vunpack.c.0.s8 %v1619
      %v1621 = vlaneseq
      %v1622 = vshrl.u32 %v1621, 7
      %v1623 = vsub.s32 %v1620, %v1622
      %v1624 = vrot.slane %v1616, %v1623
      %v1626 = vunpack.c.l.s4 1983009808
      %v1627 = vunpack.c.0.s8 %v1626
      %v1628 = vlaneseq
      %v1629 = vshrl.u32 %v1628, 7
      %v1630 = vsub.s32 %v1627, %v1629
      %v1631 = vrot.slane %v1617, %v1630
      %v1632 = vcombine.low %v1587, %v1599
      %v1633 = vcombine.high %v1587, %v1599
      %v1635 = vunpack.c.l.s4 1983009808
      %v1636 = vunpack.c.0.s8 %v1635
      %v1637 = vlaneseq
      %v1638 = vshrl.u32 %v1637, 7
      %v1639 = vsub.s32 %v1636, %v1638
      %v1640 = vrot.slane %v1632, %v1639
      %v1642 = vunpack.c.l.s4 1983009808
      %v1643 = vunpack.c.0.s8 %v1642
      %v1644 = vlaneseq
      %v1645 = vshrl.u32 %v1644, 7
      %v1646 = vsub.s32 %v1643, %v1645
      %v1647 = vrot.slane %v1633, %v1646
      %v1648 = vcombine.low %v1624, %v1640
      %v1649 = vcombine.high %v1624, %v1640
      %v1651 = vunpack.c.l.s4 1934713408
      %v1652 = vunpack.c.0.s8 %v1651
      %v1653 = vlaneseq
      %v1654 = vshrl.u32 %v1653, 7
      %v1655 = vsub.s32 %v1652, %v1654
      %v1656 = vrot.slane %v1648, %v1655
      %v1658 = vunpack.c.l.s4 1934713408
      %v1659 = vunpack.c.0.s8 %v1658
      %v1660 = vlaneseq
      %v1661 = vshrl.u32 %v1660, 7
      %v1662 = vsub.s32 %v1659, %v1661
      %v1663 = vrot.slane %v1649, %v1662
      %v1664 = vcombine.low %v1631, %v1647
      %v1665 = vcombine.high %v1631, %v1647
      %v1667 = vunpack.c.l.s4 1934713408
      %v1668 = vunpack.c.0.s8 %v1667
      %v1669 = vlaneseq
      %v1670 = vshrl.u32 %v1669, 7
      %v1671 = vsub.s32 %v1668, %v1670
      %v1672 = vrot.slane %v1664, %v1671
      %v1674 = vunpack.c.l.s4 1934713408
      %v1675 = vunpack.c.0.s8 %v1674
      %v1676 = vlaneseq
      %v1677 = vshrl.u32 %v1676, 7
      %v1678 = vsub.s32 %v1675, %v1677
      %v1679 = vrot.slane %v1665, %v1678
      %v1680 = vcombine.high %v1656, 0.0
      %v1681 = vcombine.high %v1663, 0.0
      %v1682 = vcombine.high %v1672, 0.0
      %v1683 = vcombine.high %v1679, 0.0
      %v1684 = vcombine.low %v1583, %v1595
      %v1685 = vcombine.high %v1583, %v1595
      %v1687 = vunpack.c.l.s4 1983009808
      %v1688 = vunpack.c.0.s8 %v1687
      %v1689 = vlaneseq
      %v1690 = vshrl.u32 %v1689, 7
      %v1691 = vsub.s32 %v1688, %v1690
      %v1692 = vrot.slane %v1684, %v1691
      %v1694 = vunpack.c.l.s4 1983009808
      %v1695 = vunpack.c.0.s8 %v1694
      %v1696 = vlaneseq
      %v1697 = vshrl.u32 %v1696, 7
      %v1698 = vsub.s32 %v1695, %v1697
      %v1699 = vrot.slane %v1685, %v1698
      %v1700 = vcombine.low %v1589, %v1601
      %v1701 = vcombine.high %v1589, %v1601
      %v1703 = vunpack.c.l.s4 1983009808
      %v1704 = vunpack.c.0.s8 %v1703
      %v1705 = vlaneseq
      %v1706 = vshrl.u32 %v1705, 7
      %v1707 = vsub.s32 %v1704, %v1706
      %v1708 = vrot.slane %v1700, %v1707
      %v1710 = vunpack.c.l.s4 1983009808
      %v1711 = vunpack.c.0.s8 %v1710
      %v1712 = vlaneseq
      %v1713 = vshrl.u32 %v1712, 7
      %v1714 = vsub.s32 %v1711, %v1713
      %v1715 = vrot.slane %v1701, %v1714
      %v1716 = vcombine.low %v1692, %v1708
      %v1717 = vcombine.high %v1692, %v1708
      %v1719 = vunpack.c.l.s4 1934713408
      %v1720 = vunpack.c.0.s8 %v1719
      %v1721 = vlaneseq
      %v1722 = vshrl.u32 %v1721, 7
      %v1723 = vsub.s32 %v1720, %v1722
      %v1724 = vrot.slane %v1716, %v1723
      %v1726 = vunpack.c.l.s4 1934713408
      %v1727 = vunpack.c.0.s8 %v1726
      %v1728 = vlaneseq
      %v1729 = vshrl.u32 %v1728, 7
      %v1730 = vsub.s32 %v1727, %v1729
      %v1731 = vrot.slane %v1717, %v1730
      %v1732 = vcombine.low %v1699, %v1715
      %v1733 = vcombine.high %v1699, %v1715
      %v1735 = vunpack.c.l.s4 1934713408
      %v1736 = vunpack.c.0.s8 %v1735
      %v1737 = vlaneseq
      %v1738 = vshrl.u32 %v1737, 7
      %v1739 = vsub.s32 %v1736, %v1738
      %v1740 = vrot.slane %v1732, %v1739
      %v1742 = vunpack.c.l.s4 1934713408
      %v1743 = vunpack.c.0.s8 %v1742
      %v1744 = vlaneseq
      %v1745 = vshrl.u32 %v1744, 7
      %v1746 = vsub.s32 %v1743, %v1745
      %v1747 = vrot.slane %v1733, %v1746
      %v1748 = vcombine.high %v1724, 0.0
      %v1749 = vcombine.high %v1731, 0.0
      %v1750 = vcombine.high %v1740, 0.0
      %v1751 = vcombine.high %v1747, 0.0
      %v1752 = vcombine.low %v1585, %v1597
      %v1754 = vunpack.c.l.s4 1983009808
      %v1755 = vunpack.c.0.s8 %v1754
      %v1756 = vlaneseq
      %v1757 = vshrl.u32 %v1756, 7
      %v1758 = vsub.s32 %v1755, %v1757
      %v1759 = vrot.slane %v1752, %v1758
      %v1760 = vcombine.low %v1591, %v1603
      %v1762 = vunpack.c.l.s4 1983009808
      %v1763 = vunpack.c.0.s8 %v1762
      %v1764 = vlaneseq
      %v1765 = vshrl.u32 %v1764, 7
      %v1766 = vsub.s32 %v1763, %v1765
      %v1767 = vrot.slane %v1760, %v1766
      %v1768 = vcombine.low %v1759, %v1767
      %v1770 = vunpack.c.l.s4 1934713408
      %v1771 = vunpack.c.0.s8 %v1770
      %v1772 = vlaneseq
      %v1773 = vshrl.u32 %v1772, 7
      %v1774 = vsub.s32 %v1771, %v1773
      %v1775 = vrot.slane %v1768, %v1774
      %v1776 = vcombine.high %v1775, 0.0
      %1778 = vrot.lane.b32.xlu0 %v1680, 16
      %v1779 = vpop.permute.xlu0 %1778
      %1782 = vrot.lane.b32.xlu0 %v1663, 32
      %v1783 = vpop.permute.xlu0 %1782
      %1786 = vrot.lane.b32.xlu0 %v1681, 48
      %v1787 = vpop.permute.xlu0 %1786
      %1790 = vrot.lane.b32.xlu0 %v1672, 64
      %v1791 = vpop.permute.xlu0 %1790
      %1794 = vrot.lane.b32.xlu0 %v1682, 80
      %v1795 = vpop.permute.xlu0 %1794
      %1798 = vrot.lane.b32.xlu0 %v1679, 96
      %v1799 = vpop.permute.xlu0 %1798
      %1802 = vrot.lane.b32.xlu0 %v1683, 112
      %v1803 = vpop.permute.xlu0 %1802
      %1806 = vrot.lane.b32.xlu0 %v1748, 16
      %v1807 = vpop.permute.xlu0 %1806
      %1810 = vrot.lane.b32.xlu0 %v1731, 32
      %v1811 = vpop.permute.xlu0 %1810
      %1814 = vrot.lane.b32.xlu0 %v1749, 48
      %v1815 = vpop.permute.xlu0 %1814
      %1818 = vrot.lane.b32.xlu0 %v1740, 64
      %v1819 = vpop.permute.xlu0 %1818
      %1822 = vrot.lane.b32.xlu0 %v1750, 80
      %v1823 = vpop.permute.xlu0 %1822
      %1826 = vrot.lane.b32.xlu0 %v1747, 96
      %v1827 = vpop.permute.xlu0 %1826
      %1830 = vrot.lane.b32.xlu0 %v1751, 112
      %v1831 = vpop.permute.xlu0 %1830
      %1834 = vrot.lane.b32.xlu0 %v1776, 16
      %v1835 = vpop.permute.xlu0 %1834
      %v1837 = vsel %vm733, %v1656, %v1779
      %v1838 = vsel %vm735, %v1837, %v1783
      %v1839 = vsel %vm737, %v1838, %v1787
      %v1840 = vsel %vm739, %v1839, %v1791
      %v1841 = vsel %vm741, %v1840, %v1795
      %v1842 = vsel %vm743, %v1841, %v1799
      %v1843 = vsel %vm745, %v1842, %v1803
      %v1844 = vsel %vm733, %v1724, %v1807
      %v1845 = vsel %vm735, %v1844, %v1811
      %v1846 = vsel %vm737, %v1845, %v1815
      %v1847 = vsel %vm739, %v1846, %v1819
      %v1848 = vsel %vm741, %v1847, %v1823
      %v1849 = vsel %vm743, %v1848, %v1827
      %v1850 = vsel %vm745, %v1849, %v1831
      %v1851 = vsel %vm733, %v1775, %v1835
      %1852 = vrot.lane.b32.xlu0 %v1314, 126
      %v1853 = vpop.permute.xlu0 %1852
      %1854 = vrot.lane.b32.xlu0 %v1316, 126
      %v1855 = vpop.permute.xlu0 %1854
      %1856 = vrot.lane.b32.xlu0 %v1315, 126
      %v1857 = vpop.permute.xlu0 %1856
      %1858 = vrot.lane.b32.xlu0 %v1319, 126
      %v1859 = vpop.permute.xlu0 %1858
      %1860 = vrot.lane.b32.xlu0 %v1321, 126
      %v1861 = vpop.permute.xlu0 %1860
      %1862 = vrot.lane.b32.xlu0 %v1320, 126
      %v1863 = vpop.permute.xlu0 %1862
      %1864 = vrot.lane.b32.xlu0 %v1324, 126
      %v1865 = vpop.permute.xlu0 %1864
      %1866 = vrot.lane.b32.xlu0 %v1326, 126
      %v1867 = vpop.permute.xlu0 %1866
      %1868 = vrot.lane.b32.xlu0 %v1325, 126
      %v1869 = vpop.permute.xlu0 %1868
      %1870 = vrot.lane.b32.xlu0 %v1329, 126
      %v1871 = vpop.permute.xlu0 %1870
      %1872 = vrot.lane.b32.xlu0 %v1331, 126
      %v1873 = vpop.permute.xlu0 %1872
      %1874 = vrot.lane.b32.xlu0 %v1330, 126
      %v1875 = vpop.permute.xlu0 %1874
      %v1888 = vcombine.low %v1853, %v1865
      %v1889 = vcombine.high %v1853, %v1865
      %v1891 = vunpack.c.l.s4 1983009808
      %v1892 = vunpack.c.0.s8 %v1891
      %v1893 = vlaneseq
      %v1894 = vshrl.u32 %v1893, 7
      %v1895 = vsub.s32 %v1892, %v1894
      %v1896 = vrot.slane %v1888, %v1895
      %v1898 = vunpack.c.l.s4 1983009808
      %v1899 = vunpack.c.0.s8 %v1898
      %v1900 = vlaneseq
      %v1901 = vshrl.u32 %v1900, 7
      %v1902 = vsub.s32 %v1899, %v1901
      %v1903 = vrot.slane %v1889, %v1902
      %v1904 = vcombine.low %v1859, %v1871
      %v1905 = vcombine.high %v1859, %v1871
      %v1907 = vunpack.c.l.s4 1983009808
      %v1908 = vunpack.c.0.s8 %v1907
      %v1909 = vlaneseq
      %v1910 = vshrl.u32 %v1909, 7
      %v1911 = vsub.s32 %v1908, %v1910
      %v1912 = vrot.slane %v1904, %v1911
      %v1914 = vunpack.c.l.s4 1983009808
      %v1915 = vunpack.c.0.s8 %v1914
      %v1916 = vlaneseq
      %v1917 = vshrl.u32 %v1916, 7
      %v1918 = vsub.s32 %v1915, %v1917
      %v1919 = vrot.slane %v1905, %v1918
      %v1920 = vcombine.low %v1896, %v1912
      %v1921 = vcombine.high %v1896, %v1912
      %v1923 = vunpack.c.l.s4 1934713408
      %v1924 = vunpack.c.0.s8 %v1923
      %v1925 = vlaneseq
      %v1926 = vshrl.u32 %v1925, 7
      %v1927 = vsub.s32 %v1924, %v1926
      %v1928 = vrot.slane %v1920, %v1927
      %v1930 = vunpack.c.l.s4 1934713408
      %v1931 = vunpack.c.0.s8 %v1930
      %v1932 = vlaneseq
      %v1933 = vshrl.u32 %v1932, 7
      %v1934 = vsub.s32 %v1931, %v1933
      %v1935 = vrot.slane %v1921, %v1934
      %v1936 = vcombine.low %v1903, %v1919
      %v1937 = vcombine.high %v1903, %v1919
      %v1939 = vunpack.c.l.s4 1934713408
      %v1940 = vunpack.c.0.s8 %v1939
      %v1941 = vlaneseq
      %v1942 = vshrl.u32 %v1941, 7
      %v1943 = vsub.s32 %v1940, %v1942
      %v1944 = vrot.slane %v1936, %v1943
      %v1946 = vunpack.c.l.s4 1934713408
      %v1947 = vunpack.c.0.s8 %v1946
      %v1948 = vlaneseq
      %v1949 = vshrl.u32 %v1948, 7
      %v1950 = vsub.s32 %v1947, %v1949
      %v1951 = vrot.slane %v1937, %v1950
      %v1952 = vcombine.high %v1928, 0.0
      %v1953 = vcombine.high %v1935, 0.0
      %v1954 = vcombine.high %v1944, 0.0
      %v1955 = vcombine.high %v1951, 0.0
      %v1956 = vcombine.low %v1855, %v1867
      %v1957 = vcombine.high %v1855, %v1867
      %v1959 = vunpack.c.l.s4 1983009808
      %v1960 = vunpack.c.0.s8 %v1959
      %v1961 = vlaneseq
      %v1962 = vshrl.u32 %v1961, 7
      %v1963 = vsub.s32 %v1960, %v1962
      %v1964 = vrot.slane %v1956, %v1963
      %v1966 = vunpack.c.l.s4 1983009808
      %v1967 = vunpack.c.0.s8 %v1966
      %v1968 = vlaneseq
      %v1969 = vshrl.u32 %v1968, 7
      %v1970 = vsub.s32 %v1967, %v1969
      %v1971 = vrot.slane %v1957, %v1970
      %v1972 = vcombine.low %v1861, %v1873
      %v1973 = vcombine.high %v1861, %v1873
      %v1975 = vunpack.c.l.s4 1983009808
      %v1976 = vunpack.c.0.s8 %v1975
      %v1977 = vlaneseq
      %v1978 = vshrl.u32 %v1977, 7
      %v1979 = vsub.s32 %v1976, %v1978
      %v1980 = vrot.slane %v1972, %v1979
      %v1982 = vunpack.c.l.s4 1983009808
      %v1983 = vunpack.c.0.s8 %v1982
      %v1984 = vlaneseq
      %v1985 = vshrl.u32 %v1984, 7
      %v1986 = vsub.s32 %v1983, %v1985
      %v1987 = vrot.slane %v1973, %v1986
      %v1988 = vcombine.low %v1964, %v1980
      %v1989 = vcombine.high %v1964, %v1980
      %v1991 = vunpack.c.l.s4 1934713408
      %v1992 = vunpack.c.0.s8 %v1991
      %v1993 = vlaneseq
      %v1994 = vshrl.u32 %v1993, 7
      %v1995 = vsub.s32 %v1992, %v1994
      %v1996 = vrot.slane %v1988, %v1995
      %v1998 = vunpack.c.l.s4 1934713408
      %v1999 = vunpack.c.0.s8 %v1998
      %v2000 = vlaneseq
      %v2001 = vshrl.u32 %v2000, 7
      %v2002 = vsub.s32 %v1999, %v2001
      %v2003 = vrot.slane %v1989, %v2002
      %v2004 = vcombine.low %v1971, %v1987
      %v2005 = vcombine.high %v1971, %v1987
      %v2007 = vunpack.c.l.s4 1934713408
      %v2008 = vunpack.c.0.s8 %v2007
      %v2009 = vlaneseq
      %v2010 = vshrl.u32 %v2009, 7
      %v2011 = vsub.s32 %v2008, %v2010
      %v2012 = vrot.slane %v2004, %v2011
      %v2014 = vunpack.c.l.s4 1934713408
      %v2015 = vunpack.c.0.s8 %v2014
      %v2016 = vlaneseq
      %v2017 = vshrl.u32 %v2016, 7
      %v2018 = vsub.s32 %v2015, %v2017
      %v2019 = vrot.slane %v2005, %v2018
      %v2020 = vcombine.high %v1996, 0.0
      %v2021 = vcombine.high %v2003, 0.0
      %v2022 = vcombine.high %v2012, 0.0
      %v2023 = vcombine.high %v2019, 0.0
      %v2024 = vcombine.low %v1857, %v1869
      %v2026 = vunpack.c.l.s4 1983009808
      %v2027 = vunpack.c.0.s8 %v2026
      %v2028 = vlaneseq
      %v2029 = vshrl.u32 %v2028, 7
      %v2030 = vsub.s32 %v2027, %v2029
      %v2031 = vrot.slane %v2024, %v2030
      %v2032 = vcombine.low %v1863, %v1875
      %v2034 = vunpack.c.l.s4 1983009808
      %v2035 = vunpack.c.0.s8 %v2034
      %v2036 = vlaneseq
      %v2037 = vshrl.u32 %v2036, 7
      %v2038 = vsub.s32 %v2035, %v2037
      %v2039 = vrot.slane %v2032, %v2038
      %v2040 = vcombine.low %v2031, %v2039
      %v2042 = vunpack.c.l.s4 1934713408
      %v2043 = vunpack.c.0.s8 %v2042
      %v2044 = vlaneseq
      %v2045 = vshrl.u32 %v2044, 7
      %v2046 = vsub.s32 %v2043, %v2045
      %v2047 = vrot.slane %v2040, %v2046
      %v2048 = vcombine.high %v2047, 0.0
      %2050 = vrot.lane.b32.xlu0 %v1952, 16
      %v2051 = vpop.permute.xlu0 %2050
      %2054 = vrot.lane.b32.xlu0 %v1935, 32
      %v2055 = vpop.permute.xlu0 %2054
      %2058 = vrot.lane.b32.xlu0 %v1953, 48
      %v2059 = vpop.permute.xlu0 %2058
      %2062 = vrot.lane.b32.xlu0 %v1944, 64
      %v2063 = vpop.permute.xlu0 %2062
      %2066 = vrot.lane.b32.xlu0 %v1954, 80
      %v2067 = vpop.permute.xlu0 %2066
      %2070 = vrot.lane.b32.xlu0 %v1951, 96
      %v2071 = vpop.permute.xlu0 %2070
      %2074 = vrot.lane.b32.xlu0 %v1955, 112
      %v2075 = vpop.permute.xlu0 %2074
      %2078 = vrot.lane.b32.xlu0 %v2020, 16
      %v2079 = vpop.permute.xlu0 %2078
      %2082 = vrot.lane.b32.xlu0 %v2003, 32
      %v2083 = vpop.permute.xlu0 %2082
      %2086 = vrot.lane.b32.xlu0 %v2021, 48
      %v2087 = vpop.permute.xlu0 %2086
      %2090 = vrot.lane.b32.xlu0 %v2012, 64
      %v2091 = vpop.permute.xlu0 %2090
      %2094 = vrot.lane.b32.xlu0 %v2022, 80
      %v2095 = vpop.permute.xlu0 %2094
      %2098 = vrot.lane.b32.xlu0 %v2019, 96
      %v2099 = vpop.permute.xlu0 %2098
      %2102 = vrot.lane.b32.xlu0 %v2023, 112
      %v2103 = vpop.permute.xlu0 %2102
      %2106 = vrot.lane.b32.xlu0 %v2048, 16
      %v2107 = vpop.permute.xlu0 %2106
      %v2109 = vsel %vm733, %v1928, %v2051
      %v2110 = vsel %vm735, %v2109, %v2055
      %v2111 = vsel %vm737, %v2110, %v2059
      %v2112 = vsel %vm739, %v2111, %v2063
      %v2113 = vsel %vm741, %v2112, %v2067
      %v2114 = vsel %vm743, %v2113, %v2071
      %v2115 = vsel %vm745, %v2114, %v2075
      %v2116 = vsel %vm733, %v1996, %v2079
      %v2117 = vsel %vm735, %v2116, %v2083
      %v2118 = vsel %vm737, %v2117, %v2087
      %v2119 = vsel %vm739, %v2118, %v2091
      %v2120 = vsel %vm741, %v2119, %v2095
      %v2121 = vsel %vm743, %v2120, %v2099
      %v2122 = vsel %vm745, %v2121, %v2103
      %v2123 = vsel %vm733, %v2047, %v2107
      %vm2124 = vcmask 1045504
      %v2125 = vrot.slane %v500, 2
      %v2126 = vrot.slane %v501, 2
      %v2127 = vsel %vm2124, %v2125, %v2126
      %v2128 = vrot.slane %v502, 2
      %v2129 = vsel %vm2124, %v2126, %v2128
      %v2130 = vrot.slane %v503, 2
      %v2131 = vrot.slane %v504, 2
      %v2132 = vsel %vm2124, %v2130, %v2131
      %v2133 = vrot.slane %v505, 2
      %v2134 = vsel %vm2124, %v2131, %v2133
      %v2135 = vrot.slane %v506, 2
      %v2136 = vrot.slane %v507, 2
      %v2137 = vsel %vm2124, %v2135, %v2136
      %v2138 = vrot.slane %v508, 2
      %v2139 = vsel %vm2124, %v2136, %v2138
      %v2140 = vrot.slane %v509, 2
      %v2141 = vrot.slane %v510, 2
      %v2142 = vsel %vm2124, %v2140, %v2141
      %v2143 = vrot.slane %v511, 2
      %v2144 = vsel %vm2124, %v2141, %v2143
      %v2157 = vcombine.low %v2127, %v2137
      %v2158 = vcombine.high %v2127, %v2137
      %v2160 = vunpack.c.l.s4 1983009808
      %v2161 = vunpack.c.0.s8 %v2160
      %v2162 = vlaneseq
      %v2163 = vshrl.u32 %v2162, 7
      %v2164 = vsub.s32 %v2161, %v2163
      %v2165 = vrot.slane %v2157, %v2164
      %v2167 = vunpack.c.l.s4 1983009808
      %v2168 = vunpack.c.0.s8 %v2167
      %v2169 = vlaneseq
      %v2170 = vshrl.u32 %v2169, 7
      %v2171 = vsub.s32 %v2168, %v2170
      %v2172 = vrot.slane %v2158, %v2171
      %v2173 = vcombine.low %v2132, %v2142
      %v2174 = vcombine.high %v2132, %v2142
      %v2176 = vunpack.c.l.s4 1983009808
      %v2177 = vunpack.c.0.s8 %v2176
      %v2178 = vlaneseq
      %v2179 = vshrl.u32 %v2178, 7
      %v2180 = vsub.s32 %v2177, %v2179
      %v2181 = vrot.slane %v2173, %v2180
      %v2183 = vunpack.c.l.s4 1983009808
      %v2184 = vunpack.c.0.s8 %v2183
      %v2185 = vlaneseq
      %v2186 = vshrl.u32 %v2185, 7
      %v2187 = vsub.s32 %v2184, %v2186
      %v2188 = vrot.slane %v2174, %v2187
      %v2189 = vcombine.low %v2165, %v2181
      %v2190 = vcombine.high %v2165, %v2181
      %v2192 = vunpack.c.l.s4 1934713408
      %v2193 = vunpack.c.0.s8 %v2192
      %v2194 = vlaneseq
      %v2195 = vshrl.u32 %v2194, 7
      %v2196 = vsub.s32 %v2193, %v2195
      %v2197 = vrot.slane %v2189, %v2196
      %v2199 = vunpack.c.l.s4 1934713408
      %v2200 = vunpack.c.0.s8 %v2199
      %v2201 = vlaneseq
      %v2202 = vshrl.u32 %v2201, 7
      %v2203 = vsub.s32 %v2200, %v2202
      %v2204 = vrot.slane %v2190, %v2203
      %v2205 = vcombine.low %v2172, %v2188
      %v2206 = vcombine.high %v2172, %v2188
      %v2208 = vunpack.c.l.s4 1934713408
      %v2209 = vunpack.c.0.s8 %v2208
      %v2210 = vlaneseq
      %v2211 = vshrl.u32 %v2210, 7
      %v2212 = vsub.s32 %v2209, %v2211
      %v2213 = vrot.slane %v2205, %v2212
      %v2215 = vunpack.c.l.s4 1934713408
      %v2216 = vunpack.c.0.s8 %v2215
      %v2217 = vlaneseq
      %v2218 = vshrl.u32 %v2217, 7
      %v2219 = vsub.s32 %v2216, %v2218
      %v2220 = vrot.slane %v2206, %v2219
      %v2221 = vcombine.high %v2197, 0.0
      %v2222 = vcombine.high %v2204, 0.0
      %v2223 = vcombine.high %v2213, 0.0
      %v2224 = vcombine.high %v2220, 0.0
      %v2225 = vcombine.low %v2129, %v2139
      %v2226 = vcombine.high %v2129, %v2139
      %v2228 = vunpack.c.l.s4 1983009808
      %v2229 = vunpack.c.0.s8 %v2228
      %v2230 = vlaneseq
      %v2231 = vshrl.u32 %v2230, 7
      %v2232 = vsub.s32 %v2229, %v2231
      %v2233 = vrot.slane %v2225, %v2232
      %v2235 = vunpack.c.l.s4 1983009808
      %v2236 = vunpack.c.0.s8 %v2235
      %v2237 = vlaneseq
      %v2238 = vshrl.u32 %v2237, 7
      %v2239 = vsub.s32 %v2236, %v2238
      %v2240 = vrot.slane %v2226, %v2239
      %v2241 = vcombine.low %v2134, %v2144
      %v2242 = vcombine.high %v2134, %v2144
      %v2244 = vunpack.c.l.s4 1983009808
      %v2245 = vunpack.c.0.s8 %v2244
      %v2246 = vlaneseq
      %v2247 = vshrl.u32 %v2246, 7
      %v2248 = vsub.s32 %v2245, %v2247
      %v2249 = vrot.slane %v2241, %v2248
      %v2251 = vunpack.c.l.s4 1983009808
      %v2252 = vunpack.c.0.s8 %v2251
      %v2253 = vlaneseq
      %v2254 = vshrl.u32 %v2253, 7
      %v2255 = vsub.s32 %v2252, %v2254
      %v2256 = vrot.slane %v2242, %v2255
      %v2257 = vcombine.low %v2233, %v2249
      %v2258 = vcombine.high %v2233, %v2249
      %v2260 = vunpack.c.l.s4 1934713408
      %v2261 = vunpack.c.0.s8 %v2260
      %v2262 = vlaneseq
      %v2263 = vshrl.u32 %v2262, 7
      %v2264 = vsub.s32 %v2261, %v2263
      %v2265 = vrot.slane %v2257, %v2264
      %v2267 = vunpack.c.l.s4 1934713408
      %v2268 = vunpack.c.0.s8 %v2267
      %v2269 = vlaneseq
      %v2270 = vshrl.u32 %v2269, 7
      %v2271 = vsub.s32 %v2268, %v2270
      %v2272 = vrot.slane %v2258, %v2271
      %v2273 = vcombine.low %v2240, %v2256
      %v2274 = vcombine.high %v2240, %v2256
      %v2276 = vunpack.c.l.s4 1934713408
      %v2277 = vunpack.c.0.s8 %v2276
      %v2278 = vlaneseq
      %v2279 = vshrl.u32 %v2278, 7
      %v2280 = vsub.s32 %v2277, %v2279
      %v2281 = vrot.slane %v2273, %v2280
      %v2283 = vunpack.c.l.s4 1934713408
      %v2284 = vunpack.c.0.s8 %v2283
      %v2285 = vlaneseq
      %v2286 = vshrl.u32 %v2285, 7
      %v2287 = vsub.s32 %v2284, %v2286
      %v2288 = vrot.slane %v2274, %v2287
      %v2289 = vcombine.high %v2265, 0.0
      %v2290 = vcombine.high %v2272, 0.0
      %v2291 = vcombine.high %v2281, 0.0
      %v2292 = vcombine.high %v2288, 0.0
      %v2293 = vcombine.low %v2128, %v2138
      %v2295 = vunpack.c.l.s4 1983009808
      %v2296 = vunpack.c.0.s8 %v2295
      %v2297 = vlaneseq
      %v2298 = vshrl.u32 %v2297, 7
      %v2299 = vsub.s32 %v2296, %v2298
      %v2300 = vrot.slane %v2293, %v2299
      %v2301 = vcombine.low %v2133, %v2143
      %v2303 = vunpack.c.l.s4 1983009808
      %v2304 = vunpack.c.0.s8 %v2303
      %v2305 = vlaneseq
      %v2306 = vshrl.u32 %v2305, 7
      %v2307 = vsub.s32 %v2304, %v2306
      %v2308 = vrot.slane %v2301, %v2307
      %v2309 = vcombine.low %v2300, %v2308
      %v2311 = vunpack.c.l.s4 1934713408
      %v2312 = vunpack.c.0.s8 %v2311
      %v2313 = vlaneseq
      %v2314 = vshrl.u32 %v2313, 7
      %v2315 = vsub.s32 %v2312, %v2314
      %v2316 = vrot.slane %v2309, %v2315
      %v2317 = vcombine.high %v2316, 0.0
      %2319 = vrot.lane.b32.xlu0 %v2221, 16
      %v2320 = vpop.permute.xlu0 %2319
      %2323 = vrot.lane.b32.xlu0 %v2204, 32
      %v2324 = vpop.permute.xlu0 %2323
      %2327 = vrot.lane.b32.xlu0 %v2222, 48
      %v2328 = vpop.permute.xlu0 %2327
      %2331 = vrot.lane.b32.xlu0 %v2213, 64
      %v2332 = vpop.permute.xlu0 %2331
      %2335 = vrot.lane.b32.xlu0 %v2223, 80
      %v2336 = vpop.permute.xlu0 %2335
      %2339 = vrot.lane.b32.xlu0 %v2220, 96
      %v2340 = vpop.permute.xlu0 %2339
      %2343 = vrot.lane.b32.xlu0 %v2224, 112
      %v2344 = vpop.permute.xlu0 %2343
      %2347 = vrot.lane.b32.xlu0 %v2289, 16
      %v2348 = vpop.permute.xlu0 %2347
      %2351 = vrot.lane.b32.xlu0 %v2272, 32
      %v2352 = vpop.permute.xlu0 %2351
      %2355 = vrot.lane.b32.xlu0 %v2290, 48
      %v2356 = vpop.permute.xlu0 %2355
      %2359 = vrot.lane.b32.xlu0 %v2281, 64
      %v2360 = vpop.permute.xlu0 %2359
      %2363 = vrot.lane.b32.xlu0 %v2291, 80
      %v2364 = vpop.permute.xlu0 %2363
      %2367 = vrot.lane.b32.xlu0 %v2288, 96
      %v2368 = vpop.permute.xlu0 %2367
      %2371 = vrot.lane.b32.xlu0 %v2292, 112
      %v2372 = vpop.permute.xlu0 %2371
      %2375 = vrot.lane.b32.xlu0 %v2317, 16
      %v2376 = vpop.permute.xlu0 %2375
      %v2378 = vsel %vm733, %v2197, %v2320
      %v2379 = vsel %vm735, %v2378, %v2324
      %v2380 = vsel %vm737, %v2379, %v2328
      %v2381 = vsel %vm739, %v2380, %v2332
      %v2382 = vsel %vm741, %v2381, %v2336
      %v2383 = vsel %vm743, %v2382, %v2340
      %v2384 = vsel %vm745, %v2383, %v2344
      %v2385 = vsel %vm733, %v2265, %v2348
      %v2386 = vsel %vm735, %v2385, %v2352
      %v2387 = vsel %vm737, %v2386, %v2356
      %v2388 = vsel %vm739, %v2387, %v2360
      %v2389 = vsel %vm741, %v2388, %v2364
      %v2390 = vsel %vm743, %v2389, %v2368
      %v2391 = vsel %vm745, %v2390, %v2372
      %v2392 = vsel %vm733, %v2316, %v2376
      %2393 = vrot.lane.b32.xlu0 %v2127, 127
      %v2394 = vpop.permute.xlu0 %2393
      %2395 = vrot.lane.b32.xlu0 %v2129, 127
      %v2396 = vpop.permute.xlu0 %2395
      %2397 = vrot.lane.b32.xlu0 %v2128, 127
      %v2398 = vpop.permute.xlu0 %2397
      %2399 = vrot.lane.b32.xlu0 %v2132, 127
      %v2400 = vpop.permute.xlu0 %2399
      %2401 = vrot.lane.b32.xlu0 %v2134, 127
      %v2402 = vpop.permute.xlu0 %2401
      %2403 = vrot.lane.b32.xlu0 %v2133, 127
      %v2404 = vpop.permute.xlu0 %2403
      %2405 = vrot.lane.b32.xlu0 %v2137, 127
      %v2406 = vpop.permute.xlu0 %2405
      %2407 = vrot.lane.b32.xlu0 %v2139, 127
      %v2408 = vpop.permute.xlu0 %2407
      %2409 = vrot.lane.b32.xlu0 %v2138, 127
      %v2410 = vpop.permute.xlu0 %2409
      %2411 = vrot.lane.b32.xlu0 %v2142, 127
      %v2412 = vpop.permute.xlu0 %2411
      %2413 = vrot.lane.b32.xlu0 %v2144, 127
      %v2414 = vpop.permute.xlu0 %2413
      %2415 = vrot.lane.b32.xlu0 %v2143, 127
      %v2416 = vpop.permute.xlu0 %2415
      %v2429 = vcombine.low %v2394, %v2406
      %v2430 = vcombine.high %v2394, %v2406
      %v2432 = vunpack.c.l.s4 1983009808
      %v2433 = vunpack.c.0.s8 %v2432
      %v2434 = vlaneseq
      %v2435 = vshrl.u32 %v2434, 7
      %v2436 = vsub.s32 %v2433, %v2435
      %v2437 = vrot.slane %v2429, %v2436
      %v2439 = vunpack.c.l.s4 1983009808
      %v2440 = vunpack.c.0.s8 %v2439
      %v2441 = vlaneseq
      %v2442 = vshrl.u32 %v2441, 7
      %v2443 = vsub.s32 %v2440, %v2442
      %v2444 = vrot.slane %v2430, %v2443
      %v2445 = vcombine.low %v2400, %v2412
      %v2446 = vcombine.high %v2400, %v2412
      %v2448 = vunpack.c.l.s4 1983009808
      %v2449 = vunpack.c.0.s8 %v2448
      %v2450 = vlaneseq
      %v2451 = vshrl.u32 %v2450, 7
      %v2452 = vsub.s32 %v2449, %v2451
      %v2453 = vrot.slane %v2445, %v2452
      %v2455 = vunpack.c.l.s4 1983009808
      %v2456 = vunpack.c.0.s8 %v2455
      %v2457 = vlaneseq
      %v2458 = vshrl.u32 %v2457, 7
      %v2459 = vsub.s32 %v2456, %v2458
      %v2460 = vrot.slane %v2446, %v2459
      %v2461 = vcombine.low %v2437, %v2453
      %v2462 = vcombine.high %v2437, %v2453
      %v2464 = vunpack.c.l.s4 1934713408
      %v2465 = vunpack.c.0.s8 %v2464
      %v2466 = vlaneseq
      %v2467 = vshrl.u32 %v2466, 7
      %v2468 = vsub.s32 %v2465, %v2467
      %v2469 = vrot.slane %v2461, %v2468
      %v2471 = vunpack.c.l.s4 1934713408
      %v2472 = vunpack.c.0.s8 %v2471
      %v2473 = vlaneseq
      %v2474 = vshrl.u32 %v2473, 7
      %v2475 = vsub.s32 %v2472, %v2474
      %v2476 = vrot.slane %v2462, %v2475
      %v2477 = vcombine.low %v2444, %v2460
      %v2478 = vcombine.high %v2444, %v2460
      %v2480 = vunpack.c.l.s4 1934713408
      %v2481 = vunpack.c.0.s8 %v2480
      %v2482 = vlaneseq
      %v2483 = vshrl.u32 %v2482, 7
      %v2484 = vsub.s32 %v2481, %v2483
      %v2485 = vrot.slane %v2477, %v2484
      %v2487 = vunpack.c.l.s4 1934713408
      %v2488 = vunpack.c.0.s8 %v2487
      %v2489 = vlaneseq
      %v2490 = vshrl.u32 %v2489, 7
      %v2491 = vsub.s32 %v2488, %v2490
      %v2492 = vrot.slane %v2478, %v2491
      %v2493 = vcombine.high %v2469, 0.0
      %v2494 = vcombine.high %v2476, 0.0
      %v2495 = vcombine.high %v2485, 0.0
      %v2496 = vcombine.high %v2492, 0.0
      %v2497 = vcombine.low %v2396, %v2408
      %v2498 = vcombine.high %v2396, %v2408
      %v2500 = vunpack.c.l.s4 1983009808
      %v2501 = vunpack.c.0.s8 %v2500
      %v2502 = vlaneseq
      %v2503 = vshrl.u32 %v2502, 7
      %v2504 = vsub.s32 %v2501, %v2503
      %v2505 = vrot.slane %v2497, %v2504
      %v2507 = vunpack.c.l.s4 1983009808
      %v2508 = vunpack.c.0.s8 %v2507
      %v2509 = vlaneseq
      %v2510 = vshrl.u32 %v2509, 7
      %v2511 = vsub.s32 %v2508, %v2510
      %v2512 = vrot.slane %v2498, %v2511
      %v2513 = vcombine.low %v2402, %v2414
      %v2514 = vcombine.high %v2402, %v2414
      %v2516 = vunpack.c.l.s4 1983009808
      %v2517 = vunpack.c.0.s8 %v2516
      %v2518 = vlaneseq
      %v2519 = vshrl.u32 %v2518, 7
      %v2520 = vsub.s32 %v2517, %v2519
      %v2521 = vrot.slane %v2513, %v2520
      %v2523 = vunpack.c.l.s4 1983009808
      %v2524 = vunpack.c.0.s8 %v2523
      %v2525 = vlaneseq
      %v2526 = vshrl.u32 %v2525, 7
      %v2527 = vsub.s32 %v2524, %v2526
      %v2528 = vrot.slane %v2514, %v2527
      %v2529 = vcombine.low %v2505, %v2521
      %v2530 = vcombine.high %v2505, %v2521
      %v2532 = vunpack.c.l.s4 1934713408
      %v2533 = vunpack.c.0.s8 %v2532
      %v2534 = vlaneseq
      %v2535 = vshrl.u32 %v2534, 7
      %v2536 = vsub.s32 %v2533, %v2535
      %v2537 = vrot.slane %v2529, %v2536
      %v2539 = vunpack.c.l.s4 1934713408
      %v2540 = vunpack.c.0.s8 %v2539
      %v2541 = vlaneseq
      %v2542 = vshrl.u32 %v2541, 7
      %v2543 = vsub.s32 %v2540, %v2542
      %v2544 = vrot.slane %v2530, %v2543
      %v2545 = vcombine.low %v2512, %v2528
      %v2546 = vcombine.high %v2512, %v2528
      %v2548 = vunpack.c.l.s4 1934713408
      %v2549 = vunpack.c.0.s8 %v2548
      %v2550 = vlaneseq
      %v2551 = vshrl.u32 %v2550, 7
      %v2552 = vsub.s32 %v2549, %v2551
      %v2553 = vrot.slane %v2545, %v2552
      %v2555 = vunpack.c.l.s4 1934713408
      %v2556 = vunpack.c.0.s8 %v2555
      %v2557 = vlaneseq
      %v2558 = vshrl.u32 %v2557, 7
      %v2559 = vsub.s32 %v2556, %v2558
      %v2560 = vrot.slane %v2546, %v2559
      %v2561 = vcombine.high %v2537, 0.0
      %v2562 = vcombine.high %v2544, 0.0
      %v2563 = vcombine.high %v2553, 0.0
      %v2564 = vcombine.high %v2560, 0.0
      %v2565 = vcombine.low %v2398, %v2410
      %v2567 = vunpack.c.l.s4 1983009808
      %v2568 = vunpack.c.0.s8 %v2567
      %v2569 = vlaneseq
      %v2570 = vshrl.u32 %v2569, 7
      %v2571 = vsub.s32 %v2568, %v2570
      %v2572 = vrot.slane %v2565, %v2571
      %v2573 = vcombine.low %v2404, %v2416
      %v2575 = vunpack.c.l.s4 1983009808
      %v2576 = vunpack.c.0.s8 %v2575
      %v2577 = vlaneseq
      %v2578 = vshrl.u32 %v2577, 7
      %v2579 = vsub.s32 %v2576, %v2578
      %v2580 = vrot.slane %v2573, %v2579
      %v2581 = vcombine.low %v2572, %v2580
      %v2583 = vunpack.c.l.s4 1934713408
      %v2584 = vunpack.c.0.s8 %v2583
      %v2585 = vlaneseq
      %v2586 = vshrl.u32 %v2585, 7
      %v2587 = vsub.s32 %v2584, %v2586
      %v2588 = vrot.slane %v2581, %v2587
      %v2589 = vcombine.high %v2588, 0.0
      %2591 = vrot.lane.b32.xlu0 %v2493, 16
      %v2592 = vpop.permute.xlu0 %2591
      %2595 = vrot.lane.b32.xlu0 %v2476, 32
      %v2596 = vpop.permute.xlu0 %2595
      %2599 = vrot.lane.b32.xlu0 %v2494, 48
      %v2600 = vpop.permute.xlu0 %2599
      %2603 = vrot.lane.b32.xlu0 %v2485, 64
      %v2604 = vpop.permute.xlu0 %2603
      %2607 = vrot.lane.b32.xlu0 %v2495, 80
      %v2608 = vpop.permute.xlu0 %2607
      %2611 = vrot.lane.b32.xlu0 %v2492, 96
      %v2612 = vpop.permute.xlu0 %2611
      %2615 = vrot.lane.b32.xlu0 %v2496, 112
      %v2616 = vpop.permute.xlu0 %2615
      %2619 = vrot.lane.b32.xlu0 %v2561, 16
      %v2620 = vpop.permute.xlu0 %2619
      %2623 = vrot.lane.b32.xlu0 %v2544, 32
      %v2624 = vpop.permute.xlu0 %2623
      %2627 = vrot.lane.b32.xlu0 %v2562, 48
      %v2628 = vpop.permute.xlu0 %2627
      %2631 = vrot.lane.b32.xlu0 %v2553, 64
      %v2632 = vpop.permute.xlu0 %2631
      %2635 = vrot.lane.b32.xlu0 %v2563, 80
      %v2636 = vpop.permute.xlu0 %2635
      %2639 = vrot.lane.b32.xlu0 %v2560, 96
      %v2640 = vpop.permute.xlu0 %2639
      %2643 = vrot.lane.b32.xlu0 %v2564, 112
      %v2644 = vpop.permute.xlu0 %2643
      %2647 = vrot.lane.b32.xlu0 %v2589, 16
      %v2648 = vpop.permute.xlu0 %2647
      %v2650 = vsel %vm733, %v2469, %v2592
      %v2651 = vsel %vm735, %v2650, %v2596
      %v2652 = vsel %vm737, %v2651, %v2600
      %v2653 = vsel %vm739, %v2652, %v2604
      %v2654 = vsel %vm741, %v2653, %v2608
      %v2655 = vsel %vm743, %v2654, %v2612
      %v2656 = vsel %vm745, %v2655, %v2616
      %v2657 = vsel %vm733, %v2537, %v2620
      %v2658 = vsel %vm735, %v2657, %v2624
      %v2659 = vsel %vm737, %v2658, %v2628
      %v2660 = vsel %vm739, %v2659, %v2632
      %v2661 = vsel %vm741, %v2660, %v2636
      %v2662 = vsel %vm743, %v2661, %v2640
      %v2663 = vsel %vm745, %v2662, %v2644
      %v2664 = vsel %vm733, %v2588, %v2648
      %2665 = vrot.lane.b32.xlu0 %v2127, 126
      %v2666 = vpop.permute.xlu0 %2665
      %2667 = vrot.lane.b32.xlu0 %v2129, 126
      %v2668 = vpop.permute.xlu0 %2667
      %2669 = vrot.lane.b32.xlu0 %v2128, 126
      %v2670 = vpop.permute.xlu0 %2669
      %2671 = vrot.lane.b32.xlu0 %v2132, 126
      %v2672 = vpop.permute.xlu0 %2671
      %2673 = vrot.lane.b32.xlu0 %v2134, 126
      %v2674 = vpop.permute.xlu0 %2673
      %2675 = vrot.lane.b32.xlu0 %v2133, 126
      %v2676 = vpop.permute.xlu0 %2675
      %2677 = vrot.lane.b32.xlu0 %v2137, 126
      %v2678 = vpop.permute.xlu0 %2677
      %2679 = vrot.lane.b32.xlu0 %v2139, 126
      %v2680 = vpop.permute.xlu0 %2679
      %2681 = vrot.lane.b32.xlu0 %v2138, 126
      %v2682 = vpop.permute.xlu0 %2681
      %2683 = vrot.lane.b32.xlu0 %v2142, 126
      %v2684 = vpop.permute.xlu0 %2683
      %2685 = vrot.lane.b32.xlu0 %v2144, 126
      %v2686 = vpop.permute.xlu0 %2685
      %2687 = vrot.lane.b32.xlu0 %v2143, 126
      %v2688 = vpop.permute.xlu0 %2687
      %v2701 = vcombine.low %v2666, %v2678
      %v2702 = vcombine.high %v2666, %v2678
      %v2704 = vunpack.c.l.s4 1983009808
      %v2705 = vunpack.c.0.s8 %v2704
      %v2706 = vlaneseq
      %v2707 = vshrl.u32 %v2706, 7
      %v2708 = vsub.s32 %v2705, %v2707
      %v2709 = vrot.slane %v2701, %v2708
      %v2711 = vunpack.c.l.s4 1983009808
      %v2712 = vunpack.c.0.s8 %v2711
      %v2713 = vlaneseq
      %v2714 = vshrl.u32 %v2713, 7
      %v2715 = vsub.s32 %v2712, %v2714
      %v2716 = vrot.slane %v2702, %v2715
      %v2717 = vcombine.low %v2672, %v2684
      %v2718 = vcombine.high %v2672, %v2684
      %v2720 = vunpack.c.l.s4 1983009808
      %v2721 = vunpack.c.0.s8 %v2720
      %v2722 = vlaneseq
      %v2723 = vshrl.u32 %v2722, 7
      %v2724 = vsub.s32 %v2721, %v2723
      %v2725 = vrot.slane %v2717, %v2724
      %v2727 = vunpack.c.l.s4 1983009808
      %v2728 = vunpack.c.0.s8 %v2727
      %v2729 = vlaneseq
      %v2730 = vshrl.u32 %v2729, 7
      %v2731 = vsub.s32 %v2728, %v2730
      %v2732 = vrot.slane %v2718, %v2731
      %v2733 = vcombine.low %v2709, %v2725
      %v2734 = vcombine.high %v2709, %v2725
      %v2736 = vunpack.c.l.s4 1934713408
      %v2737 = vunpack.c.0.s8 %v2736
      %v2738 = vlaneseq
      %v2739 = vshrl.u32 %v2738, 7
      %v2740 = vsub.s32 %v2737, %v2739
      %v2741 = vrot.slane %v2733, %v2740
      %v2743 = vunpack.c.l.s4 1934713408
      %v2744 = vunpack.c.0.s8 %v2743
      %v2745 = vlaneseq
      %v2746 = vshrl.u32 %v2745, 7
      %v2747 = vsub.s32 %v2744, %v2746
      %v2748 = vrot.slane %v2734, %v2747
      %v2749 = vcombine.low %v2716, %v2732
      %v2750 = vcombine.high %v2716, %v2732
      %v2752 = vunpack.c.l.s4 1934713408
      %v2753 = vunpack.c.0.s8 %v2752
      %v2754 = vlaneseq
      %v2755 = vshrl.u32 %v2754, 7
      %v2756 = vsub.s32 %v2753, %v2755
      %v2757 = vrot.slane %v2749, %v2756
      %v2759 = vunpack.c.l.s4 1934713408
      %v2760 = vunpack.c.0.s8 %v2759
      %v2761 = vlaneseq
      %v2762 = vshrl.u32 %v2761, 7
      %v2763 = vsub.s32 %v2760, %v2762
      %v2764 = vrot.slane %v2750, %v2763
      %v2765 = vcombine.high %v2741, 0.0
      %v2766 = vcombine.high %v2748, 0.0
      %v2767 = vcombine.high %v2757, 0.0
      %v2768 = vcombine.high %v2764, 0.0
      %v2769 = vcombine.low %v2668, %v2680
      %v2770 = vcombine.high %v2668, %v2680
      %v2772 = vunpack.c.l.s4 1983009808
      %v2773 = vunpack.c.0.s8 %v2772
      %v2774 = vlaneseq
      %v2775 = vshrl.u32 %v2774, 7
      %v2776 = vsub.s32 %v2773, %v2775
      %v2777 = vrot.slane %v2769, %v2776
      %v2779 = vunpack.c.l.s4 1983009808
      %v2780 = vunpack.c.0.s8 %v2779
      %v2781 = vlaneseq
      %v2782 = vshrl.u32 %v2781, 7
      %v2783 = vsub.s32 %v2780, %v2782
      %v2784 = vrot.slane %v2770, %v2783
      %v2785 = vcombine.low %v2674, %v2686
      %v2786 = vcombine.high %v2674, %v2686
      %v2788 = vunpack.c.l.s4 1983009808
      %v2789 = vunpack.c.0.s8 %v2788
      %v2790 = vlaneseq
      %v2791 = vshrl.u32 %v2790, 7
      %v2792 = vsub.s32 %v2789, %v2791
      %v2793 = vrot.slane %v2785, %v2792
      %v2795 = vunpack.c.l.s4 1983009808
      %v2796 = vunpack.c.0.s8 %v2795
      %v2797 = vlaneseq
      %v2798 = vshrl.u32 %v2797, 7
      %v2799 = vsub.s32 %v2796, %v2798
      %v2800 = vrot.slane %v2786, %v2799
      %v2801 = vcombine.low %v2777, %v2793
      %v2802 = vcombine.high %v2777, %v2793
      %v2804 = vunpack.c.l.s4 1934713408
      %v2805 = vunpack.c.0.s8 %v2804
      %v2806 = vlaneseq
      %v2807 = vshrl.u32 %v2806, 7
      %v2808 = vsub.s32 %v2805, %v2807
      %v2809 = vrot.slane %v2801, %v2808
      %v2811 = vunpack.c.l.s4 1934713408
      %v2812 = vunpack.c.0.s8 %v2811
      %v2813 = vlaneseq
      %v2814 = vshrl.u32 %v2813, 7
      %v2815 = vsub.s32 %v2812, %v2814
      %v2816 = vrot.slane %v2802, %v2815
      %v2817 = vcombine.low %v2784, %v2800
      %v2818 = vcombine.high %v2784, %v2800
      %v2820 = vunpack.c.l.s4 1934713408
      %v2821 = vunpack.c.0.s8 %v2820
      %v2822 = vlaneseq
      %v2823 = vshrl.u32 %v2822, 7
      %v2824 = vsub.s32 %v2821, %v2823
      %v2825 = vrot.slane %v2817, %v2824
      %v2827 = vunpack.c.l.s4 1934713408
      %v2828 = vunpack.c.0.s8 %v2827
      %v2829 = vlaneseq
      %v2830 = vshrl.u32 %v2829, 7
      %v2831 = vsub.s32 %v2828, %v2830
      %v2832 = vrot.slane %v2818, %v2831
      %v2833 = vcombine.high %v2809, 0.0
      %v2834 = vcombine.high %v2816, 0.0
      %v2835 = vcombine.high %v2825, 0.0
      %v2836 = vcombine.high %v2832, 0.0
      %v2837 = vcombine.low %v2670, %v2682
      %v2839 = vunpack.c.l.s4 1983009808
      %v2840 = vunpack.c.0.s8 %v2839
      %v2841 = vlaneseq
      %v2842 = vshrl.u32 %v2841, 7
      %v2843 = vsub.s32 %v2840, %v2842
      %v2844 = vrot.slane %v2837, %v2843
      %v2845 = vcombine.low %v2676, %v2688
      %v2847 = vunpack.c.l.s4 1983009808
      %v2848 = vunpack.c.0.s8 %v2847
      %v2849 = vlaneseq
      %v2850 = vshrl.u32 %v2849, 7
      %v2851 = vsub.s32 %v2848, %v2850
      %v2852 = vrot.slane %v2845, %v2851
      %v2853 = vcombine.low %v2844, %v2852
      %v2855 = vunpack.c.l.s4 1934713408
      %v2856 = vunpack.c.0.s8 %v2855
      %v2857 = vlaneseq
      %v2858 = vshrl.u32 %v2857, 7
      %v2859 = vsub.s32 %v2856, %v2858
      %v2860 = vrot.slane %v2853, %v2859
      %v2861 = vcombine.high %v2860, 0.0
      %2863 = vrot.lane.b32.xlu0 %v2765, 16
      %v2864 = vpop.permute.xlu0 %2863
      %2867 = vrot.lane.b32.xlu0 %v2748, 32
      %v2868 = vpop.permute.xlu0 %2867
      %2871 = vrot.lane.b32.xlu0 %v2766, 48
      %v2872 = vpop.permute.xlu0 %2871
      %2875 = vrot.lane.b32.xlu0 %v2757, 64
      %v2876 = vpop.permute.xlu0 %2875
      %2879 = vrot.lane.b32.xlu0 %v2767, 80
      %v2880 = vpop.permute.xlu0 %2879
      %2883 = vrot.lane.b32.xlu0 %v2764, 96
      %v2884 = vpop.permute.xlu0 %2883
      %2887 = vrot.lane.b32.xlu0 %v2768, 112
      %v2888 = vpop.permute.xlu0 %2887
      %2891 = vrot.lane.b32.xlu0 %v2833, 16
      %v2892 = vpop.permute.xlu0 %2891
      %2895 = vrot.lane.b32.xlu0 %v2816, 32
      %v2896 = vpop.permute.xlu0 %2895
      %2899 = vrot.lane.b32.xlu0 %v2834, 48
      %v2900 = vpop.permute.xlu0 %2899
      %2903 = vrot.lane.b32.xlu0 %v2825, 64
      %v2904 = vpop.permute.xlu0 %2903
      %2907 = vrot.lane.b32.xlu0 %v2835, 80
      %v2908 = vpop.permute.xlu0 %2907
      %2911 = vrot.lane.b32.xlu0 %v2832, 96
      %v2912 = vpop.permute.xlu0 %2911
      %2915 = vrot.lane.b32.xlu0 %v2836, 112
      %v2916 = vpop.permute.xlu0 %2915
      %2919 = vrot.lane.b32.xlu0 %v2861, 16
      %v2920 = vpop.permute.xlu0 %2919
      %v2922 = vsel %vm733, %v2741, %v2864
      %v2923 = vsel %vm735, %v2922, %v2868
      %v2924 = vsel %vm737, %v2923, %v2872
      %v2925 = vsel %vm739, %v2924, %v2876
      %v2926 = vsel %vm741, %v2925, %v2880
      %v2927 = vsel %vm743, %v2926, %v2884
      %v2928 = vsel %vm745, %v2927, %v2888
      %v2929 = vsel %vm733, %v2809, %v2892
      %v2930 = vsel %vm735, %v2929, %v2896
      %v2931 = vsel %vm737, %v2930, %v2900
      %v2932 = vsel %vm739, %v2931, %v2904
      %v2933 = vsel %vm741, %v2932, %v2908
      %v2934 = vsel %vm743, %v2933, %v2912
      %v2935 = vsel %vm745, %v2934, %v2916
      %v2936 = vsel %vm733, %v2860, %v2920
      %v2940 = vrot.slane %v1030, 4
      %v2941 = vrot.slane %v1037, 4
      %v2942 = vrot.slane %v1038, 4
      %v2949 = vrot.slane %v1571, 4
      %v2950 = vrot.slane %v1578, 4
      %v2951 = vrot.slane %v1579, 4
      %v2958 = vrot.slane %v2115, 4
      %v2959 = vrot.slane %v2122, 4
      %v2960 = vrot.slane %v2123, 4
      %v2967 = vrot.slane %v2656, 4
      %v2968 = vrot.slane %v2663, 4
      %v2969 = vrot.slane %v2664, 4
      %vm2973 = vcmask 1043456
      %v2974 = vsel %vm2973, %v746, %v2940
      %v2975 = vsel %vm2973, %v753, %v2941
      %v2976 = vsel %vm2973, %v754, %v2942
      %v2977 = vsel %vm2973, %v1302, %v2949
      %v2978 = vsel %vm2973, %v1309, %v2950
      %v2979 = vsel %vm2973, %v1310, %v2951
      %v2980 = vsel %vm2973, %v1843, %v2958
      %v2981 = vsel %vm2973, %v1850, %v2959
      %v2982 = vsel %vm2973, %v1851, %v2960
      %v2983 = vsel %vm2973, %v2384, %v2967
      %v2984 = vsel %vm2973, %v2391, %v2968
      %v2985 = vsel %vm2973, %v2392, %v2969
      %v2986 = vld [vmem:[%s1] sm:$0xff]
      %v2987 = vld [vmem:[%s2] sm:$0xff]
      %2989 = vset.pattern.permute.xlu0 0
      %2990 = vperm.xlu0 %2989, %v2987
      %v2991 = vpop.permute.xlu0 %2990
      %vm2993 = vcmask 293888
      %v2995 = vsel %vm2993, %v2986, 0
      %v2998 = vsel %vm2973, %v2928, 0
      %v3001 = vsel %vm2973, %v2935, 0
      %v3004 = vsel %vm2973, %v2936, 0
      %3006 = vmatprep.subr.mxu0 %v2975
      %3007 = vmatpush1.msra.mxu0 %v2974
      %3008 = vmatprep.subr.mxu0 %v2978
      %3009 = vmatpush1.msra.mxu0 %v2977
      %3010 = vmatprep.subr.mxu0 %v2981
      %3011 = vmatpush1.msra.mxu0 %v2980
      %3012 = vmatprep.subr.mxu0 %v2984
      %3013 = vmatpush1.msra.mxu0 %v2983
      %3014 = vmatprep.subr.mxu0 %v3001
      %3015 = vmatpush1.msra.mxu0 %v2998
      %3016 = vmatprep.subr.mxu0 0.0
      %3017 = vmatpush1.msra.mxu0 0.0
      %3018 = vmatprep.subr.mxu0 0.0
      %3019 = vmatpush1.msra.mxu0 0.0
      %3020 = vmatprep.subr.mxu0 0.0
      %3021 = vmatpush1.msra.mxu0 0.0
      %3022 = vmatprep.subr.mxu0 0.0
      %3023 = vmatpush1.msra.mxu0 0.0
      %3024 = vmatprep.subr.mxu0 0.0
      %3025 = vmatpush1.msra.mxu0 0.0
      %3026 = vmatprep.subr.mxu0 0.0
      %3027 = vmatpush1.msra.mxu0 0.0
      %3028 = vmatprep.subr.mxu0 0.0
      %3029 = vmatpush1.msra.mxu0 0.0
      %3030 = vmatprep.subr.mxu0 0.0
      %3031 = vmatpush1.msra.mxu0 0.0
      %3032 = vmatprep.subr.mxu0 0.0
      %3033 = vmatpush1.msra.mxu0 0.0
      %3034 = vmatprep.subr.mxu0 0.0
      %3035 = vmatpush1.msra.mxu0 0.0
      %3036 = vmatprep.subr.mxu0 0.0
      %3037 = vmatpush1.msra.mxu0 0.0
      %3038 = vmatprep.subr.mxu0 0.0
      %3039 = vmatpush1.msra.mxu0 0.0
      %3040 = vmatprep.subr.mxu0 0.0
      %3041 = vmatpush1.msra.mxu0 0.0
      %3042 = vmatprep.subr.mxu0 0.0
      %3043 = vmatpush1.msra.mxu0 0.0
      %3044 = vmatprep.subr.mxu0 0.0
      %3045 = vmatpush1.msra.mxu0 0.0
      %3046 = vmatprep.subr.mxu0 0.0
      %3047 = vmatpush1.msra.mxu0 0.0
      %3048 = vmatprep.subr.mxu0 0.0
      %3049 = vmatpush1.msra.mxu0 0.0
      %3050 = vmatprep.subr.mxu0 0.0
      %3051 = vmatpush1.msra.mxu0 0.0
      %3052 = vmatprep.subr.mxu0 0.0
      %3053 = vmatpush1.msra.mxu0 0.0
      %3054 = vmatprep.subr.mxu0 0.0
      %3055 = vmatpush1.msra.mxu0 0.0
      %3056 = vmatprep.subr.mxu0 0.0
      %3057 = vmatpush1.msra.mxu0 0.0
      %3058 = vmatprep.subr.mxu0 0.0
      %3059 = vmatpush1.msra.mxu0 0.0
      %3060 = vmatprep.subr.mxu0 0.0
      %3061 = vmatpush1.msra.mxu0 0.0
      %3062 = vmatprep.subr.mxu0 0.0
      %3063 = vmatpush1.msra.mxu0 0.0
      %3064 = vmatprep.subr.mxu0 0.0
      %3065 = vmatpush1.msra.mxu0 0.0
      %3066 = vmatprep.subr.mxu0 0.0
      %3067 = vmatpush1.msra.mxu0 0.0
      %3068 = vmatprep.subr.mxu0 0.0
      %3069 = vmatpush1.msra.mxu0 0.0
      %3070 = vmatprep.mubr.f32.mxu0 0.0
      %3071 = vmatmul.mubr.f32.gmra.mrb[0].mxu0 %v2995
      %v3072 = vpop.f32.mrb[0].mxu0
      %v3073 = vadd.f32 %v2991, %v3072
      %v3074 = vpop.f32.mrb[0].mxu0
      %v3075 = vadd.f32 %v2991, %v3074
      %3076 = vdwg.mxu0
      %3077 = vmatprep.subr.mxu0 0.0
      %3078 = vmatpush1.msra.mxu0 %v2976
      %3079 = vmatprep.subr.mxu0 0.0
      %3080 = vmatpush1.msra.mxu0 %v2979
      %3081 = vmatprep.subr.mxu0 0.0
      %3082 = vmatpush1.msra.mxu0 %v2982
      %3083 = vmatprep.subr.mxu0 0.0
      %3084 = vmatpush1.msra.mxu0 %v2985
      %3085 = vmatprep.subr.mxu0 0.0
      %3086 = vmatpush1.msra.mxu0 %v3004
      %3087 = vmatprep.subr.mxu0 0.0
      %3088 = vmatpush1.msra.mxu0 0.0
      %3089 = vmatprep.subr.mxu0 0.0
      %3090 = vmatpush1.msra.mxu0 0.0
      %3091 = vmatprep.subr.mxu0 0.0
      %3092 = vmatpush1.msra.mxu0 0.0
      %3093 = vmatprep.subr.mxu0 0.0
      %3094 = vmatpush1.msra.mxu0 0.0
      %3095 = vmatprep.subr.mxu0 0.0
      %3096 = vmatpush1.msra.mxu0 0.0
      %3097 = vmatprep.subr.mxu0 0.0
      %3098 = vmatpush1.msra.mxu0 0.0
      %3099 = vmatprep.subr.mxu0 0.0
      %3100 = vmatpush1.msra.mxu0 0.0
      %3101 = vmatprep.subr.mxu0 0.0
      %3102 = vmatpush1.msra.mxu0 0.0
      %3103 = vmatprep.subr.mxu0 0.0
      %3104 = vmatpush1.msra.mxu0 0.0
      %3105 = vmatprep.subr.mxu0 0.0
      %3106 = vmatpush1.msra.mxu0 0.0
      %3107 = vmatprep.subr.mxu0 0.0
      %3108 = vmatpush1.msra.mxu0 0.0
      %3109 = vmatprep.subr.mxu0 0.0
      %3110 = vmatpush1.msra.mxu0 0.0
      %3111 = vmatprep.subr.mxu0 0.0
      %3112 = vmatpush1.msra.mxu0 0.0
      %3113 = vmatprep.subr.mxu0 0.0
      %3114 = vmatpush1.msra.mxu0 0.0
      %3115 = vmatprep.subr.mxu0 0.0
      %3116 = vmatpush1.msra.mxu0 0.0
      %3117 = vmatprep.subr.mxu0 0.0
      %3118 = vmatpush1.msra.mxu0 0.0
      %3119 = vmatprep.subr.mxu0 0.0
      %3120 = vmatpush1.msra.mxu0 0.0
      %3121 = vmatprep.subr.mxu0 0.0
      %3122 = vmatpush1.msra.mxu0 0.0
      %3123 = vmatprep.subr.mxu0 0.0
      %3124 = vmatpush1.msra.mxu0 0.0
      %3125 = vmatprep.subr.mxu0 0.0
      %3126 = vmatpush1.msra.mxu0 0.0
      %3127 = vmatprep.subr.mxu0 0.0
      %3128 = vmatpush1.msra.mxu0 0.0
      %3129 = vmatprep.subr.mxu0 0.0
      %3130 = vmatpush1.msra.mxu0 0.0
      %3131 = vmatprep.subr.mxu0 0.0
      %3132 = vmatpush1.msra.mxu0 0.0
      %3133 = vmatprep.subr.mxu0 0.0
      %3134 = vmatpush1.msra.mxu0 0.0
      %3135 = vmatprep.subr.mxu0 0.0
      %3136 = vmatpush1.msra.mxu0 0.0
      %3137 = vmatprep.subr.mxu0 0.0
      %3138 = vmatpush1.msra.mxu0 0.0
      %3139 = vmatprep.subr.mxu0 0.0
      %3140 = vmatpush1.msra.mxu0 0.0
      %3141 = vmatprep.mubr.f32.mxu0 0.0
      %3142 = vmatmul.mubr.f32.gmra.mrb[0].mxu0 %v2995
      %v3143 = vpop.f32.mrb[0].mxu0
      %v3144 = vadd.f32 %v2991, %v3143
      %v3145 = vpop.f32.mrb[0].mxu0
      %3146 = vdwg.mxu0
      %v3147 = vmax.f32 %v3073, 0.0
      %v3148 = vmax.f32 %v3075, 0.0
      %v3149 = vmax.f32 %v3144, 0.0
      %3151 = vrot.lane.b32.xlu0 %v3147, 112
      %v3152 = vpop.permute.xlu0 %3151
      %3154 = vrot.lane.b32.xlu0 %v3147, 96
      %v3155 = vpop.permute.xlu0 %3154
      %3157 = vrot.lane.b32.xlu0 %v3147, 80
      %v3158 = vpop.permute.xlu0 %3157
      %3160 = vrot.lane.b32.xlu0 %v3147, 64
      %v3161 = vpop.permute.xlu0 %3160
      %3163 = vrot.lane.b32.xlu0 %v3147, 48
      %v3164 = vpop.permute.xlu0 %3163
      %3166 = vrot.lane.b32.xlu0 %v3147, 32
      %v3167 = vpop.permute.xlu0 %3166
      %3169 = vrot.lane.b32.xlu0 %v3147, 16
      %v3170 = vpop.permute.xlu0 %3169
      %3173 = vrot.lane.b32.xlu0 %v3148, 112
      %v3174 = vpop.permute.xlu0 %3173
      %3176 = vrot.lane.b32.xlu0 %v3148, 96
      %v3177 = vpop.permute.xlu0 %3176
      %3179 = vrot.lane.b32.xlu0 %v3148, 80
      %v3180 = vpop.permute.xlu0 %3179
      %3182 = vrot.lane.b32.xlu0 %v3148, 64
      %v3183 = vpop.permute.xlu0 %3182
      %3185 = vrot.lane.b32.xlu0 %v3148, 48
      %v3186 = vpop.permute.xlu0 %3185
      %3188 = vrot.lane.b32.xlu0 %v3148, 32
      %v3189 = vpop.permute.xlu0 %3188
      %3191 = vrot.lane.b32.xlu0 %v3148, 16
      %v3192 = vpop.permute.xlu0 %3191
      %3195 = vrot.lane.b32.xlu0 %v3149, 112
      %v3196 = vpop.permute.xlu0 %3195
      %v3198 = vcombine.low %v3147, %v3155
      %v3199 = vcombine.high %v3147, %v3155
      %v3201 = vunpack.c.l.s4 1983009808
      %v3202 = vunpack.c.0.s8 %v3201
      %v3203 = vlaneseq
      %v3204 = vshrl.u32 %v3203, 7
      %v3205 = vsub.s32 %v3202, %v3204
      %v3206 = vrot.slane %v3198, %v3205
      %v3208 = vunpack.c.l.s4 1983009808
      %v3209 = vunpack.c.0.s8 %v3208
      %v3210 = vlaneseq
      %v3211 = vshrl.u32 %v3210, 7
      %v3212 = vsub.s32 %v3209, %v3211
      %v3213 = vrot.slane %v3199, %v3212
      %v3214 = vcombine.low %v3152, %v3158
      %v3215 = vcombine.high %v3152, %v3158
      %v3217 = vunpack.c.l.s4 1983009808
      %v3218 = vunpack.c.0.s8 %v3217
      %v3219 = vlaneseq
      %v3220 = vshrl.u32 %v3219, 7
      %v3221 = vsub.s32 %v3218, %v3220
      %v3222 = vrot.slane %v3214, %v3221
      %v3224 = vunpack.c.l.s4 1983009808
      %v3225 = vunpack.c.0.s8 %v3224
      %v3226 = vlaneseq
      %v3227 = vshrl.u32 %v3226, 7
      %v3228 = vsub.s32 %v3225, %v3227
      %v3229 = vrot.slane %v3215, %v3228
      %v3230 = vcombine.low %v3161, %v3167
      %v3231 = vcombine.high %v3161, %v3167
      %v3233 = vunpack.c.l.s4 1983009808
      %v3234 = vunpack.c.0.s8 %v3233
      %v3235 = vlaneseq
      %v3236 = vshrl.u32 %v3235, 7
      %v3237 = vsub.s32 %v3234, %v3236
      %v3238 = vrot.slane %v3230, %v3237
      %v3240 = vunpack.c.l.s4 1983009808
      %v3241 = vunpack.c.0.s8 %v3240
      %v3242 = vlaneseq
      %v3243 = vshrl.u32 %v3242, 7
      %v3244 = vsub.s32 %v3241, %v3243
      %v3245 = vrot.slane %v3231, %v3244
      %v3246 = vcombine.low %v3164, %v3170
      %v3247 = vcombine.high %v3164, %v3170
      %v3249 = vunpack.c.l.s4 1983009808
      %v3250 = vunpack.c.0.s8 %v3249
      %v3251 = vlaneseq
      %v3252 = vshrl.u32 %v3251, 7
      %v3253 = vsub.s32 %v3250, %v3252
      %v3254 = vrot.slane %v3246, %v3253
      %v3256 = vunpack.c.l.s4 1983009808
      %v3257 = vunpack.c.0.s8 %v3256
      %v3258 = vlaneseq
      %v3259 = vshrl.u32 %v3258, 7
      %v3260 = vsub.s32 %v3257, %v3259
      %v3261 = vrot.slane %v3247, %v3260
      %v3262 = vcombine.low %v3206, %v3222
      %v3263 = vcombine.high %v3206, %v3222
      %v3265 = vunpack.c.l.s4 1934713408
      %v3266 = vunpack.c.0.s8 %v3265
      %v3267 = vlaneseq
      %v3268 = vshrl.u32 %v3267, 7
      %v3269 = vsub.s32 %v3266, %v3268
      %v3270 = vrot.slane %v3262, %v3269
      %v3272 = vunpack.c.l.s4 1934713408
      %v3273 = vunpack.c.0.s8 %v3272
      %v3274 = vlaneseq
      %v3275 = vshrl.u32 %v3274, 7
      %v3276 = vsub.s32 %v3273, %v3275
      %v3277 = vrot.slane %v3263, %v3276
      %v3278 = vcombine.low %v3213, %v3229
      %v3279 = vcombine.high %v3213, %v3229
      %v3281 = vunpack.c.l.s4 1934713408
      %v3282 = vunpack.c.0.s8 %v3281
      %v3283 = vlaneseq
      %v3284 = vshrl.u32 %v3283, 7
      %v3285 = vsub.s32 %v3282, %v3284
      %v3286 = vrot.slane %v3278, %v3285
      %v3288 = vunpack.c.l.s4 1934713408
      %v3289 = vunpack.c.0.s8 %v3288
      %v3290 = vlaneseq
      %v3291 = vshrl.u32 %v3290, 7
      %v3292 = vsub.s32 %v3289, %v3291
      %v3293 = vrot.slane %v3279, %v3292
      %v3294 = vcombine.low %v3238, %v3254
      %v3295 = vcombine.high %v3238, %v3254
      %v3297 = vunpack.c.l.s4 1934713408
      %v3298 = vunpack.c.0.s8 %v3297
      %v3299 = vlaneseq
      %v3300 = vshrl.u32 %v3299, 7
      %v3301 = vsub.s32 %v3298, %v3300
      %v3302 = vrot.slane %v3294, %v3301
      %v3304 = vunpack.c.l.s4 1934713408
      %v3305 = vunpack.c.0.s8 %v3304
      %v3306 = vlaneseq
      %v3307 = vshrl.u32 %v3306, 7
      %v3308 = vsub.s32 %v3305, %v3307
      %v3309 = vrot.slane %v3295, %v3308
      %v3310 = vcombine.low %v3245, %v3261
      %v3311 = vcombine.high %v3245, %v3261
      %v3313 = vunpack.c.l.s4 1934713408
      %v3314 = vunpack.c.0.s8 %v3313
      %v3315 = vlaneseq
      %v3316 = vshrl.u32 %v3315, 7
      %v3317 = vsub.s32 %v3314, %v3316
      %v3318 = vrot.slane %v3310, %v3317
      %v3320 = vunpack.c.l.s4 1934713408
      %v3321 = vunpack.c.0.s8 %v3320
      %v3322 = vlaneseq
      %v3323 = vshrl.u32 %v3322, 7
      %v3324 = vsub.s32 %v3321, %v3323
      %v3325 = vrot.slane %v3311, %v3324
      %v3326 = vcombine.low %v3270, %v3302
      %v3327 = vcombine.high %v3270, %v3302
      %v3328 = vcombine.low %v3277, %v3309
      %v3329 = vcombine.high %v3277, %v3309
      %v3330 = vcombine.low %v3286, %v3318
      %v3331 = vcombine.high %v3286, %v3318
      %v3332 = vcombine.low %v3293, %v3325
      %v3333 = vcombine.high %v3293, %v3325
      %v3334 = vcombine.low %v3148, %v3177
      %v3335 = vcombine.high %v3148, %v3177
      %v3337 = vunpack.c.l.s4 1983009808
      %v3338 = vunpack.c.0.s8 %v3337
      %v3339 = vlaneseq
      %v3340 = vshrl.u32 %v3339, 7
      %v3341 = vsub.s32 %v3338, %v3340
      %v3342 = vrot.slane %v3334, %v3341
      %v3344 = vunpack.c.l.s4 1983009808
      %v3345 = vunpack.c.0.s8 %v3344
      %v3346 = vlaneseq
      %v3347 = vshrl.u32 %v3346, 7
      %v3348 = vsub.s32 %v3345, %v3347
      %v3349 = vrot.slane %v3335, %v3348
      %v3350 = vcombine.low %v3174, %v3180
      %v3351 = vcombine.high %v3174, %v3180
      %v3353 = vunpack.c.l.s4 1983009808
      %v3354 = vunpack.c.0.s8 %v3353
      %v3355 = vlaneseq
      %v3356 = vshrl.u32 %v3355, 7
      %v3357 = vsub.s32 %v3354, %v3356
      %v3358 = vrot.slane %v3350, %v3357
      %v3360 = vunpack.c.l.s4 1983009808
      %v3361 = vunpack.c.0.s8 %v3360
      %v3362 = vlaneseq
      %v3363 = vshrl.u32 %v3362, 7
      %v3364 = vsub.s32 %v3361, %v3363
      %v3365 = vrot.slane %v3351, %v3364
      %v3366 = vcombine.low %v3183, %v3189
      %v3367 = vcombine.high %v3183, %v3189
      %v3369 = vunpack.c.l.s4 1983009808
      %v3370 = vunpack.c.0.s8 %v3369
      %v3371 = vlaneseq
      %v3372 = vshrl.u32 %v3371, 7
      %v3373 = vsub.s32 %v3370, %v3372
      %v3374 = vrot.slane %v3366, %v3373
      %v3376 = vunpack.c.l.s4 1983009808
      %v3377 = vunpack.c.0.s8 %v3376
      %v3378 = vlaneseq
      %v3379 = vshrl.u32 %v3378, 7
      %v3380 = vsub.s32 %v3377, %v3379
      %v3381 = vrot.slane %v3367, %v3380
      %v3382 = vcombine.low %v3186, %v3192
      %v3383 = vcombine.high %v3186, %v3192
      %v3385 = vunpack.c.l.s4 1983009808
      %v3386 = vunpack.c.0.s8 %v3385
      %v3387 = vlaneseq
      %v3388 = vshrl.u32 %v3387, 7
      %v3389 = vsub.s32 %v3386, %v3388
      %v3390 = vrot.slane %v3382, %v3389
      %v3392 = vunpack.c.l.s4 1983009808
      %v3393 = vunpack.c.0.s8 %v3392
      %v3394 = vlaneseq
      %v3395 = vshrl.u32 %v3394, 7
      %v3396 = vsub.s32 %v3393, %v3395
      %v3397 = vrot.slane %v3383, %v3396
      %v3398 = vcombine.low %v3342, %v3358
      %v3399 = vcombine.high %v3342, %v3358
      %v3401 = vunpack.c.l.s4 1934713408
      %v3402 = vunpack.c.0.s8 %v3401
      %v3403 = vlaneseq
      %v3404 = vshrl.u32 %v3403, 7
      %v3405 = vsub.s32 %v3402, %v3404
      %v3406 = vrot.slane %v3398, %v3405
      %v3408 = vunpack.c.l.s4 1934713408
      %v3409 = vunpack.c.0.s8 %v3408
      %v3410 = vlaneseq
      %v3411 = vshrl.u32 %v3410, 7
      %v3412 = vsub.s32 %v3409, %v3411
      %v3413 = vrot.slane %v3399, %v3412
      %v3414 = vcombine.low %v3349, %v3365
      %v3415 = vcombine.high %v3349, %v3365
      %v3417 = vunpack.c.l.s4 1934713408
      %v3418 = vunpack.c.0.s8 %v3417
      %v3419 = vlaneseq
      %v3420 = vshrl.u32 %v3419, 7
      %v3421 = vsub.s32 %v3418, %v3420
      %v3422 = vrot.slane %v3414, %v3421
      %v3424 = vunpack.c.l.s4 1934713408
      %v3425 = vunpack.c.0.s8 %v3424
      %v3426 = vlaneseq
      %v3427 = vshrl.u32 %v3426, 7
      %v3428 = vsub.s32 %v3425, %v3427
      %v3429 = vrot.slane %v3415, %v3428
      %v3430 = vcombine.low %v3374, %v3390
      %v3431 = vcombine.high %v3374, %v3390
      %v3433 = vunpack.c.l.s4 1934713408
      %v3434 = vunpack.c.0.s8 %v3433
      %v3435 = vlaneseq
      %v3436 = vshrl.u32 %v3435, 7
      %v3437 = vsub.s32 %v3434, %v3436
      %v3438 = vrot.slane %v3430, %v3437
      %v3440 = vunpack.c.l.s4 1934713408
      %v3441 = vunpack.c.0.s8 %v3440
      %v3442 = vlaneseq
      %v3443 = vshrl.u32 %v3442, 7
      %v3444 = vsub.s32 %v3441, %v3443
      %v3445 = vrot.slane %v3431, %v3444
      %v3446 = vcombine.low %v3381, %v3397
      %v3447 = vcombine.high %v3381, %v3397
      %v3449 = vunpack.c.l.s4 1934713408
      %v3450 = vunpack.c.0.s8 %v3449
      %v3451 = vlaneseq
      %v3452 = vshrl.u32 %v3451, 7
      %v3453 = vsub.s32 %v3450, %v3452
      %v3454 = vrot.slane %v3446, %v3453
      %v3456 = vunpack.c.l.s4 1934713408
      %v3457 = vunpack.c.0.s8 %v3456
      %v3458 = vlaneseq
      %v3459 = vshrl.u32 %v3458, 7
      %v3460 = vsub.s32 %v3457, %v3459
      %v3461 = vrot.slane %v3447, %v3460
      %v3462 = vcombine.low %v3406, %v3438
      %v3463 = vcombine.high %v3406, %v3438
      %v3464 = vcombine.low %v3413, %v3445
      %v3465 = vcombine.high %v3413, %v3445
      %v3466 = vcombine.low %v3422, %v3454
      %v3467 = vcombine.high %v3422, %v3454
      %v3468 = vcombine.low %v3429, %v3461
      %v3469 = vcombine.high %v3429, %v3461
      %v3470 = vcombine.high %v3149, 0.0
      %v3472 = vunpack.c.l.s4 1983009808
      %v3473 = vunpack.c.0.s8 %v3472
      %v3474 = vlaneseq
      %v3475 = vshrl.u32 %v3474, 7
      %v3476 = vsub.s32 %v3473, %v3475
      %v3477 = vrot.slane %v3149, %v3476
      %v3479 = vunpack.c.l.s4 1983009808
      %v3480 = vunpack.c.0.s8 %v3479
      %v3481 = vlaneseq
      %v3482 = vshrl.u32 %v3481, 7
      %v3483 = vsub.s32 %v3480, %v3482
      %v3484 = vrot.slane %v3470, %v3483
      %v3485 = vcombine.high %v3196, 0.0
      %v3487 = vunpack.c.l.s4 1983009808
      %v3488 = vunpack.c.0.s8 %v3487
      %v3489 = vlaneseq
      %v3490 = vshrl.u32 %v3489, 7
      %v3491 = vsub.s32 %v3488, %v3490
      %v3492 = vrot.slane %v3196, %v3491
      %v3494 = vunpack.c.l.s4 1983009808
      %v3495 = vunpack.c.0.s8 %v3494
      %v3496 = vlaneseq
      %v3497 = vshrl.u32 %v3496, 7
      %v3498 = vsub.s32 %v3495, %v3497
      %v3499 = vrot.slane %v3485, %v3498
      %v3500 = vcombine.low %v3477, %v3492
      %v3501 = vcombine.high %v3477, %v3492
      %v3503 = vunpack.c.l.s4 1934713408
      %v3504 = vunpack.c.0.s8 %v3503
      %v3505 = vlaneseq
      %v3506 = vshrl.u32 %v3505, 7
      %v3507 = vsub.s32 %v3504, %v3506
      %v3508 = vrot.slane %v3500, %v3507
      %v3510 = vunpack.c.l.s4 1934713408
      %v3511 = vunpack.c.0.s8 %v3510
      %v3512 = vlaneseq
      %v3513 = vshrl.u32 %v3512, 7
      %v3514 = vsub.s32 %v3511, %v3513
      %v3515 = vrot.slane %v3501, %v3514
      %v3516 = vcombine.low %v3484, %v3499
      %v3517 = vcombine.high %v3484, %v3499
      %v3519 = vunpack.c.l.s4 1934713408
      %v3520 = vunpack.c.0.s8 %v3519
      %v3521 = vlaneseq
      %v3522 = vshrl.u32 %v3521, 7
      %v3523 = vsub.s32 %v3520, %v3522
      %v3524 = vrot.slane %v3516, %v3523
      %v3526 = vunpack.c.l.s4 1934713408
      %v3527 = vunpack.c.0.s8 %v3526
      %v3528 = vlaneseq
      %v3529 = vshrl.u32 %v3528, 7
      %v3530 = vsub.s32 %v3527, %v3529
      %v3531 = vrot.slane %v3517, %v3530
      %v3532 = vcombine.high %v3508, 0.0
      %v3533 = vcombine.high %v3515, 0.0
      %v3534 = vcombine.high %v3524, 0.0
      %v3535 = vcombine.high %v3531, 0.0
      %s3536 = ssub.s32 %s498, 1
      %v3537 = vlaneseq
      %v3538 = vshrl.u32 %v3537, 7
      %v3539 = vadd.s32 %v3538, 8
      %v3540 = vadd.s32 %v3538, 16
      %v3541 = vstv %s3536
      %v3542 = vadd.s32 %v3541, %v3538
      %v3543 = vadd.s32 %v3541, %v3539
      %v3544 = vadd.s32 %v3541, %v3540
      %vm3545 = vcmp.ge.s32.totalorder %v3542, 0
      %vm3546 = vcmp.ge.s32.totalorder %v3543, 0
      %vm3547 = vcmp.ge.s32.totalorder %v3544, 0
      %vm3548 = vcmp.lt.s32.totalorder %v3542, 16
      %vm3549 = vcmp.lt.s32.totalorder %v3543, 16
      %vm3550 = vcmp.lt.s32.totalorder %v3544, 16
      %vm3551 = vmand %vm3545, %vm3548
      %vm3552 = vmand %vm3546, %vm3549
      %vm3553 = vmand %vm3547, %vm3550
      %v3554 = vsel %vm3551, 1, 0
      %v3555 = vsel %vm3552, 1, 0
      %v3556 = vsel %vm3553, 1, 0
      %vm3557 = vcmp.eq.s32.totalorder %v3554, 1
      %vm3558 = vcmp.eq.s32.totalorder %v3555, 1
      %vm3559 = vcmp.eq.s32.totalorder %v3556, 1
      %v3560 = vsel %vm3557, %v3326, 0.0
      %v3561 = vsel %vm3558, %v3462, 0.0
      %v3562 = vsel %vm3559, %v3508, 0.0
      %v3563 = vsel %vm3557, %v3327, 0.0
      %v3564 = vsel %vm3558, %v3463, 0.0
      %v3565 = vsel %vm3559, %v3532, 0.0
      %v3566 = vsel %vm3557, %v3328, 0.0
      %v3567 = vsel %vm3558, %v3464, 0.0
      %v3568 = vsel %vm3559, %v3515, 0.0
      %v3569 = vsel %vm3557, %v3329, 0.0
      %v3570 = vsel %vm3558, %v3465, 0.0
      %v3571 = vsel %vm3559, %v3533, 0.0
      %v3572 = vsel %vm3557, %v3330, 0.0
      %v3573 = vsel %vm3558, %v3466, 0.0
      %v3574 = vsel %vm3559, %v3524, 0.0
      %v3575 = vsel %vm3557, %v3331, 0.0
      %v3576 = vsel %vm3558, %v3467, 0.0
      %v3577 = vsel %vm3559, %v3534, 0.0
      %v3578 = vsel %vm3557, %v3332, 0.0
      %v3579 = vsel %vm3558, %v3468, 0.0
      %v3580 = vsel %vm3559, %v3531, 0.0
      %v3581 = vsel %vm3557, %v3333, 0.0
      %v3582 = vsel %vm3558, %v3469, 0.0
      %v3583 = vsel %vm3559, %v3535, 0.0
      %3608 = vrot.lane.b32.xlu0 %v3560, 1
      %v3609 = vpop.permute.xlu0 %3608
      %3610 = vrot.lane.b32.xlu0 %v3561, 1
      %v3611 = vpop.permute.xlu0 %3610
      %3612 = vrot.lane.b32.xlu0 %v3562, 1
      %v3613 = vpop.permute.xlu0 %3612
      %3614 = vrot.lane.b32.xlu0 %v3563, 1
      %v3615 = vpop.permute.xlu0 %3614
      %3616 = vrot.lane.b32.xlu0 %v3564, 1
      %v3617 = vpop.permute.xlu0 %3616
      %3618 = vrot.lane.b32.xlu0 %v3565, 1
      %v3619 = vpop.permute.xlu0 %3618
      %3620 = vrot.lane.b32.xlu0 %v3566, 1
      %v3621 = vpop.permute.xlu0 %3620
      %3622 = vrot.lane.b32.xlu0 %v3567, 1
      %v3623 = vpop.permute.xlu0 %3622
      %3624 = vrot.lane.b32.xlu0 %v3568, 1
      %v3625 = vpop.permute.xlu0 %3624
      %3626 = vrot.lane.b32.xlu0 %v3569, 1
      %v3627 = vpop.permute.xlu0 %3626
      %3628 = vrot.lane.b32.xlu0 %v3570, 1
      %v3629 = vpop.permute.xlu0 %3628
      %3630 = vrot.lane.b32.xlu0 %v3571, 1
      %v3631 = vpop.permute.xlu0 %3630
      %3632 = vrot.lane.b32.xlu0 %v3572, 1
      %v3633 = vpop.permute.xlu0 %3632
      %3634 = vrot.lane.b32.xlu0 %v3573, 1
      %v3635 = vpop.permute.xlu0 %3634
      %3636 = vrot.lane.b32.xlu0 %v3574, 1
      %v3637 = vpop.permute.xlu0 %3636
      %3638 = vrot.lane.b32.xlu0 %v3575, 1
      %v3639 = vpop.permute.xlu0 %3638
      %3640 = vrot.lane.b32.xlu0 %v3576, 1
      %v3641 = vpop.permute.xlu0 %3640
      %3642 = vrot.lane.b32.xlu0 %v3577, 1
      %v3643 = vpop.permute.xlu0 %3642
      %3644 = vrot.lane.b32.xlu0 %v3578, 1
      %v3645 = vpop.permute.xlu0 %3644
      %3646 = vrot.lane.b32.xlu0 %v3579, 1
      %v3647 = vpop.permute.xlu0 %3646
      %3648 = vrot.lane.b32.xlu0 %v3580, 1
      %v3649 = vpop.permute.xlu0 %3648
      %3650 = vrot.lane.b32.xlu0 %v3581, 1
      %v3651 = vpop.permute.xlu0 %3650
      %3652 = vrot.lane.b32.xlu0 %v3582, 1
      %v3653 = vpop.permute.xlu0 %3652
      %3654 = vrot.lane.b32.xlu0 %v3583, 1
      %v3655 = vpop.permute.xlu0 %3654
      %vm3680 = vcmask 7168
      %v3681 = vsel %vm3680, 0.0, %v3609
      %v3682 = vsel %vm3680, 0.0, %v3611
      %v3683 = vsel %vm3680, 0.0, %v3613
      %v3684 = vsel %vm3680, 0.0, %v3615
      %v3685 = vsel %vm3680, 0.0, %v3617
      %v3686 = vsel %vm3680, 0.0, %v3619
      %v3687 = vsel %vm3680, 0.0, %v3621
      %v3688 = vsel %vm3680, 0.0, %v3623
      %v3689 = vsel %vm3680, 0.0, %v3625
      %v3690 = vsel %vm3680, 0.0, %v3627
      %v3691 = vsel %vm3680, 0.0, %v3629
      %v3692 = vsel %vm3680, 0.0, %v3631
      %v3693 = vsel %vm3680, 0.0, %v3633
      %v3694 = vsel %vm3680, 0.0, %v3635
      %v3695 = vsel %vm3680, 0.0, %v3637
      %v3696 = vsel %vm3680, 0.0, %v3639
      %v3697 = vsel %vm3680, 0.0, %v3641
      %v3698 = vsel %vm3680, 0.0, %v3643
      %v3699 = vsel %vm3680, 0.0, %v3645
      %v3700 = vsel %vm3680, 0.0, %v3647
      %v3701 = vsel %vm3680, 0.0, %v3649
      %v3702 = vsel %vm3680, 0.0, %v3651
      %v3703 = vsel %vm3680, 0.0, %v3653
      %v3704 = vsel %vm3680, 0.0, %v3655
      %vm3705 = vcmask 138240
      %v3706 = vsel %vm3705, %v3681, 0.0
      %v3707 = vsel %vm3705, %v3682, 0.0
      %v3708 = vsel %vm3705, %v3683, 0.0
      %v3709 = vsel %vm3705, %v3684, 0.0
      %v3710 = vsel %vm3705, %v3685, 0.0
      %v3711 = vsel %vm3705, %v3686, 0.0
      %v3712 = vsel %vm3705, %v3687, 0.0
      %v3713 = vsel %vm3705, %v3688, 0.0
      %v3714 = vsel %vm3705, %v3689, 0.0
      %v3715 = vsel %vm3705, %v3690, 0.0
      %v3716 = vsel %vm3705, %v3691, 0.0
      %v3717 = vsel %vm3705, %v3692, 0.0
      %v3718 = vsel %vm3705, %v3693, 0.0
      %v3719 = vsel %vm3705, %v3694, 0.0
      %v3720 = vsel %vm3705, %v3695, 0.0
      %v3721 = vsel %vm3705, %v3696, 0.0
      %v3722 = vsel %vm3705, %v3697, 0.0
      %v3723 = vsel %vm3705, %v3698, 0.0
      %v3724 = vsel %vm3705, %v3699, 0.0
      %v3725 = vsel %vm3705, %v3700, 0.0
      %v3726 = vsel %vm3705, %v3701, 0.0
      %v3727 = vsel %vm3705, %v3702, 0.0
      %v3728 = vsel %vm3705, %v3703, 0.0
      %v3729 = vsel %vm3705, %v3704, 0.0
      %v3730 = vcombine.low %v3706, %v3712
      %v3731 = vcombine.high %v3706, %v3712
      %v3733 = vunpack.c.l.s4 1983009808
      %v3734 = vunpack.c.0.s8 %v3733
      %v3735 = vlaneseq
      %v3736 = vshrl.u32 %v3735, 7
      %v3737 = vsub.s32 %v3734, %v3736
      %v3738 = vrot.slane %v3730, %v3737
      %v3740 = vunpack.c.l.s4 1983009808
      %v3741 = vunpack.c.0.s8 %v3740
      %v3742 = vlaneseq
      %v3743 = vshrl.u32 %v3742, 7
      %v3744 = vsub.s32 %v3741, %v3743
      %v3745 = vrot.slane %v3731, %v3744
      %v3746 = vcombine.low %v3709, %v3715
      %v3747 = vcombine.high %v3709, %v3715
      %v3749 = vunpack.c.l.s4 1983009808
      %v3750 = vunpack.c.0.s8 %v3749
      %v3751 = vlaneseq
      %v3752 = vshrl.u32 %v3751, 7
      %v3753 = vsub.s32 %v3750, %v3752
      %v3754 = vrot.slane %v3746, %v3753
      %v3756 = vunpack.c.l.s4 1983009808
      %v3757 = vunpack.c.0.s8 %v3756
      %v3758 = vlaneseq
      %v3759 = vshrl.u32 %v3758, 7
      %v3760 = vsub.s32 %v3757, %v3759
      %v3761 = vrot.slane %v3747, %v3760
      %v3762 = vcombine.low %v3718, %v3724
      %v3763 = vcombine.high %v3718, %v3724
      %v3765 = vunpack.c.l.s4 1983009808
      %v3766 = vunpack.c.0.s8 %v3765
      %v3767 = vlaneseq
      %v3768 = vshrl.u32 %v3767, 7
      %v3769 = vsub.s32 %v3766, %v3768
      %v3770 = vrot.slane %v3762, %v3769
      %v3772 = vunpack.c.l.s4 1983009808
      %v3773 = vunpack.c.0.s8 %v3772
      %v3774 = vlaneseq
      %v3775 = vshrl.u32 %v3774, 7
      %v3776 = vsub.s32 %v3773, %v3775
      %v3777 = vrot.slane %v3763, %v3776
      %v3778 = vcombine.low %v3721, %v3727
      %v3779 = vcombine.high %v3721, %v3727
      %v3781 = vunpack.c.l.s4 1983009808
      %v3782 = vunpack.c.0.s8 %v3781
      %v3783 = vlaneseq
      %v3784 = vshrl.u32 %v3783, 7
      %v3785 = vsub.s32 %v3782, %v3784
      %v3786 = vrot.slane %v3778, %v3785
      %v3788 = vunpack.c.l.s4 1983009808
      %v3789 = vunpack.c.0.s8 %v3788
      %v3790 = vlaneseq
      %v3791 = vshrl.u32 %v3790, 7
      %v3792 = vsub.s32 %v3789, %v3791
      %v3793 = vrot.slane %v3779, %v3792
      %v3794 = vcombine.low %v3738, %v3754
      %v3795 = vcombine.high %v3738, %v3754
      %v3797 = vunpack.c.l.s4 1934713408
      %v3798 = vunpack.c.0.s8 %v3797
      %v3799 = vlaneseq
      %v3800 = vshrl.u32 %v3799, 7
      %v3801 = vsub.s32 %v3798, %v3800
      %v3802 = vrot.slane %v3794, %v3801
      %v3804 = vunpack.c.l.s4 1934713408
      %v3805 = vunpack.c.0.s8 %v3804
      %v3806 = vlaneseq
      %v3807 = vshrl.u32 %v3806, 7
      %v3808 = vsub.s32 %v3805, %v3807
      %v3809 = vrot.slane %v3795, %v3808
      %v3810 = vcombine.low %v3745, %v3761
      %v3811 = vcombine.high %v3745, %v3761
      %v3813 = vunpack.c.l.s4 1934713408
      %v3814 = vunpack.c.0.s8 %v3813
      %v3815 = vlaneseq
      %v3816 = vshrl.u32 %v3815, 7
      %v3817 = vsub.s32 %v3814, %v3816
      %v3818 = vrot.slane %v3810, %v3817
      %v3820 = vunpack.c.l.s4 1934713408
      %v3821 = vunpack.c.0.s8 %v3820
      %v3822 = vlaneseq
      %v3823 = vshrl.u32 %v3822, 7
      %v3824 = vsub.s32 %v3821, %v3823
      %v3825 = vrot.slane %v3811, %v3824
      %v3826 = vcombine.low %v3770, %v3786
      %v3827 = vcombine.high %v3770, %v3786
      %v3829 = vunpack.c.l.s4 1934713408
      %v3830 = vunpack.c.0.s8 %v3829
      %v3831 = vlaneseq
      %v3832 = vshrl.u32 %v3831, 7
      %v3833 = vsub.s32 %v3830, %v3832
      %v3834 = vrot.slane %v3826, %v3833
      %v3836 = vunpack.c.l.s4 1934713408
      %v3837 = vunpack.c.0.s8 %v3836
      %v3838 = vlaneseq
      %v3839 = vshrl.u32 %v3838, 7
      %v3840 = vsub.s32 %v3837, %v3839
      %v3841 = vrot.slane %v3827, %v3840
      %v3842 = vcombine.low %v3777, %v3793
      %v3843 = vcombine.high %v3777, %v3793
      %v3845 = vunpack.c.l.s4 1934713408
      %v3846 = vunpack.c.0.s8 %v3845
      %v3847 = vlaneseq
      %v3848 = vshrl.u32 %v3847, 7
      %v3849 = vsub.s32 %v3846, %v3848
      %v3850 = vrot.slane %v3842, %v3849
      %v3852 = vunpack.c.l.s4 1934713408
      %v3853 = vunpack.c.0.s8 %v3852
      %v3854 = vlaneseq
      %v3855 = vshrl.u32 %v3854, 7
      %v3856 = vsub.s32 %v3853, %v3855
      %v3857 = vrot.slane %v3843, %v3856
      %v3858 = vcombine.low %v3802, %v3834
      %v3859 = vcombine.high %v3802, %v3834
      %v3860 = vcombine.low %v3809, %v3841
      %v3861 = vcombine.high %v3809, %v3841
      %v3862 = vcombine.low %v3818, %v3850
      %v3863 = vcombine.high %v3818, %v3850
      %v3864 = vcombine.low %v3825, %v3857
      %v3865 = vcombine.high %v3825, %v3857
      %v3866 = vcombine.low %v3707, %v3713
      %v3867 = vcombine.high %v3707, %v3713
      %v3869 = vunpack.c.l.s4 1983009808
      %v3870 = vunpack.c.0.s8 %v3869
      %v3871 = vlaneseq
      %v3872 = vshrl.u32 %v3871, 7
      %v3873 = vsub.s32 %v3870, %v3872
      %v3874 = vrot.slane %v3866, %v3873
      %v3876 = vunpack.c.l.s4 1983009808
      %v3877 = vunpack.c.0.s8 %v3876
      %v3878 = vlaneseq
      %v3879 = vshrl.u32 %v3878, 7
      %v3880 = vsub.s32 %v3877, %v3879
      %v3881 = vrot.slane %v3867, %v3880
      %v3882 = vcombine.low %v3710, %v3716
      %v3883 = vcombine.high %v3710, %v3716
      %v3885 = vunpack.c.l.s4 1983009808
      %v3886 = vunpack.c.0.s8 %v3885
      %v3887 = vlaneseq
      %v3888 = vshrl.u32 %v3887, 7
      %v3889 = vsub.s32 %v3886, %v3888
      %v3890 = vrot.slane %v3882, %v3889
      %v3892 = vunpack.c.l.s4 1983009808
      %v3893 = vunpack.c.0.s8 %v3892
      %v3894 = vlaneseq
      %v3895 = vshrl.u32 %v3894, 7
      %v3896 = vsub.s32 %v3893, %v3895
      %v3897 = vrot.slane %v3883, %v3896
      %v3898 = vcombine.low %v3719, %v3725
      %v3899 = vcombine.high %v3719, %v3725
      %v3901 = vunpack.c.l.s4 1983009808
      %v3902 = vunpack.c.0.s8 %v3901
      %v3903 = vlaneseq
      %v3904 = vshrl.u32 %v3903, 7
      %v3905 = vsub.s32 %v3902, %v3904
      %v3906 = vrot.slane %v3898, %v3905
      %v3908 = vunpack.c.l.s4 1983009808
      %v3909 = vunpack.c.0.s8 %v3908
      %v3910 = vlaneseq
      %v3911 = vshrl.u32 %v3910, 7
      %v3912 = vsub.s32 %v3909, %v3911
      %v3913 = vrot.slane %v3899, %v3912
      %v3914 = vcombine.low %v3722, %v3728
      %v3915 = vcombine.high %v3722, %v3728
      %v3917 = vunpack.c.l.s4 1983009808
      %v3918 = vunpack.c.0.s8 %v3917
      %v3919 = vlaneseq
      %v3920 = vshrl.u32 %v3919, 7
      %v3921 = vsub.s32 %v3918, %v3920
      %v3922 = vrot.slane %v3914, %v3921
      %v3924 = vunpack.c.l.s4 1983009808
      %v3925 = vunpack.c.0.s8 %v3924
      %v3926 = vlaneseq
      %v3927 = vshrl.u32 %v3926, 7
      %v3928 = vsub.s32 %v3925, %v3927
      %v3929 = vrot.slane %v3915, %v3928
      %v3930 = vcombine.low %v3874, %v3890
      %v3931 = vcombine.high %v3874, %v3890
      %v3933 = vunpack.c.l.s4 1934713408
      %v3934 = vunpack.c.0.s8 %v3933
      %v3935 = vlaneseq
      %v3936 = vshrl.u32 %v3935, 7
      %v3937 = vsub.s32 %v3934, %v3936
      %v3938 = vrot.slane %v3930, %v3937
      %v3940 = vunpack.c.l.s4 1934713408
      %v3941 = vunpack.c.0.s8 %v3940
      %v3942 = vlaneseq
      %v3943 = vshrl.u32 %v3942, 7
      %v3944 = vsub.s32 %v3941, %v3943
      %v3945 = vrot.slane %v3931, %v3944
      %v3946 = vcombine.low %v3881, %v3897
      %v3947 = vcombine.high %v3881, %v3897
      %v3949 = vunpack.c.l.s4 1934713408
      %v3950 = vunpack.c.0.s8 %v3949
      %v3951 = vlaneseq
      %v3952 = vshrl.u32 %v3951, 7
      %v3953 = vsub.s32 %v3950, %v3952
      %v3954 = vrot.slane %v3946, %v3953
      %v3956 = vunpack.c.l.s4 1934713408
      %v3957 = vunpack.c.0.s8 %v3956
      %v3958 = vlaneseq
      %v3959 = vshrl.u32 %v3958, 7
      %v3960 = vsub.s32 %v3957, %v3959
      %v3961 = vrot.slane %v3947, %v3960
      %v3962 = vcombine.low %v3906, %v3922
      %v3963 = vcombine.high %v3906, %v3922
      %v3965 = vunpack.c.l.s4 1934713408
      %v3966 = vunpack.c.0.s8 %v3965
      %v3967 = vlaneseq
      %v3968 = vshrl.u32 %v3967, 7
      %v3969 = vsub.s32 %v3966, %v3968
      %v3970 = vrot.slane %v3962, %v3969
      %v3972 = vunpack.c.l.s4 1934713408
      %v3973 = vunpack.c.0.s8 %v3972
      %v3974 = vlaneseq
      %v3975 = vshrl.u32 %v3974, 7
      %v3976 = vsub.s32 %v3973, %v3975
      %v3977 = vrot.slane %v3963, %v3976
      %v3978 = vcombine.low %v3913, %v3929
      %v3979 = vcombine.high %v3913, %v3929
      %v3981 = vunpack.c.l.s4 1934713408
      %v3982 = vunpack.c.0.s8 %v3981
      %v3983 = vlaneseq
      %v3984 = vshrl.u32 %v3983, 7
      %v3985 = vsub.s32 %v3982, %v3984
      %v3986 = vrot.slane %v3978, %v3985
      %v3988 = vunpack.c.l.s4 1934713408
      %v3989 = vunpack.c.0.s8 %v3988
      %v3990 = vlaneseq
      %v3991 = vshrl.u32 %v3990, 7
      %v3992 = vsub.s32 %v3989, %v3991
      %v3993 = vrot.slane %v3979, %v3992
      %v3994 = vcombine.low %v3938, %v3970
      %v3995 = vcombine.high %v3938, %v3970
      %v3996 = vcombine.low %v3945, %v3977
      %v3997 = vcombine.high %v3945, %v3977
      %v3998 = vcombine.low %v3954, %v3986
      %v3999 = vcombine.high %v3954, %v3986
      %v4000 = vcombine.low %v3961, %v3993
      %v4001 = vcombine.high %v3961, %v3993
      %4003 = vrot.lane.b32.xlu0 %v3859, 16
      %v4004 = vpop.permute.xlu0 %4003
      %4007 = vrot.lane.b32.xlu0 %v3860, 32
      %v4008 = vpop.permute.xlu0 %4007
      %4011 = vrot.lane.b32.xlu0 %v3861, 48
      %v4012 = vpop.permute.xlu0 %4011
      %4015 = vrot.lane.b32.xlu0 %v3862, 64
      %v4016 = vpop.permute.xlu0 %4015
      %4019 = vrot.lane.b32.xlu0 %v3863, 80
      %v4020 = vpop.permute.xlu0 %4019
      %4023 = vrot.lane.b32.xlu0 %v3864, 96
      %v4024 = vpop.permute.xlu0 %4023
      %4027 = vrot.lane.b32.xlu0 %v3865, 112
      %v4028 = vpop.permute.xlu0 %4027
      %4031 = vrot.lane.b32.xlu0 %v3995, 16
      %v4032 = vpop.permute.xlu0 %4031
      %4035 = vrot.lane.b32.xlu0 %v3996, 32
      %v4036 = vpop.permute.xlu0 %4035
      %4039 = vrot.lane.b32.xlu0 %v3997, 48
      %v4040 = vpop.permute.xlu0 %4039
      %4043 = vrot.lane.b32.xlu0 %v3998, 64
      %v4044 = vpop.permute.xlu0 %4043
      %4047 = vrot.lane.b32.xlu0 %v3999, 80
      %v4048 = vpop.permute.xlu0 %4047
      %4051 = vrot.lane.b32.xlu0 %v4000, 96
      %v4052 = vpop.permute.xlu0 %4051
      %4055 = vrot.lane.b32.xlu0 %v4001, 112
      %v4056 = vpop.permute.xlu0 %4055
      %v4058 = vsel %vm733, %v3858, %v4004
      %v4059 = vsel %vm735, %v4058, %v4008
      %v4060 = vsel %vm737, %v4059, %v4012
      %v4061 = vsel %vm739, %v4060, %v4016
      %v4062 = vsel %vm741, %v4061, %v4020
      %v4063 = vsel %vm743, %v4062, %v4024
      %v4064 = vsel %vm745, %v4063, %v4028
      %v4065 = vsel %vm733, %v3994, %v4032
      %v4066 = vsel %vm735, %v4065, %v4036
      %v4067 = vsel %vm737, %v4066, %v4040
      %v4068 = vsel %vm739, %v4067, %v4044
      %v4069 = vsel %vm741, %v4068, %v4048
      %v4070 = vsel %vm743, %v4069, %v4052
      %v4071 = vsel %vm745, %v4070, %v4056
      %4088 = vrot.lane.b32.xlu0 %v3706, 127
      %v4089 = vpop.permute.xlu0 %4088
      %4090 = vrot.lane.b32.xlu0 %v3707, 127
      %v4091 = vpop.permute.xlu0 %4090
      %4092 = vrot.lane.b32.xlu0 %v3709, 127
      %v4093 = vpop.permute.xlu0 %4092
      %4094 = vrot.lane.b32.xlu0 %v3710, 127
      %v4095 = vpop.permute.xlu0 %4094
      %4096 = vrot.lane.b32.xlu0 %v3712, 127
      %v4097 = vpop.permute.xlu0 %4096
      %4098 = vrot.lane.b32.xlu0 %v3713, 127
      %v4099 = vpop.permute.xlu0 %4098
      %4100 = vrot.lane.b32.xlu0 %v3715, 127
      %v4101 = vpop.permute.xlu0 %4100
      %4102 = vrot.lane.b32.xlu0 %v3716, 127
      %v4103 = vpop.permute.xlu0 %4102
      %4104 = vrot.lane.b32.xlu0 %v3718, 127
      %v4105 = vpop.permute.xlu0 %4104
      %4106 = vrot.lane.b32.xlu0 %v3719, 127
      %v4107 = vpop.permute.xlu0 %4106
      %4108 = vrot.lane.b32.xlu0 %v3721, 127
      %v4109 = vpop.permute.xlu0 %4108
      %4110 = vrot.lane.b32.xlu0 %v3722, 127
      %v4111 = vpop.permute.xlu0 %4110
      %4112 = vrot.lane.b32.xlu0 %v3724, 127
      %v4113 = vpop.permute.xlu0 %4112
      %4114 = vrot.lane.b32.xlu0 %v3725, 127
      %v4115 = vpop.permute.xlu0 %4114
      %4116 = vrot.lane.b32.xlu0 %v3727, 127
      %v4117 = vpop.permute.xlu0 %4116
      %4118 = vrot.lane.b32.xlu0 %v3728, 127
      %v4119 = vpop.permute.xlu0 %4118
      %v4136 = vcombine.low %v4089, %v4097
      %v4137 = vcombine.high %v4089, %v4097
      %v4139 = vunpack.c.l.s4 1983009808
      %v4140 = vunpack.c.0.s8 %v4139
      %v4141 = vlaneseq
      %v4142 = vshrl.u32 %v4141, 7
      %v4143 = vsub.s32 %v4140, %v4142
      %v4144 = vrot.slane %v4136, %v4143
      %v4146 = vunpack.c.l.s4 1983009808
      %v4147 = vunpack.c.0.s8 %v4146
      %v4148 = vlaneseq
      %v4149 = vshrl.u32 %v4148, 7
      %v4150 = vsub.s32 %v4147, %v4149
      %v4151 = vrot.slane %v4137, %v4150
      %v4152 = vcombine.low %v4093, %v4101
      %v4153 = vcombine.high %v4093, %v4101
      %v4155 = vunpack.c.l.s4 1983009808
      %v4156 = vunpack.c.0.s8 %v4155
      %v4157 = vlaneseq
      %v4158 = vshrl.u32 %v4157, 7
      %v4159 = vsub.s32 %v4156, %v4158
      %v4160 = vrot.slane %v4152, %v4159
      %v4162 = vunpack.c.l.s4 1983009808
      %v4163 = vunpack.c.0.s8 %v4162
      %v4164 = vlaneseq
      %v4165 = vshrl.u32 %v4164, 7
      %v4166 = vsub.s32 %v4163, %v4165
      %v4167 = vrot.slane %v4153, %v4166
      %v4168 = vcombine.low %v4105, %v4113
      %v4169 = vcombine.high %v4105, %v4113
      %v4171 = vunpack.c.l.s4 1983009808
      %v4172 = vunpack.c.0.s8 %v4171
      %v4173 = vlaneseq
      %v4174 = vshrl.u32 %v4173, 7
      %v4175 = vsub.s32 %v4172, %v4174
      %v4176 = vrot.slane %v4168, %v4175
      %v4178 = vunpack.c.l.s4 1983009808
      %v4179 = vunpack.c.0.s8 %v4178
      %v4180 = vlaneseq
      %v4181 = vshrl.u32 %v4180, 7
      %v4182 = vsub.s32 %v4179, %v4181
      %v4183 = vrot.slane %v4169, %v4182
      %v4184 = vcombine.low %v4109, %v4117
      %v4185 = vcombine.high %v4109, %v4117
      %v4187 = vunpack.c.l.s4 1983009808
      %v4188 = vunpack.c.0.s8 %v4187
      %v4189 = vlaneseq
      %v4190 = vshrl.u32 %v4189, 7
      %v4191 = vsub.s32 %v4188, %v4190
      %v4192 = vrot.slane %v4184, %v4191
      %v4194 = vunpack.c.l.s4 1983009808
      %v4195 = vunpack.c.0.s8 %v4194
      %v4196 = vlaneseq
      %v4197 = vshrl.u32 %v4196, 7
      %v4198 = vsub.s32 %v4195, %v4197
      %v4199 = vrot.slane %v4185, %v4198
      %v4200 = vcombine.low %v4144, %v4160
      %v4201 = vcombine.high %v4144, %v4160
      %v4203 = vunpack.c.l.s4 1934713408
      %v4204 = vunpack.c.0.s8 %v4203
      %v4205 = vlaneseq
      %v4206 = vshrl.u32 %v4205, 7
      %v4207 = vsub.s32 %v4204, %v4206
      %v4208 = vrot.slane %v4200, %v4207
      %v4210 = vunpack.c.l.s4 1934713408
      %v4211 = vunpack.c.0.s8 %v4210
      %v4212 = vlaneseq
      %v4213 = vshrl.u32 %v4212, 7
      %v4214 = vsub.s32 %v4211, %v4213
      %v4215 = vrot.slane %v4201, %v4214
      %v4216 = vcombine.low %v4151, %v4167
      %v4217 = vcombine.high %v4151, %v4167
      %v4219 = vunpack.c.l.s4 1934713408
      %v4220 = vunpack.c.0.s8 %v4219
      %v4221 = vlaneseq
      %v4222 = vshrl.u32 %v4221, 7
      %v4223 = vsub.s32 %v4220, %v4222
      %v4224 = vrot.slane %v4216, %v4223
      %v4226 = vunpack.c.l.s4 1934713408
      %v4227 = vunpack.c.0.s8 %v4226
      %v4228 = vlaneseq
      %v4229 = vshrl.u32 %v4228, 7
      %v4230 = vsub.s32 %v4227, %v4229
      %v4231 = vrot.slane %v4217, %v4230
      %v4232 = vcombine.low %v4176, %v4192
      %v4233 = vcombine.high %v4176, %v4192
      %v4235 = vunpack.c.l.s4 1934713408
      %v4236 = vunpack.c.0.s8 %v4235
      %v4237 = vlaneseq
      %v4238 = vshrl.u32 %v4237, 7
      %v4239 = vsub.s32 %v4236, %v4238
      %v4240 = vrot.slane %v4232, %v4239
      %v4242 = vunpack.c.l.s4 1934713408
      %v4243 = vunpack.c.0.s8 %v4242
      %v4244 = vlaneseq
      %v4245 = vshrl.u32 %v4244, 7
      %v4246 = vsub.s32 %v4243, %v4245
      %v4247 = vrot.slane %v4233, %v4246
      %v4248 = vcombine.low %v4183, %v4199
      %v4249 = vcombine.high %v4183, %v4199
      %v4251 = vunpack.c.l.s4 1934713408
      %v4252 = vunpack.c.0.s8 %v4251
      %v4253 = vlaneseq
      %v4254 = vshrl.u32 %v4253, 7
      %v4255 = vsub.s32 %v4252, %v4254
      %v4256 = vrot.slane %v4248, %v4255
      %v4258 = vunpack.c.l.s4 1934713408
      %v4259 = vunpack.c.0.s8 %v4258
      %v4260 = vlaneseq
      %v4261 = vshrl.u32 %v4260, 7
      %v4262 = vsub.s32 %v4259, %v4261
      %v4263 = vrot.slane %v4249, %v4262
      %v4264 = vcombine.low %v4208, %v4240
      %v4265 = vcombine.high %v4208, %v4240
      %v4266 = vcombine.low %v4215, %v4247
      %v4267 = vcombine.high %v4215, %v4247
      %v4268 = vcombine.low %v4224, %v4256
      %v4269 = vcombine.high %v4224, %v4256
      %v4270 = vcombine.low %v4231, %v4263
      %v4271 = vcombine.high %v4231, %v4263
      %v4272 = vcombine.low %v4091, %v4099
      %v4273 = vcombine.high %v4091, %v4099
      %v4275 = vunpack.c.l.s4 1983009808
      %v4276 = vunpack.c.0.s8 %v4275
      %v4277 = vlaneseq
      %v4278 = vshrl.u32 %v4277, 7
      %v4279 = vsub.s32 %v4276, %v4278
      %v4280 = vrot.slane %v4272, %v4279
      %v4282 = vunpack.c.l.s4 1983009808
      %v4283 = vunpack.c.0.s8 %v4282
      %v4284 = vlaneseq
      %v4285 = vshrl.u32 %v4284, 7
      %v4286 = vsub.s32 %v4283, %v4285
      %v4287 = vrot.slane %v4273, %v4286
      %v4288 = vcombine.low %v4095, %v4103
      %v4289 = vcombine.high %v4095, %v4103
      %v4291 = vunpack.c.l.s4 1983009808
      %v4292 = vunpack.c.0.s8 %v4291
      %v4293 = vlaneseq
      %v4294 = vshrl.u32 %v4293, 7
      %v4295 = vsub.s32 %v4292, %v4294
      %v4296 = vrot.slane %v4288, %v4295
      %v4298 = vunpack.c.l.s4 1983009808
      %v4299 = vunpack.c.0.s8 %v4298
      %v4300 = vlaneseq
      %v4301 = vshrl.u32 %v4300, 7
      %v4302 = vsub.s32 %v4299, %v4301
      %v4303 = vrot.slane %v4289, %v4302
      %v4304 = vcombine.low %v4107, %v4115
      %v4305 = vcombine.high %v4107, %v4115
      %v4307 = vunpack.c.l.s4 1983009808
      %v4308 = vunpack.c.0.s8 %v4307
      %v4309 = vlaneseq
      %v4310 = vshrl.u32 %v4309, 7
      %v4311 = vsub.s32 %v4308, %v4310
      %v4312 = vrot.slane %v4304, %v4311
      %v4314 = vunpack.c.l.s4 1983009808
      %v4315 = vunpack.c.0.s8 %v4314
      %v4316 = vlaneseq
      %v4317 = vshrl.u32 %v4316, 7
      %v4318 = vsub.s32 %v4315, %v4317
      %v4319 = vrot.slane %v4305, %v4318
      %v4320 = vcombine.low %v4111, %v4119
      %v4321 = vcombine.high %v4111, %v4119
      %v4323 = vunpack.c.l.s4 1983009808
      %v4324 = vunpack.c.0.s8 %v4323
      %v4325 = vlaneseq
      %v4326 = vshrl.u32 %v4325, 7
      %v4327 = vsub.s32 %v4324, %v4326
      %v4328 = vrot.slane %v4320, %v4327
      %v4330 = vunpack.c.l.s4 1983009808
      %v4331 = vunpack.c.0.s8 %v4330
      %v4332 = vlaneseq
      %v4333 = vshrl.u32 %v4332, 7
      %v4334 = vsub.s32 %v4331, %v4333
      %v4335 = vrot.slane %v4321, %v4334
      %v4336 = vcombine.low %v4280, %v4296
      %v4337 = vcombine.high %v4280, %v4296
      %v4339 = vunpack.c.l.s4 1934713408
      %v4340 = vunpack.c.0.s8 %v4339
      %v4341 = vlaneseq
      %v4342 = vshrl.u32 %v4341, 7
      %v4343 = vsub.s32 %v4340, %v4342
      %v4344 = vrot.slane %v4336, %v4343
      %v4346 = vunpack.c.l.s4 1934713408
      %v4347 = vunpack.c.0.s8 %v4346
      %v4348 = vlaneseq
      %v4349 = vshrl.u32 %v4348, 7
      %v4350 = vsub.s32 %v4347, %v4349
      %v4351 = vrot.slane %v4337, %v4350
      %v4352 = vcombine.low %v4287, %v4303
      %v4353 = vcombine.high %v4287, %v4303
      %v4355 = vunpack.c.l.s4 1934713408
      %v4356 = vunpack.c.0.s8 %v4355
      %v4357 = vlaneseq
      %v4358 = vshrl.u32 %v4357, 7
      %v4359 = vsub.s32 %v4356, %v4358
      %v4360 = vrot.slane %v4352, %v4359
      %v4362 = vunpack.c.l.s4 1934713408
      %v4363 = vunpack.c.0.s8 %v4362
      %v4364 = vlaneseq
      %v4365 = vshrl.u32 %v4364, 7
      %v4366 = vsub.s32 %v4363, %v4365
      %v4367 = vrot.slane %v4353, %v4366
      %v4368 = vcombine.low %v4312, %v4328
      %v4369 = vcombine.high %v4312, %v4328
      %v4371 = vunpack.c.l.s4 1934713408
      %v4372 = vunpack.c.0.s8 %v4371
      %v4373 = vlaneseq
      %v4374 = vshrl.u32 %v4373, 7
      %v4375 = vsub.s32 %v4372, %v4374
      %v4376 = vrot.slane %v4368, %v4375
      %v4378 = vunpack.c.l.s4 1934713408
      %v4379 = vunpack.c.0.s8 %v4378
      %v4380 = vlaneseq
      %v4381 = vshrl.u32 %v4380, 7
      %v4382 = vsub.s32 %v4379, %v4381
      %v4383 = vrot.slane %v4369, %v4382
      %v4384 = vcombine.low %v4319, %v4335
      %v4385 = vcombine.high %v4319, %v4335
      %v4387 = vunpack.c.l.s4 1934713408
      %v4388 = vunpack.c.0.s8 %v4387
      %v4389 = vlaneseq
      %v4390 = vshrl.u32 %v4389, 7
      %v4391 = vsub.s32 %v4388, %v4390
      %v4392 = vrot.slane %v4384, %v4391
      %v4394 = vunpack.c.l.s4 1934713408
      %v4395 = vunpack.c.0.s8 %v4394
      %v4396 = vlaneseq
      %v4397 = vshrl.u32 %v4396, 7
      %v4398 = vsub.s32 %v4395, %v4397
      %v4399 = vrot.slane %v4385, %v4398
      %v4400 = vcombine.low %v4344, %v4376
      %v4401 = vcombine.high %v4344, %v4376
      %v4402 = vcombine.low %v4351, %v4383
      %v4403 = vcombine.high %v4351, %v4383
      %v4404 = vcombine.low %v4360, %v4392
      %v4405 = vcombine.high %v4360, %v4392
      %v4406 = vcombine.low %v4367, %v4399
      %v4407 = vcombine.high %v4367, %v4399
      %4409 = vrot.lane.b32.xlu0 %v4265, 16
      %v4410 = vpop.permute.xlu0 %4409
      %4413 = vrot.lane.b32.xlu0 %v4266, 32
      %v4414 = vpop.permute.xlu0 %4413
      %4417 = vrot.lane.b32.xlu0 %v4267, 48
      %v4418 = vpop.permute.xlu0 %4417
      %4421 = vrot.lane.b32.xlu0 %v4268, 64
      %v4422 = vpop.permute.xlu0 %4421
      %4425 = vrot.lane.b32.xlu0 %v4269, 80
      %v4426 = vpop.permute.xlu0 %4425
      %4429 = vrot.lane.b32.xlu0 %v4270, 96
      %v4430 = vpop.permute.xlu0 %4429
      %4433 = vrot.lane.b32.xlu0 %v4271, 112
      %v4434 = vpop.permute.xlu0 %4433
      %4437 = vrot.lane.b32.xlu0 %v4401, 16
      %v4438 = vpop.permute.xlu0 %4437
      %4441 = vrot.lane.b32.xlu0 %v4402, 32
      %v4442 = vpop.permute.xlu0 %4441
      %4445 = vrot.lane.b32.xlu0 %v4403, 48
      %v4446 = vpop.permute.xlu0 %4445
      %4449 = vrot.lane.b32.xlu0 %v4404, 64
      %v4450 = vpop.permute.xlu0 %4449
      %4453 = vrot.lane.b32.xlu0 %v4405, 80
      %v4454 = vpop.permute.xlu0 %4453
      %4457 = vrot.lane.b32.xlu0 %v4406, 96
      %v4458 = vpop.permute.xlu0 %4457
      %4461 = vrot.lane.b32.xlu0 %v4407, 112
      %v4462 = vpop.permute.xlu0 %4461
      %v4464 = vsel %vm733, %v4264, %v4410
      %v4465 = vsel %vm735, %v4464, %v4414
      %v4466 = vsel %vm737, %v4465, %v4418
      %v4467 = vsel %vm739, %v4466, %v4422
      %v4468 = vsel %vm741, %v4467, %v4426
      %v4469 = vsel %vm743, %v4468, %v4430
      %v4470 = vsel %vm745, %v4469, %v4434
      %v4471 = vsel %vm733, %v4400, %v4438
      %v4472 = vsel %vm735, %v4471, %v4442
      %v4473 = vsel %vm737, %v4472, %v4446
      %v4474 = vsel %vm739, %v4473, %v4450
      %v4475 = vsel %vm741, %v4474, %v4454
      %v4476 = vsel %vm743, %v4475, %v4458
      %v4477 = vsel %vm745, %v4476, %v4462
      %4478 = vrot.lane.b32.xlu0 %v3706, 126
      %v4479 = vpop.permute.xlu0 %4478
      %4480 = vrot.lane.b32.xlu0 %v3707, 126
      %v4481 = vpop.permute.xlu0 %4480
      %4482 = vrot.lane.b32.xlu0 %v3709, 126
      %v4483 = vpop.permute.xlu0 %4482
      %4484 = vrot.lane.b32.xlu0 %v3710, 126
      %v4485 = vpop.permute.xlu0 %4484
      %4486 = vrot.lane.b32.xlu0 %v3712, 126
      %v4487 = vpop.permute.xlu0 %4486
      %4488 = vrot.lane.b32.xlu0 %v3713, 126
      %v4489 = vpop.permute.xlu0 %4488
      %4490 = vrot.lane.b32.xlu0 %v3715, 126
      %v4491 = vpop.permute.xlu0 %4490
      %4492 = vrot.lane.b32.xlu0 %v3716, 126
      %v4493 = vpop.permute.xlu0 %4492
      %4494 = vrot.lane.b32.xlu0 %v3718, 126
      %v4495 = vpop.permute.xlu0 %4494
      %4496 = vrot.lane.b32.xlu0 %v3719, 126
      %v4497 = vpop.permute.xlu0 %4496
      %4498 = vrot.lane.b32.xlu0 %v3721, 126
      %v4499 = vpop.permute.xlu0 %4498
      %4500 = vrot.lane.b32.xlu0 %v3722, 126
      %v4501 = vpop.permute.xlu0 %4500
      %4502 = vrot.lane.b32.xlu0 %v3724, 126
      %v4503 = vpop.permute.xlu0 %4502
      %4504 = vrot.lane.b32.xlu0 %v3725, 126
      %v4505 = vpop.permute.xlu0 %4504
      %4506 = vrot.lane.b32.xlu0 %v3727, 126
      %v4507 = vpop.permute.xlu0 %4506
      %4508 = vrot.lane.b32.xlu0 %v3728, 126
      %v4509 = vpop.permute.xlu0 %4508
      %v4526 = vcombine.low %v4479, %v4487
      %v4527 = vcombine.high %v4479, %v4487
      %v4529 = vunpack.c.l.s4 1983009808
      %v4530 = vunpack.c.0.s8 %v4529
      %v4531 = vlaneseq
      %v4532 = vshrl.u32 %v4531, 7
      %v4533 = vsub.s32 %v4530, %v4532
      %v4534 = vrot.slane %v4526, %v4533
      %v4536 = vunpack.c.l.s4 1983009808
      %v4537 = vunpack.c.0.s8 %v4536
      %v4538 = vlaneseq
      %v4539 = vshrl.u32 %v4538, 7
      %v4540 = vsub.s32 %v4537, %v4539
      %v4541 = vrot.slane %v4527, %v4540
      %v4542 = vcombine.low %v4483, %v4491
      %v4543 = vcombine.high %v4483, %v4491
      %v4545 = vunpack.c.l.s4 1983009808
      %v4546 = vunpack.c.0.s8 %v4545
      %v4547 = vlaneseq
      %v4548 = vshrl.u32 %v4547, 7
      %v4549 = vsub.s32 %v4546, %v4548
      %v4550 = vrot.slane %v4542, %v4549
      %v4552 = vunpack.c.l.s4 1983009808
      %v4553 = vunpack.c.0.s8 %v4552
      %v4554 = vlaneseq
      %v4555 = vshrl.u32 %v4554, 7
      %v4556 = vsub.s32 %v4553, %v4555
      %v4557 = vrot.slane %v4543, %v4556
      %v4558 = vcombine.low %v4495, %v4503
      %v4559 = vcombine.high %v4495, %v4503
      %v4561 = vunpack.c.l.s4 1983009808
      %v4562 = vunpack.c.0.s8 %v4561
      %v4563 = vlaneseq
      %v4564 = vshrl.u32 %v4563, 7
      %v4565 = vsub.s32 %v4562, %v4564
      %v4566 = vrot.slane %v4558, %v4565
      %v4568 = vunpack.c.l.s4 1983009808
      %v4569 = vunpack.c.0.s8 %v4568
      %v4570 = vlaneseq
      %v4571 = vshrl.u32 %v4570, 7
      %v4572 = vsub.s32 %v4569, %v4571
      %v4573 = vrot.slane %v4559, %v4572
      %v4574 = vcombine.low %v4499, %v4507
      %v4575 = vcombine.high %v4499, %v4507
      %v4577 = vunpack.c.l.s4 1983009808
      %v4578 = vunpack.c.0.s8 %v4577
      %v4579 = vlaneseq
      %v4580 = vshrl.u32 %v4579, 7
      %v4581 = vsub.s32 %v4578, %v4580
      %v4582 = vrot.slane %v4574, %v4581
      %v4584 = vunpack.c.l.s4 1983009808
      %v4585 = vunpack.c.0.s8 %v4584
      %v4586 = vlaneseq
      %v4587 = vshrl.u32 %v4586, 7
      %v4588 = vsub.s32 %v4585, %v4587
      %v4589 = vrot.slane %v4575, %v4588
      %v4590 = vcombine.low %v4534, %v4550
      %v4591 = vcombine.high %v4534, %v4550
      %v4593 = vunpack.c.l.s4 1934713408
      %v4594 = vunpack.c.0.s8 %v4593
      %v4595 = vlaneseq
      %v4596 = vshrl.u32 %v4595, 7
      %v4597 = vsub.s32 %v4594, %v4596
      %v4598 = vrot.slane %v4590, %v4597
      %v4600 = vunpack.c.l.s4 1934713408
      %v4601 = vunpack.c.0.s8 %v4600
      %v4602 = vlaneseq
      %v4603 = vshrl.u32 %v4602, 7
      %v4604 = vsub.s32 %v4601, %v4603
      %v4605 = vrot.slane %v4591, %v4604
      %v4606 = vcombine.low %v4541, %v4557
      %v4607 = vcombine.high %v4541, %v4557
      %v4609 = vunpack.c.l.s4 1934713408
      %v4610 = vunpack.c.0.s8 %v4609
      %v4611 = vlaneseq
      %v4612 = vshrl.u32 %v4611, 7
      %v4613 = vsub.s32 %v4610, %v4612
      %v4614 = vrot.slane %v4606, %v4613
      %v4616 = vunpack.c.l.s4 1934713408
      %v4617 = vunpack.c.0.s8 %v4616
      %v4618 = vlaneseq
      %v4619 = vshrl.u32 %v4618, 7
      %v4620 = vsub.s32 %v4617, %v4619
      %v4621 = vrot.slane %v4607, %v4620
      %v4622 = vcombine.low %v4566, %v4582
      %v4623 = vcombine.high %v4566, %v4582
      %v4625 = vunpack.c.l.s4 1934713408
      %v4626 = vunpack.c.0.s8 %v4625
      %v4627 = vlaneseq
      %v4628 = vshrl.u32 %v4627, 7
      %v4629 = vsub.s32 %v4626, %v4628
      %v4630 = vrot.slane %v4622, %v4629
      %v4632 = vunpack.c.l.s4 1934713408
      %v4633 = vunpack.c.0.s8 %v4632
      %v4634 = vlaneseq
      %v4635 = vshrl.u32 %v4634, 7
      %v4636 = vsub.s32 %v4633, %v4635
      %v4637 = vrot.slane %v4623, %v4636
      %v4638 = vcombine.low %v4573, %v4589
      %v4639 = vcombine.high %v4573, %v4589
      %v4641 = vunpack.c.l.s4 1934713408
      %v4642 = vunpack.c.0.s8 %v4641
      %v4643 = vlaneseq
      %v4644 = vshrl.u32 %v4643, 7
      %v4645 = vsub.s32 %v4642, %v4644
      %v4646 = vrot.slane %v4638, %v4645
      %v4648 = vunpack.c.l.s4 1934713408
      %v4649 = vunpack.c.0.s8 %v4648
      %v4650 = vlaneseq
      %v4651 = vshrl.u32 %v4650, 7
      %v4652 = vsub.s32 %v4649, %v4651
      %v4653 = vrot.slane %v4639, %v4652
      %v4654 = vcombine.low %v4598, %v4630
      %v4655 = vcombine.high %v4598, %v4630
      %v4656 = vcombine.low %v4605, %v4637
      %v4657 = vcombine.high %v4605, %v4637
      %v4658 = vcombine.low %v4614, %v4646
      %v4659 = vcombine.high %v4614, %v4646
      %v4660 = vcombine.low %v4621, %v4653
      %v4661 = vcombine.high %v4621, %v4653
      %v4662 = vcombine.low %v4481, %v4489
      %v4663 = vcombine.high %v4481, %v4489
      %v4665 = vunpack.c.l.s4 1983009808
      %v4666 = vunpack.c.0.s8 %v4665
      %v4667 = vlaneseq
      %v4668 = vshrl.u32 %v4667, 7
      %v4669 = vsub.s32 %v4666, %v4668
      %v4670 = vrot.slane %v4662, %v4669
      %v4672 = vunpack.c.l.s4 1983009808
      %v4673 = vunpack.c.0.s8 %v4672
      %v4674 = vlaneseq
      %v4675 = vshrl.u32 %v4674, 7
      %v4676 = vsub.s32 %v4673, %v4675
      %v4677 = vrot.slane %v4663, %v4676
      %v4678 = vcombine.low %v4485, %v4493
      %v4679 = vcombine.high %v4485, %v4493
      %v4681 = vunpack.c.l.s4 1983009808
      %v4682 = vunpack.c.0.s8 %v4681
      %v4683 = vlaneseq
      %v4684 = vshrl.u32 %v4683, 7
      %v4685 = vsub.s32 %v4682, %v4684
      %v4686 = vrot.slane %v4678, %v4685
      %v4688 = vunpack.c.l.s4 1983009808
      %v4689 = vunpack.c.0.s8 %v4688
      %v4690 = vlaneseq
      %v4691 = vshrl.u32 %v4690, 7
      %v4692 = vsub.s32 %v4689, %v4691
      %v4693 = vrot.slane %v4679, %v4692
      %v4694 = vcombine.low %v4497, %v4505
      %v4695 = vcombine.high %v4497, %v4505
      %v4697 = vunpack.c.l.s4 1983009808
      %v4698 = vunpack.c.0.s8 %v4697
      %v4699 = vlaneseq
      %v4700 = vshrl.u32 %v4699, 7
      %v4701 = vsub.s32 %v4698, %v4700
      %v4702 = vrot.slane %v4694, %v4701
      %v4704 = vunpack.c.l.s4 1983009808
      %v4705 = vunpack.c.0.s8 %v4704
      %v4706 = vlaneseq
      %v4707 = vshrl.u32 %v4706, 7
      %v4708 = vsub.s32 %v4705, %v4707
      %v4709 = vrot.slane %v4695, %v4708
      %v4710 = vcombine.low %v4501, %v4509
      %v4711 = vcombine.high %v4501, %v4509
      %v4713 = vunpack.c.l.s4 1983009808
      %v4714 = vunpack.c.0.s8 %v4713
      %v4715 = vlaneseq
      %v4716 = vshrl.u32 %v4715, 7
      %v4717 = vsub.s32 %v4714, %v4716
      %v4718 = vrot.slane %v4710, %v4717
      %v4720 = vunpack.c.l.s4 1983009808
      %v4721 = vunpack.c.0.s8 %v4720
      %v4722 = vlaneseq
      %v4723 = vshrl.u32 %v4722, 7
      %v4724 = vsub.s32 %v4721, %v4723
      %v4725 = vrot.slane %v4711, %v4724
      %v4726 = vcombine.low %v4670, %v4686
      %v4727 = vcombine.high %v4670, %v4686
      %v4729 = vunpack.c.l.s4 1934713408
      %v4730 = vunpack.c.0.s8 %v4729
      %v4731 = vlaneseq
      %v4732 = vshrl.u32 %v4731, 7
      %v4733 = vsub.s32 %v4730, %v4732
      %v4734 = vrot.slane %v4726, %v4733
      %v4736 = vunpack.c.l.s4 1934713408
      %v4737 = vunpack.c.0.s8 %v4736
      %v4738 = vlaneseq
      %v4739 = vshrl.u32 %v4738, 7
      %v4740 = vsub.s32 %v4737, %v4739
      %v4741 = vrot.slane %v4727, %v4740
      %v4742 = vcombine.low %v4677, %v4693
      %v4743 = vcombine.high %v4677, %v4693
      %v4745 = vunpack.c.l.s4 1934713408
      %v4746 = vunpack.c.0.s8 %v4745
      %v4747 = vlaneseq
      %v4748 = vshrl.u32 %v4747, 7
      %v4749 = vsub.s32 %v4746, %v4748
      %v4750 = vrot.slane %v4742, %v4749
      %v4752 = vunpack.c.l.s4 1934713408
      %v4753 = vunpack.c.0.s8 %v4752
      %v4754 = vlaneseq
      %v4755 = vshrl.u32 %v4754, 7
      %v4756 = vsub.s32 %v4753, %v4755
      %v4757 = vrot.slane %v4743, %v4756
      %v4758 = vcombine.low %v4702, %v4718
      %v4759 = vcombine.high %v4702, %v4718
      %v4761 = vunpack.c.l.s4 1934713408
      %v4762 = vunpack.c.0.s8 %v4761
      %v4763 = vlaneseq
      %v4764 = vshrl.u32 %v4763, 7
      %v4765 = vsub.s32 %v4762, %v4764
      %v4766 = vrot.slane %v4758, %v4765
      %v4768 = vunpack.c.l.s4 1934713408
      %v4769 = vunpack.c.0.s8 %v4768
      %v4770 = vlaneseq
      %v4771 = vshrl.u32 %v4770, 7
      %v4772 = vsub.s32 %v4769, %v4771
      %v4773 = vrot.slane %v4759, %v4772
      %v4774 = vcombine.low %v4709, %v4725
      %v4775 = vcombine.high %v4709, %v4725
      %v4777 = vunpack.c.l.s4 1934713408
      %v4778 = vunpack.c.0.s8 %v4777
      %v4779 = vlaneseq
      %v4780 = vshrl.u32 %v4779, 7
      %v4781 = vsub.s32 %v4778, %v4780
      %v4782 = vrot.slane %v4774, %v4781
      %v4784 = vunpack.c.l.s4 1934713408
      %v4785 = vunpack.c.0.s8 %v4784
      %v4786 = vlaneseq
      %v4787 = vshrl.u32 %v4786, 7
      %v4788 = vsub.s32 %v4785, %v4787
      %v4789 = vrot.slane %v4775, %v4788
      %v4790 = vcombine.low %v4734, %v4766
      %v4791 = vcombine.high %v4734, %v4766
      %v4792 = vcombine.low %v4741, %v4773
      %v4793 = vcombine.high %v4741, %v4773
      %v4794 = vcombine.low %v4750, %v4782
      %v4795 = vcombine.high %v4750, %v4782
      %v4796 = vcombine.low %v4757, %v4789
      %v4797 = vcombine.high %v4757, %v4789
      %4799 = vrot.lane.b32.xlu0 %v4655, 16
      %v4800 = vpop.permute.xlu0 %4799
      %4803 = vrot.lane.b32.xlu0 %v4656, 32
      %v4804 = vpop.permute.xlu0 %4803
      %4807 = vrot.lane.b32.xlu0 %v4657, 48
      %v4808 = vpop.permute.xlu0 %4807
      %4811 = vrot.lane.b32.xlu0 %v4658, 64
      %v4812 = vpop.permute.xlu0 %4811
      %4815 = vrot.lane.b32.xlu0 %v4659, 80
      %v4816 = vpop.permute.xlu0 %4815
      %4819 = vrot.lane.b32.xlu0 %v4660, 96
      %v4820 = vpop.permute.xlu0 %4819
      %4823 = vrot.lane.b32.xlu0 %v4661, 112
      %v4824 = vpop.permute.xlu0 %4823
      %4827 = vrot.lane.b32.xlu0 %v4791, 16
      %v4828 = vpop.permute.xlu0 %4827
      %4831 = vrot.lane.b32.xlu0 %v4792, 32
      %v4832 = vpop.permute.xlu0 %4831
      %4835 = vrot.lane.b32.xlu0 %v4793, 48
      %v4836 = vpop.permute.xlu0 %4835
      %4839 = vrot.lane.b32.xlu0 %v4794, 64
      %v4840 = vpop.permute.xlu0 %4839
      %4843 = vrot.lane.b32.xlu0 %v4795, 80
      %v4844 = vpop.permute.xlu0 %4843
      %4847 = vrot.lane.b32.xlu0 %v4796, 96
      %v4848 = vpop.permute.xlu0 %4847
      %4851 = vrot.lane.b32.xlu0 %v4797, 112
      %v4852 = vpop.permute.xlu0 %4851
      %v4854 = vsel %vm733, %v4654, %v4800
      %v4855 = vsel %vm735, %v4854, %v4804
      %v4856 = vsel %vm737, %v4855, %v4808
      %v4857 = vsel %vm739, %v4856, %v4812
      %v4858 = vsel %vm741, %v4857, %v4816
      %v4859 = vsel %vm743, %v4858, %v4820
      %v4860 = vsel %vm745, %v4859, %v4824
      %v4861 = vsel %vm733, %v4790, %v4828
      %v4862 = vsel %vm735, %v4861, %v4832
      %v4863 = vsel %vm737, %v4862, %v4836
      %v4864 = vsel %vm739, %v4863, %v4840
      %v4865 = vsel %vm741, %v4864, %v4844
      %v4866 = vsel %vm743, %v4865, %v4848
      %v4867 = vsel %vm745, %v4866, %v4852
      %v4876 = vrot.slane %v3706, 1
      %v4877 = vrot.slane %v3707, 1
      %v4878 = vsel %vm1311, %v4876, %v4877
      %v4879 = vrot.slane %v3708, 1
      %v4880 = vsel %vm1311, %v4877, %v4879
      %v4881 = vrot.slane %v3709, 1
      %v4882 = vrot.slane %v3710, 1
      %v4883 = vsel %vm1311, %v4881, %v4882
      %v4884 = vrot.slane %v3711, 1
      %v4885 = vsel %vm1311, %v4882, %v4884
      %v4886 = vrot.slane %v3712, 1
      %v4887 = vrot.slane %v3713, 1
      %v4888 = vsel %vm1311, %v4886, %v4887
      %v4889 = vrot.slane %v3714, 1
      %v4890 = vsel %vm1311, %v4887, %v4889
      %v4891 = vrot.slane %v3715, 1
      %v4892 = vrot.slane %v3716, 1
      %v4893 = vsel %vm1311, %v4891, %v4892
      %v4894 = vrot.slane %v3717, 1
      %v4895 = vsel %vm1311, %v4892, %v4894
      %v4896 = vrot.slane %v3718, 1
      %v4897 = vrot.slane %v3719, 1
      %v4898 = vsel %vm1311, %v4896, %v4897
      %v4899 = vrot.slane %v3720, 1
      %v4900 = vsel %vm1311, %v4897, %v4899
      %v4901 = vrot.slane %v3721, 1
      %v4902 = vrot.slane %v3722, 1
      %v4903 = vsel %vm1311, %v4901, %v4902
      %v4904 = vrot.slane %v3723, 1
      %v4905 = vsel %vm1311, %v4902, %v4904
      %v4906 = vrot.slane %v3724, 1
      %v4907 = vrot.slane %v3725, 1
      %v4908 = vsel %vm1311, %v4906, %v4907
      %v4909 = vrot.slane %v3726, 1
      %v4910 = vsel %vm1311, %v4907, %v4909
      %v4911 = vrot.slane %v3727, 1
      %v4912 = vrot.slane %v3728, 1
      %v4913 = vsel %vm1311, %v4911, %v4912
      %v4914 = vrot.slane %v3729, 1
      %v4915 = vsel %vm1311, %v4912, %v4914
      %v4932 = vcombine.low %v4878, %v4888
      %v4933 = vcombine.high %v4878, %v4888
      %v4935 = vunpack.c.l.s4 1983009808
      %v4936 = vunpack.c.0.s8 %v4935
      %v4937 = vlaneseq
      %v4938 = vshrl.u32 %v4937, 7
      %v4939 = vsub.s32 %v4936, %v4938
      %v4940 = vrot.slane %v4932, %v4939
      %v4942 = vunpack.c.l.s4 1983009808
      %v4943 = vunpack.c.0.s8 %v4942
      %v4944 = vlaneseq
      %v4945 = vshrl.u32 %v4944, 7
      %v4946 = vsub.s32 %v4943, %v4945
      %v4947 = vrot.slane %v4933, %v4946
      %v4948 = vcombine.low %v4883, %v4893
      %v4949 = vcombine.high %v4883, %v4893
      %v4951 = vunpack.c.l.s4 1983009808
      %v4952 = vunpack.c.0.s8 %v4951
      %v4953 = vlaneseq
      %v4954 = vshrl.u32 %v4953, 7
      %v4955 = vsub.s32 %v4952, %v4954
      %v4956 = vrot.slane %v4948, %v4955
      %v4958 = vunpack.c.l.s4 1983009808
      %v4959 = vunpack.c.0.s8 %v4958
      %v4960 = vlaneseq
      %v4961 = vshrl.u32 %v4960, 7
      %v4962 = vsub.s32 %v4959, %v4961
      %v4963 = vrot.slane %v4949, %v4962
      %v4964 = vcombine.low %v4898, %v4908
      %v4965 = vcombine.high %v4898, %v4908
      %v4967 = vunpack.c.l.s4 1983009808
      %v4968 = vunpack.c.0.s8 %v4967
      %v4969 = vlaneseq
      %v4970 = vshrl.u32 %v4969, 7
      %v4971 = vsub.s32 %v4968, %v4970
      %v4972 = vrot.slane %v4964, %v4971
      %v4974 = vunpack.c.l.s4 1983009808
      %v4975 = vunpack.c.0.s8 %v4974
      %v4976 = vlaneseq
      %v4977 = vshrl.u32 %v4976, 7
      %v4978 = vsub.s32 %v4975, %v4977
      %v4979 = vrot.slane %v4965, %v4978
      %v4980 = vcombine.low %v4903, %v4913
      %v4981 = vcombine.high %v4903, %v4913
      %v4983 = vunpack.c.l.s4 1983009808
      %v4984 = vunpack.c.0.s8 %v4983
      %v4985 = vlaneseq
      %v4986 = vshrl.u32 %v4985, 7
      %v4987 = vsub.s32 %v4984, %v4986
      %v4988 = vrot.slane %v4980, %v4987
      %v4990 = vunpack.c.l.s4 1983009808
      %v4991 = vunpack.c.0.s8 %v4990
      %v4992 = vlaneseq
      %v4993 = vshrl.u32 %v4992, 7
      %v4994 = vsub.s32 %v4991, %v4993
      %v4995 = vrot.slane %v4981, %v4994
      %v4996 = vcombine.low %v4940, %v4956
      %v4997 = vcombine.high %v4940, %v4956
      %v4999 = vunpack.c.l.s4 1934713408
      %v5000 = vunpack.c.0.s8 %v4999
      %v5001 = vlaneseq
      %v5002 = vshrl.u32 %v5001, 7
      %v5003 = vsub.s32 %v5000, %v5002
      %v5004 = vrot.slane %v4996, %v5003
      %v5006 = vunpack.c.l.s4 1934713408
      %v5007 = vunpack.c.0.s8 %v5006
      %v5008 = vlaneseq
      %v5009 = vshrl.u32 %v5008, 7
      %v5010 = vsub.s32 %v5007, %v5009
      %v5011 = vrot.slane %v4997, %v5010
      %v5012 = vcombine.low %v4947, %v4963
      %v5013 = vcombine.high %v4947, %v4963
      %v5015 = vunpack.c.l.s4 1934713408
      %v5016 = vunpack.c.0.s8 %v5015
      %v5017 = vlaneseq
      %v5018 = vshrl.u32 %v5017, 7
      %v5019 = vsub.s32 %v5016, %v5018
      %v5020 = vrot.slane %v5012, %v5019
      %v5022 = vunpack.c.l.s4 1934713408
      %v5023 = vunpack.c.0.s8 %v5022
      %v5024 = vlaneseq
      %v5025 = vshrl.u32 %v5024, 7
      %v5026 = vsub.s32 %v5023, %v5025
      %v5027 = vrot.slane %v5013, %v5026
      %v5028 = vcombine.low %v4972, %v4988
      %v5029 = vcombine.high %v4972, %v4988
      %v5031 = vunpack.c.l.s4 1934713408
      %v5032 = vunpack.c.0.s8 %v5031
      %v5033 = vlaneseq
      %v5034 = vshrl.u32 %v5033, 7
      %v5035 = vsub.s32 %v5032, %v5034
      %v5036 = vrot.slane %v5028, %v5035
      %v5038 = vunpack.c.l.s4 1934713408
      %v5039 = vunpack.c.0.s8 %v5038
      %v5040 = vlaneseq
      %v5041 = vshrl.u32 %v5040, 7
      %v5042 = vsub.s32 %v5039, %v5041
      %v5043 = vrot.slane %v5029, %v5042
      %v5044 = vcombine.low %v4979, %v4995
      %v5045 = vcombine.high %v4979, %v4995
      %v5047 = vunpack.c.l.s4 1934713408
      %v5048 = vunpack.c.0.s8 %v5047
      %v5049 = vlaneseq
      %v5050 = vshrl.u32 %v5049, 7
      %v5051 = vsub.s32 %v5048, %v5050
      %v5052 = vrot.slane %v5044, %v5051
      %v5054 = vunpack.c.l.s4 1934713408
      %v5055 = vunpack.c.0.s8 %v5054
      %v5056 = vlaneseq
      %v5057 = vshrl.u32 %v5056, 7
      %v5058 = vsub.s32 %v5055, %v5057
      %v5059 = vrot.slane %v5045, %v5058
      %v5060 = vcombine.low %v5004, %v5036
      %v5061 = vcombine.high %v5004, %v5036
      %v5062 = vcombine.low %v5011, %v5043
      %v5063 = vcombine.high %v5011, %v5043
      %v5064 = vcombine.low %v5020, %v5052
      %v5065 = vcombine.high %v5020, %v5052
      %v5066 = vcombine.low %v5027, %v5059
      %v5067 = vcombine.high %v5027, %v5059
      %v5068 = vcombine.low %v4880, %v4890
      %v5069 = vcombine.high %v4880, %v4890
      %v5071 = vunpack.c.l.s4 1983009808
      %v5072 = vunpack.c.0.s8 %v5071
      %v5073 = vlaneseq
      %v5074 = vshrl.u32 %v5073, 7
      %v5075 = vsub.s32 %v5072, %v5074
      %v5076 = vrot.slane %v5068, %v5075
      %v5078 = vunpack.c.l.s4 1983009808
      %v5079 = vunpack.c.0.s8 %v5078
      %v5080 = vlaneseq
      %v5081 = vshrl.u32 %v5080, 7
      %v5082 = vsub.s32 %v5079, %v5081
      %v5083 = vrot.slane %v5069, %v5082
      %v5084 = vcombine.low %v4885, %v4895
      %v5085 = vcombine.high %v4885, %v4895
      %v5087 = vunpack.c.l.s4 1983009808
      %v5088 = vunpack.c.0.s8 %v5087
      %v5089 = vlaneseq
      %v5090 = vshrl.u32 %v5089, 7
      %v5091 = vsub.s32 %v5088, %v5090
      %v5092 = vrot.slane %v5084, %v5091
      %v5094 = vunpack.c.l.s4 1983009808
      %v5095 = vunpack.c.0.s8 %v5094
      %v5096 = vlaneseq
      %v5097 = vshrl.u32 %v5096, 7
      %v5098 = vsub.s32 %v5095, %v5097
      %v5099 = vrot.slane %v5085, %v5098
      %v5100 = vcombine.low %v4900, %v4910
      %v5101 = vcombine.high %v4900, %v4910
      %v5103 = vunpack.c.l.s4 1983009808
      %v5104 = vunpack.c.0.s8 %v5103
      %v5105 = vlaneseq
      %v5106 = vshrl.u32 %v5105, 7
      %v5107 = vsub.s32 %v5104, %v5106
      %v5108 = vrot.slane %v5100, %v5107
      %v5110 = vunpack.c.l.s4 1983009808
      %v5111 = vunpack.c.0.s8 %v5110
      %v5112 = vlaneseq
      %v5113 = vshrl.u32 %v5112, 7
      %v5114 = vsub.s32 %v5111, %v5113
      %v5115 = vrot.slane %v5101, %v5114
      %v5116 = vcombine.low %v4905, %v4915
      %v5117 = vcombine.high %v4905, %v4915
      %v5119 = vunpack.c.l.s4 1983009808
      %v5120 = vunpack.c.0.s8 %v5119
      %v5121 = vlaneseq
      %v5122 = vshrl.u32 %v5121, 7
      %v5123 = vsub.s32 %v5120, %v5122
      %v5124 = vrot.slane %v5116, %v5123
      %v5126 = vunpack.c.l.s4 1983009808
      %v5127 = vunpack.c.0.s8 %v5126
      %v5128 = vlaneseq
      %v5129 = vshrl.u32 %v5128, 7
      %v5130 = vsub.s32 %v5127, %v5129
      %v5131 = vrot.slane %v5117, %v5130
      %v5132 = vcombine.low %v5076, %v5092
      %v5133 = vcombine.high %v5076, %v5092
      %v5135 = vunpack.c.l.s4 1934713408
      %v5136 = vunpack.c.0.s8 %v5135
      %v5137 = vlaneseq
      %v5138 = vshrl.u32 %v5137, 7
      %v5139 = vsub.s32 %v5136, %v5138
      %v5140 = vrot.slane %v5132, %v5139
      %v5142 = vunpack.c.l.s4 1934713408
      %v5143 = vunpack.c.0.s8 %v5142
      %v5144 = vlaneseq
      %v5145 = vshrl.u32 %v5144, 7
      %v5146 = vsub.s32 %v5143, %v5145
      %v5147 = vrot.slane %v5133, %v5146
      %v5148 = vcombine.low %v5083, %v5099
      %v5149 = vcombine.high %v5083, %v5099
      %v5151 = vunpack.c.l.s4 1934713408
      %v5152 = vunpack.c.0.s8 %v5151
      %v5153 = vlaneseq
      %v5154 = vshrl.u32 %v5153, 7
      %v5155 = vsub.s32 %v5152, %v5154
      %v5156 = vrot.slane %v5148, %v5155
      %v5158 = vunpack.c.l.s4 1934713408
      %v5159 = vunpack.c.0.s8 %v5158
      %v5160 = vlaneseq
      %v5161 = vshrl.u32 %v5160, 7
      %v5162 = vsub.s32 %v5159, %v5161
      %v5163 = vrot.slane %v5149, %v5162
      %v5164 = vcombine.low %v5108, %v5124
      %v5165 = vcombine.high %v5108, %v5124
      %v5167 = vunpack.c.l.s4 1934713408
      %v5168 = vunpack.c.0.s8 %v5167
      %v5169 = vlaneseq
      %v5170 = vshrl.u32 %v5169, 7
      %v5171 = vsub.s32 %v5168, %v5170
      %v5172 = vrot.slane %v5164, %v5171
      %v5174 = vunpack.c.l.s4 1934713408
      %v5175 = vunpack.c.0.s8 %v5174
      %v5176 = vlaneseq
      %v5177 = vshrl.u32 %v5176, 7
      %v5178 = vsub.s32 %v5175, %v5177
      %v5179 = vrot.slane %v5165, %v5178
      %v5180 = vcombine.low %v5115, %v5131
      %v5181 = vcombine.high %v5115, %v5131
      %v5183 = vunpack.c.l.s4 1934713408
      %v5184 = vunpack.c.0.s8 %v5183
      %v5185 = vlaneseq
      %v5186 = vshrl.u32 %v5185, 7
      %v5187 = vsub.s32 %v5184, %v5186
      %v5188 = vrot.slane %v5180, %v5187
      %v5190 = vunpack.c.l.s4 1934713408
      %v5191 = vunpack.c.0.s8 %v5190
      %v5192 = vlaneseq
      %v5193 = vshrl.u32 %v5192, 7
      %v5194 = vsub.s32 %v5191, %v5193
      %v5195 = vrot.slane %v5181, %v5194
      %v5196 = vcombine.low %v5140, %v5172
      %v5197 = vcombine.high %v5140, %v5172
      %v5198 = vcombine.low %v5147, %v5179
      %v5199 = vcombine.high %v5147, %v5179
      %v5200 = vcombine.low %v5156, %v5188
      %v5201 = vcombine.high %v5156, %v5188
      %v5202 = vcombine.low %v5163, %v5195
      %v5203 = vcombine.high %v5163, %v5195
      %5205 = vrot.lane.b32.xlu0 %v5061, 16
      %v5206 = vpop.permute.xlu0 %5205
      %5209 = vrot.lane.b32.xlu0 %v5062, 32
      %v5210 = vpop.permute.xlu0 %5209
      %5213 = vrot.lane.b32.xlu0 %v5063, 48
      %v5214 = vpop.permute.xlu0 %5213
      %5217 = vrot.lane.b32.xlu0 %v5064, 64
      %v5218 = vpop.permute.xlu0 %5217
      %5221 = vrot.lane.b32.xlu0 %v5065, 80
      %v5222 = vpop.permute.xlu0 %5221
      %5225 = vrot.lane.b32.xlu0 %v5066, 96
      %v5226 = vpop.permute.xlu0 %5225
      %5229 = vrot.lane.b32.xlu0 %v5067, 112
      %v5230 = vpop.permute.xlu0 %5229
      %5233 = vrot.lane.b32.xlu0 %v5197, 16
      %v5234 = vpop.permute.xlu0 %5233
      %5237 = vrot.lane.b32.xlu0 %v5198, 32
      %v5238 = vpop.permute.xlu0 %5237
      %5241 = vrot.lane.b32.xlu0 %v5199, 48
      %v5242 = vpop.permute.xlu0 %5241
      %5245 = vrot.lane.b32.xlu0 %v5200, 64
      %v5246 = vpop.permute.xlu0 %5245
      %5249 = vrot.lane.b32.xlu0 %v5201, 80
      %v5250 = vpop.permute.xlu0 %5249
      %5253 = vrot.lane.b32.xlu0 %v5202, 96
      %v5254 = vpop.permute.xlu0 %5253
      %5257 = vrot.lane.b32.xlu0 %v5203, 112
      %v5258 = vpop.permute.xlu0 %5257
      %v5260 = vsel %vm733, %v5060, %v5206
      %v5261 = vsel %vm735, %v5260, %v5210
      %v5262 = vsel %vm737, %v5261, %v5214
      %v5263 = vsel %vm739, %v5262, %v5218
      %v5264 = vsel %vm741, %v5263, %v5222
      %v5265 = vsel %vm743, %v5264, %v5226
      %v5266 = vsel %vm745, %v5265, %v5230
      %v5267 = vsel %vm733, %v5196, %v5234
      %v5268 = vsel %vm735, %v5267, %v5238
      %v5269 = vsel %vm737, %v5268, %v5242
      %v5270 = vsel %vm739, %v5269, %v5246
      %v5271 = vsel %vm741, %v5270, %v5250
      %v5272 = vsel %vm743, %v5271, %v5254
      %v5273 = vsel %vm745, %v5272, %v5258
      %5274 = vrot.lane.b32.xlu0 %v4878, 127
      %v5275 = vpop.permute.xlu0 %5274
      %5276 = vrot.lane.b32.xlu0 %v4880, 127
      %v5277 = vpop.permute.xlu0 %5276
      %5278 = vrot.lane.b32.xlu0 %v4883, 127
      %v5279 = vpop.permute.xlu0 %5278
      %5280 = vrot.lane.b32.xlu0 %v4885, 127
      %v5281 = vpop.permute.xlu0 %5280
      %5282 = vrot.lane.b32.xlu0 %v4888, 127
      %v5283 = vpop.permute.xlu0 %5282
      %5284 = vrot.lane.b32.xlu0 %v4890, 127
      %v5285 = vpop.permute.xlu0 %5284
      %5286 = vrot.lane.b32.xlu0 %v4893, 127
      %v5287 = vpop.permute.xlu0 %5286
      %5288 = vrot.lane.b32.xlu0 %v4895, 127
      %v5289 = vpop.permute.xlu0 %5288
      %5290 = vrot.lane.b32.xlu0 %v4898, 127
      %v5291 = vpop.permute.xlu0 %5290
      %5292 = vrot.lane.b32.xlu0 %v4900, 127
      %v5293 = vpop.permute.xlu0 %5292
      %5294 = vrot.lane.b32.xlu0 %v4903, 127
      %v5295 = vpop.permute.xlu0 %5294
      %5296 = vrot.lane.b32.xlu0 %v4905, 127
      %v5297 = vpop.permute.xlu0 %5296
      %5298 = vrot.lane.b32.xlu0 %v4908, 127
      %v5299 = vpop.permute.xlu0 %5298
      %5300 = vrot.lane.b32.xlu0 %v4910, 127
      %v5301 = vpop.permute.xlu0 %5300
      %5302 = vrot.lane.b32.xlu0 %v4913, 127
      %v5303 = vpop.permute.xlu0 %5302
      %5304 = vrot.lane.b32.xlu0 %v4915, 127
      %v5305 = vpop.permute.xlu0 %5304
      %v5322 = vcombine.low %v5275, %v5283
      %v5323 = vcombine.high %v5275, %v5283
      %v5325 = vunpack.c.l.s4 1983009808
      %v5326 = vunpack.c.0.s8 %v5325
      %v5327 = vlaneseq
      %v5328 = vshrl.u32 %v5327, 7
      %v5329 = vsub.s32 %v5326, %v5328
      %v5330 = vrot.slane %v5322, %v5329
      %v5332 = vunpack.c.l.s4 1983009808
      %v5333 = vunpack.c.0.s8 %v5332
      %v5334 = vlaneseq
      %v5335 = vshrl.u32 %v5334, 7
      %v5336 = vsub.s32 %v5333, %v5335
      %v5337 = vrot.slane %v5323, %v5336
      %v5338 = vcombine.low %v5279, %v5287
      %v5339 = vcombine.high %v5279, %v5287
      %v5341 = vunpack.c.l.s4 1983009808
      %v5342 = vunpack.c.0.s8 %v5341
      %v5343 = vlaneseq
      %v5344 = vshrl.u32 %v5343, 7
      %v5345 = vsub.s32 %v5342, %v5344
      %v5346 = vrot.slane %v5338, %v5345
      %v5348 = vunpack.c.l.s4 1983009808
      %v5349 = vunpack.c.0.s8 %v5348
      %v5350 = vlaneseq
      %v5351 = vshrl.u32 %v5350, 7
      %v5352 = vsub.s32 %v5349, %v5351
      %v5353 = vrot.slane %v5339, %v5352
      %v5354 = vcombine.low %v5291, %v5299
      %v5355 = vcombine.high %v5291, %v5299
      %v5357 = vunpack.c.l.s4 1983009808
      %v5358 = vunpack.c.0.s8 %v5357
      %v5359 = vlaneseq
      %v5360 = vshrl.u32 %v5359, 7
      %v5361 = vsub.s32 %v5358, %v5360
      %v5362 = vrot.slane %v5354, %v5361
      %v5364 = vunpack.c.l.s4 1983009808
      %v5365 = vunpack.c.0.s8 %v5364
      %v5366 = vlaneseq
      %v5367 = vshrl.u32 %v5366, 7
      %v5368 = vsub.s32 %v5365, %v5367
      %v5369 = vrot.slane %v5355, %v5368
      %v5370 = vcombine.low %v5295, %v5303
      %v5371 = vcombine.high %v5295, %v5303
      %v5373 = vunpack.c.l.s4 1983009808
      %v5374 = vunpack.c.0.s8 %v5373
      %v5375 = vlaneseq
      %v5376 = vshrl.u32 %v5375, 7
      %v5377 = vsub.s32 %v5374, %v5376
      %v5378 = vrot.slane %v5370, %v5377
      %v5380 = vunpack.c.l.s4 1983009808
      %v5381 = vunpack.c.0.s8 %v5380
      %v5382 = vlaneseq
      %v5383 = vshrl.u32 %v5382, 7
      %v5384 = vsub.s32 %v5381, %v5383
      %v5385 = vrot.slane %v5371, %v5384
      %v5386 = vcombine.low %v5330, %v5346
      %v5387 = vcombine.high %v5330, %v5346
      %v5389 = vunpack.c.l.s4 1934713408
      %v5390 = vunpack.c.0.s8 %v5389
      %v5391 = vlaneseq
      %v5392 = vshrl.u32 %v5391, 7
      %v5393 = vsub.s32 %v5390, %v5392
      %v5394 = vrot.slane %v5386, %v5393
      %v5396 = vunpack.c.l.s4 1934713408
      %v5397 = vunpack.c.0.s8 %v5396
      %v5398 = vlaneseq
      %v5399 = vshrl.u32 %v5398, 7
      %v5400 = vsub.s32 %v5397, %v5399
      %v5401 = vrot.slane %v5387, %v5400
      %v5402 = vcombine.low %v5337, %v5353
      %v5403 = vcombine.high %v5337, %v5353
      %v5405 = vunpack.c.l.s4 1934713408
      %v5406 = vunpack.c.0.s8 %v5405
      %v5407 = vlaneseq
      %v5408 = vshrl.u32 %v5407, 7
      %v5409 = vsub.s32 %v5406, %v5408
      %v5410 = vrot.slane %v5402, %v5409
      %v5412 = vunpack.c.l.s4 1934713408
      %v5413 = vunpack.c.0.s8 %v5412
      %v5414 = vlaneseq
      %v5415 = vshrl.u32 %v5414, 7
      %v5416 = vsub.s32 %v5413, %v5415
      %v5417 = vrot.slane %v5403, %v5416
      %v5418 = vcombine.low %v5362, %v5378
      %v5419 = vcombine.high %v5362, %v5378
      %v5421 = vunpack.c.l.s4 1934713408
      %v5422 = vunpack.c.0.s8 %v5421
      %v5423 = vlaneseq
      %v5424 = vshrl.u32 %v5423, 7
      %v5425 = vsub.s32 %v5422, %v5424
      %v5426 = vrot.slane %v5418, %v5425
      %v5428 = vunpack.c.l.s4 1934713408
      %v5429 = vunpack.c.0.s8 %v5428
      %v5430 = vlaneseq
      %v5431 = vshrl.u32 %v5430, 7
      %v5432 = vsub.s32 %v5429, %v5431
      %v5433 = vrot.slane %v5419, %v5432
      %v5434 = vcombine.low %v5369, %v5385
      %v5435 = vcombine.high %v5369, %v5385
      %v5437 = vunpack.c.l.s4 1934713408
      %v5438 = vunpack.c.0.s8 %v5437
      %v5439 = vlaneseq
      %v5440 = vshrl.u32 %v5439, 7
      %v5441 = vsub.s32 %v5438, %v5440
      %v5442 = vrot.slane %v5434, %v5441
      %v5444 = vunpack.c.l.s4 1934713408
      %v5445 = vunpack.c.0.s8 %v5444
      %v5446 = vlaneseq
      %v5447 = vshrl.u32 %v5446, 7
      %v5448 = vsub.s32 %v5445, %v5447
      %v5449 = vrot.slane %v5435, %v5448
      %v5450 = vcombine.low %v5394, %v5426
      %v5451 = vcombine.high %v5394, %v5426
      %v5452 = vcombine.low %v5401, %v5433
      %v5453 = vcombine.high %v5401, %v5433
      %v5454 = vcombine.low %v5410, %v5442
      %v5455 = vcombine.high %v5410, %v5442
      %v5456 = vcombine.low %v5417, %v5449
      %v5457 = vcombine.high %v5417, %v5449
      %v5458 = vcombine.low %v5277, %v5285
      %v5459 = vcombine.high %v5277, %v5285
      %v5461 = vunpack.c.l.s4 1983009808
      %v5462 = vunpack.c.0.s8 %v5461
      %v5463 = vlaneseq
      %v5464 = vshrl.u32 %v5463, 7
      %v5465 = vsub.s32 %v5462, %v5464
      %v5466 = vrot.slane %v5458, %v5465
      %v5468 = vunpack.c.l.s4 1983009808
      %v5469 = vunpack.c.0.s8 %v5468
      %v5470 = vlaneseq
      %v5471 = vshrl.u32 %v5470, 7
      %v5472 = vsub.s32 %v5469, %v5471
      %v5473 = vrot.slane %v5459, %v5472
      %v5474 = vcombine.low %v5281, %v5289
      %v5475 = vcombine.high %v5281, %v5289
      %v5477 = vunpack.c.l.s4 1983009808
      %v5478 = vunpack.c.0.s8 %v5477
      %v5479 = vlaneseq
      %v5480 = vshrl.u32 %v5479, 7
      %v5481 = vsub.s32 %v5478, %v5480
      %v5482 = vrot.slane %v5474, %v5481
      %v5484 = vunpack.c.l.s4 1983009808
      %v5485 = vunpack.c.0.s8 %v5484
      %v5486 = vlaneseq
      %v5487 = vshrl.u32 %v5486, 7
      %v5488 = vsub.s32 %v5485, %v5487
      %v5489 = vrot.slane %v5475, %v5488
      %v5490 = vcombine.low %v5293, %v5301
      %v5491 = vcombine.high %v5293, %v5301
      %v5493 = vunpack.c.l.s4 1983009808
      %v5494 = vunpack.c.0.s8 %v5493
      %v5495 = vlaneseq
      %v5496 = vshrl.u32 %v5495, 7
      %v5497 = vsub.s32 %v5494, %v5496
      %v5498 = vrot.slane %v5490, %v5497
      %v5500 = vunpack.c.l.s4 1983009808
      %v5501 = vunpack.c.0.s8 %v5500
      %v5502 = vlaneseq
      %v5503 = vshrl.u32 %v5502, 7
      %v5504 = vsub.s32 %v5501, %v5503
      %v5505 = vrot.slane %v5491, %v5504
      %v5506 = vcombine.low %v5297, %v5305
      %v5507 = vcombine.high %v5297, %v5305
      %v5509 = vunpack.c.l.s4 1983009808
      %v5510 = vunpack.c.0.s8 %v5509
      %v5511 = vlaneseq
      %v5512 = vshrl.u32 %v5511, 7
      %v5513 = vsub.s32 %v5510, %v5512
      %v5514 = vrot.slane %v5506, %v5513
      %v5516 = vunpack.c.l.s4 1983009808
      %v5517 = vunpack.c.0.s8 %v5516
      %v5518 = vlaneseq
      %v5519 = vshrl.u32 %v5518, 7
      %v5520 = vsub.s32 %v5517, %v5519
      %v5521 = vrot.slane %v5507, %v5520
      %v5522 = vcombine.low %v5466, %v5482
      %v5523 = vcombine.high %v5466, %v5482
      %v5525 = vunpack.c.l.s4 1934713408
      %v5526 = vunpack.c.0.s8 %v5525
      %v5527 = vlaneseq
      %v5528 = vshrl.u32 %v5527, 7
      %v5529 = vsub.s32 %v5526, %v5528
      %v5530 = vrot.slane %v5522, %v5529
      %v5532 = vunpack.c.l.s4 1934713408
      %v5533 = vunpack.c.0.s8 %v5532
      %v5534 = vlaneseq
      %v5535 = vshrl.u32 %v5534, 7
      %v5536 = vsub.s32 %v5533, %v5535
      %v5537 = vrot.slane %v5523, %v5536
      %v5538 = vcombine.low %v5473, %v5489
      %v5539 = vcombine.high %v5473, %v5489
      %v5541 = vunpack.c.l.s4 1934713408
      %v5542 = vunpack.c.0.s8 %v5541
      %v5543 = vlaneseq
      %v5544 = vshrl.u32 %v5543, 7
      %v5545 = vsub.s32 %v5542, %v5544
      %v5546 = vrot.slane %v5538, %v5545
      %v5548 = vunpack.c.l.s4 1934713408
      %v5549 = vunpack.c.0.s8 %v5548
      %v5550 = vlaneseq
      %v5551 = vshrl.u32 %v5550, 7
      %v5552 = vsub.s32 %v5549, %v5551
      %v5553 = vrot.slane %v5539, %v5552
      %v5554 = vcombine.low %v5498, %v5514
      %v5555 = vcombine.high %v5498, %v5514
      %v5557 = vunpack.c.l.s4 1934713408
      %v5558 = vunpack.c.0.s8 %v5557
      %v5559 = vlaneseq
      %v5560 = vshrl.u32 %v5559, 7
      %v5561 = vsub.s32 %v5558, %v5560
      %v5562 = vrot.slane %v5554, %v5561
      %v5564 = vunpack.c.l.s4 1934713408
      %v5565 = vunpack.c.0.s8 %v5564
      %v5566 = vlaneseq
      %v5567 = vshrl.u32 %v5566, 7
      %v5568 = vsub.s32 %v5565, %v5567
      %v5569 = vrot.slane %v5555, %v5568
      %v5570 = vcombine.low %v5505, %v5521
      %v5571 = vcombine.high %v5505, %v5521
      %v5573 = vunpack.c.l.s4 1934713408
      %v5574 = vunpack.c.0.s8 %v5573
      %v5575 = vlaneseq
      %v5576 = vshrl.u32 %v5575, 7
      %v5577 = vsub.s32 %v5574, %v5576
      %v5578 = vrot.slane %v5570, %v5577
      %v5580 = vunpack.c.l.s4 1934713408
      %v5581 = vunpack.c.0.s8 %v5580
      %v5582 = vlaneseq
      %v5583 = vshrl.u32 %v5582, 7
      %v5584 = vsub.s32 %v5581, %v5583
      %v5585 = vrot.slane %v5571, %v5584
      %v5586 = vcombine.low %v5530, %v5562
      %v5587 = vcombine.high %v5530, %v5562
      %v5588 = vcombine.low %v5537, %v5569
      %v5589 = vcombine.high %v5537, %v5569
      %v5590 = vcombine.low %v5546, %v5578
      %v5591 = vcombine.high %v5546, %v5578
      %v5592 = vcombine.low %v5553, %v5585
      %v5593 = vcombine.high %v5553, %v5585
      %5595 = vrot.lane.b32.xlu0 %v5451, 16
      %v5596 = vpop.permute.xlu0 %5595
      %5599 = vrot.lane.b32.xlu0 %v5452, 32
      %v5600 = vpop.permute.xlu0 %5599
      %5603 = vrot.lane.b32.xlu0 %v5453, 48
      %v5604 = vpop.permute.xlu0 %5603
      %5607 = vrot.lane.b32.xlu0 %v5454, 64
      %v5608 = vpop.permute.xlu0 %5607
      %5611 = vrot.lane.b32.xlu0 %v5455, 80
      %v5612 = vpop.permute.xlu0 %5611
      %5615 = vrot.lane.b32.xlu0 %v5456, 96
      %v5616 = vpop.permute.xlu0 %5615
      %5619 = vrot.lane.b32.xlu0 %v5457, 112
      %v5620 = vpop.permute.xlu0 %5619
      %5623 = vrot.lane.b32.xlu0 %v5587, 16
      %v5624 = vpop.permute.xlu0 %5623
      %5627 = vrot.lane.b32.xlu0 %v5588, 32
      %v5628 = vpop.permute.xlu0 %5627
      %5631 = vrot.lane.b32.xlu0 %v5589, 48
      %v5632 = vpop.permute.xlu0 %5631
      %5635 = vrot.lane.b32.xlu0 %v5590, 64
      %v5636 = vpop.permute.xlu0 %5635
      %5639 = vrot.lane.b32.xlu0 %v5591, 80
      %v5640 = vpop.permute.xlu0 %5639
      %5643 = vrot.lane.b32.xlu0 %v5592, 96
      %v5644 = vpop.permute.xlu0 %5643
      %5647 = vrot.lane.b32.xlu0 %v5593, 112
      %v5648 = vpop.permute.xlu0 %5647
      %v5650 = vsel %vm733, %v5450, %v5596
      %v5651 = vsel %vm735, %v5650, %v5600
      %v5652 = vsel %vm737, %v5651, %v5604
      %v5653 = vsel %vm739, %v5652, %v5608
      %v5654 = vsel %vm741, %v5653, %v5612
      %v5655 = vsel %vm743, %v5654, %v5616
      %v5656 = vsel %vm745, %v5655, %v5620
      %v5657 = vsel %vm733, %v5586, %v5624
      %v5658 = vsel %vm735, %v5657, %v5628
      %v5659 = vsel %vm737, %v5658, %v5632
      %v5660 = vsel %vm739, %v5659, %v5636
      %v5661 = vsel %vm741, %v5660, %v5640
      %v5662 = vsel %vm743, %v5661, %v5644
      %v5663 = vsel %vm745, %v5662, %v5648
      %5664 = vrot.lane.b32.xlu0 %v4878, 126
      %v5665 = vpop.permute.xlu0 %5664
      %5666 = vrot.lane.b32.xlu0 %v4880, 126
      %v5667 = vpop.permute.xlu0 %5666
      %5668 = vrot.lane.b32.xlu0 %v4883, 126
      %v5669 = vpop.permute.xlu0 %5668
      %5670 = vrot.lane.b32.xlu0 %v4885, 126
      %v5671 = vpop.permute.xlu0 %5670
      %5672 = vrot.lane.b32.xlu0 %v4888, 126
      %v5673 = vpop.permute.xlu0 %5672
      %5674 = vrot.lane.b32.xlu0 %v4890, 126
      %v5675 = vpop.permute.xlu0 %5674
      %5676 = vrot.lane.b32.xlu0 %v4893, 126
      %v5677 = vpop.permute.xlu0 %5676
      %5678 = vrot.lane.b32.xlu0 %v4895, 126
      %v5679 = vpop.permute.xlu0 %5678
      %5680 = vrot.lane.b32.xlu0 %v4898, 126
      %v5681 = vpop.permute.xlu0 %5680
      %5682 = vrot.lane.b32.xlu0 %v4900, 126
      %v5683 = vpop.permute.xlu0 %5682
      %5684 = vrot.lane.b32.xlu0 %v4903, 126
      %v5685 = vpop.permute.xlu0 %5684
      %5686 = vrot.lane.b32.xlu0 %v4905, 126
      %v5687 = vpop.permute.xlu0 %5686
      %5688 = vrot.lane.b32.xlu0 %v4908, 126
      %v5689 = vpop.permute.xlu0 %5688
      %5690 = vrot.lane.b32.xlu0 %v4910, 126
      %v5691 = vpop.permute.xlu0 %5690
      %5692 = vrot.lane.b32.xlu0 %v4913, 126
      %v5693 = vpop.permute.xlu0 %5692
      %5694 = vrot.lane.b32.xlu0 %v4915, 126
      %v5695 = vpop.permute.xlu0 %5694
      %v5712 = vcombine.low %v5665, %v5673
      %v5713 = vcombine.high %v5665, %v5673
      %v5715 = vunpack.c.l.s4 1983009808
      %v5716 = vunpack.c.0.s8 %v5715
      %v5717 = vlaneseq
      %v5718 = vshrl.u32 %v5717, 7
      %v5719 = vsub.s32 %v5716, %v5718
      %v5720 = vrot.slane %v5712, %v5719
      %v5722 = vunpack.c.l.s4 1983009808
      %v5723 = vunpack.c.0.s8 %v5722
      %v5724 = vlaneseq
      %v5725 = vshrl.u32 %v5724, 7
      %v5726 = vsub.s32 %v5723, %v5725
      %v5727 = vrot.slane %v5713, %v5726
      %v5728 = vcombine.low %v5669, %v5677
      %v5729 = vcombine.high %v5669, %v5677
      %v5731 = vunpack.c.l.s4 1983009808
      %v5732 = vunpack.c.0.s8 %v5731
      %v5733 = vlaneseq
      %v5734 = vshrl.u32 %v5733, 7
      %v5735 = vsub.s32 %v5732, %v5734
      %v5736 = vrot.slane %v5728, %v5735
      %v5738 = vunpack.c.l.s4 1983009808
      %v5739 = vunpack.c.0.s8 %v5738
      %v5740 = vlaneseq
      %v5741 = vshrl.u32 %v5740, 7
      %v5742 = vsub.s32 %v5739, %v5741
      %v5743 = vrot.slane %v5729, %v5742
      %v5744 = vcombine.low %v5681, %v5689
      %v5745 = vcombine.high %v5681, %v5689
      %v5747 = vunpack.c.l.s4 1983009808
      %v5748 = vunpack.c.0.s8 %v5747
      %v5749 = vlaneseq
      %v5750 = vshrl.u32 %v5749, 7
      %v5751 = vsub.s32 %v5748, %v5750
      %v5752 = vrot.slane %v5744, %v5751
      %v5754 = vunpack.c.l.s4 1983009808
      %v5755 = vunpack.c.0.s8 %v5754
      %v5756 = vlaneseq
      %v5757 = vshrl.u32 %v5756, 7
      %v5758 = vsub.s32 %v5755, %v5757
      %v5759 = vrot.slane %v5745, %v5758
      %v5760 = vcombine.low %v5685, %v5693
      %v5761 = vcombine.high %v5685, %v5693
      %v5763 = vunpack.c.l.s4 1983009808
      %v5764 = vunpack.c.0.s8 %v5763
      %v5765 = vlaneseq
      %v5766 = vshrl.u32 %v5765, 7
      %v5767 = vsub.s32 %v5764, %v5766
      %v5768 = vrot.slane %v5760, %v5767
      %v5770 = vunpack.c.l.s4 1983009808
      %v5771 = vunpack.c.0.s8 %v5770
      %v5772 = vlaneseq
      %v5773 = vshrl.u32 %v5772, 7
      %v5774 = vsub.s32 %v5771, %v5773
      %v5775 = vrot.slane %v5761, %v5774
      %v5776 = vcombine.low %v5720, %v5736
      %v5777 = vcombine.high %v5720, %v5736
      %v5779 = vunpack.c.l.s4 1934713408
      %v5780 = vunpack.c.0.s8 %v5779
      %v5781 = vlaneseq
      %v5782 = vshrl.u32 %v5781, 7
      %v5783 = vsub.s32 %v5780, %v5782
      %v5784 = vrot.slane %v5776, %v5783
      %v5786 = vunpack.c.l.s4 1934713408
      %v5787 = vunpack.c.0.s8 %v5786
      %v5788 = vlaneseq
      %v5789 = vshrl.u32 %v5788, 7
      %v5790 = vsub.s32 %v5787, %v5789
      %v5791 = vrot.slane %v5777, %v5790
      %v5792 = vcombine.low %v5727, %v5743
      %v5793 = vcombine.high %v5727, %v5743
      %v5795 = vunpack.c.l.s4 1934713408
      %v5796 = vunpack.c.0.s8 %v5795
      %v5797 = vlaneseq
      %v5798 = vshrl.u32 %v5797, 7
      %v5799 = vsub.s32 %v5796, %v5798
      %v5800 = vrot.slane %v5792, %v5799
      %v5802 = vunpack.c.l.s4 1934713408
      %v5803 = vunpack.c.0.s8 %v5802
      %v5804 = vlaneseq
      %v5805 = vshrl.u32 %v5804, 7
      %v5806 = vsub.s32 %v5803, %v5805
      %v5807 = vrot.slane %v5793, %v5806
      %v5808 = vcombine.low %v5752, %v5768
      %v5809 = vcombine.high %v5752, %v5768
      %v5811 = vunpack.c.l.s4 1934713408
      %v5812 = vunpack.c.0.s8 %v5811
      %v5813 = vlaneseq
      %v5814 = vshrl.u32 %v5813, 7
      %v5815 = vsub.s32 %v5812, %v5814
      %v5816 = vrot.slane %v5808, %v5815
      %v5818 = vunpack.c.l.s4 1934713408
      %v5819 = vunpack.c.0.s8 %v5818
      %v5820 = vlaneseq
      %v5821 = vshrl.u32 %v5820, 7
      %v5822 = vsub.s32 %v5819, %v5821
      %v5823 = vrot.slane %v5809, %v5822
      %v5824 = vcombine.low %v5759, %v5775
      %v5825 = vcombine.high %v5759, %v5775
      %v5827 = vunpack.c.l.s4 1934713408
      %v5828 = vunpack.c.0.s8 %v5827
      %v5829 = vlaneseq
      %v5830 = vshrl.u32 %v5829, 7
      %v5831 = vsub.s32 %v5828, %v5830
      %v5832 = vrot.slane %v5824, %v5831
      %v5834 = vunpack.c.l.s4 1934713408
      %v5835 = vunpack.c.0.s8 %v5834
      %v5836 = vlaneseq
      %v5837 = vshrl.u32 %v5836, 7
      %v5838 = vsub.s32 %v5835, %v5837
      %v5839 = vrot.slane %v5825, %v5838
      %v5840 = vcombine.low %v5784, %v5816
      %v5841 = vcombine.high %v5784, %v5816
      %v5842 = vcombine.low %v5791, %v5823
      %v5843 = vcombine.high %v5791, %v5823
      %v5844 = vcombine.low %v5800, %v5832
      %v5845 = vcombine.high %v5800, %v5832
      %v5846 = vcombine.low %v5807, %v5839
      %v5847 = vcombine.high %v5807, %v5839
      %v5848 = vcombine.low %v5667, %v5675
      %v5849 = vcombine.high %v5667, %v5675
      %v5851 = vunpack.c.l.s4 1983009808
      %v5852 = vunpack.c.0.s8 %v5851
      %v5853 = vlaneseq
      %v5854 = vshrl.u32 %v5853, 7
      %v5855 = vsub.s32 %v5852, %v5854
      %v5856 = vrot.slane %v5848, %v5855
      %v5858 = vunpack.c.l.s4 1983009808
      %v5859 = vunpack.c.0.s8 %v5858
      %v5860 = vlaneseq
      %v5861 = vshrl.u32 %v5860, 7
      %v5862 = vsub.s32 %v5859, %v5861
      %v5863 = vrot.slane %v5849, %v5862
      %v5864 = vcombine.low %v5671, %v5679
      %v5865 = vcombine.high %v5671, %v5679
      %v5867 = vunpack.c.l.s4 1983009808
      %v5868 = vunpack.c.0.s8 %v5867
      %v5869 = vlaneseq
      %v5870 = vshrl.u32 %v5869, 7
      %v5871 = vsub.s32 %v5868, %v5870
      %v5872 = vrot.slane %v5864, %v5871
      %v5874 = vunpack.c.l.s4 1983009808
      %v5875 = vunpack.c.0.s8 %v5874
      %v5876 = vlaneseq
      %v5877 = vshrl.u32 %v5876, 7
      %v5878 = vsub.s32 %v5875, %v5877
      %v5879 = vrot.slane %v5865, %v5878
      %v5880 = vcombine.low %v5683, %v5691
      %v5881 = vcombine.high %v5683, %v5691
      %v5883 = vunpack.c.l.s4 1983009808
      %v5884 = vunpack.c.0.s8 %v5883
      %v5885 = vlaneseq
      %v5886 = vshrl.u32 %v5885, 7
      %v5887 = vsub.s32 %v5884, %v5886
      %v5888 = vrot.slane %v5880, %v5887
      %v5890 = vunpack.c.l.s4 1983009808
      %v5891 = vunpack.c.0.s8 %v5890
      %v5892 = vlaneseq
      %v5893 = vshrl.u32 %v5892, 7
      %v5894 = vsub.s32 %v5891, %v5893
      %v5895 = vrot.slane %v5881, %v5894
      %v5896 = vcombine.low %v5687, %v5695
      %v5897 = vcombine.high %v5687, %v5695
      %v5899 = vunpack.c.l.s4 1983009808
      %v5900 = vunpack.c.0.s8 %v5899
      %v5901 = vlaneseq
      %v5902 = vshrl.u32 %v5901, 7
      %v5903 = vsub.s32 %v5900, %v5902
      %v5904 = vrot.slane %v5896, %v5903
      %v5906 = vunpack.c.l.s4 1983009808
      %v5907 = vunpack.c.0.s8 %v5906
      %v5908 = vlaneseq
      %v5909 = vshrl.u32 %v5908, 7
      %v5910 = vsub.s32 %v5907, %v5909
      %v5911 = vrot.slane %v5897, %v5910
      %v5912 = vcombine.low %v5856, %v5872
      %v5913 = vcombine.high %v5856, %v5872
      %v5915 = vunpack.c.l.s4 1934713408
      %v5916 = vunpack.c.0.s8 %v5915
      %v5917 = vlaneseq
      %v5918 = vshrl.u32 %v5917, 7
      %v5919 = vsub.s32 %v5916, %v5918
      %v5920 = vrot.slane %v5912, %v5919
      %v5922 = vunpack.c.l.s4 1934713408
      %v5923 = vunpack.c.0.s8 %v5922
      %v5924 = vlaneseq
      %v5925 = vshrl.u32 %v5924, 7
      %v5926 = vsub.s32 %v5923, %v5925
      %v5927 = vrot.slane %v5913, %v5926
      %v5928 = vcombine.low %v5863, %v5879
      %v5929 = vcombine.high %v5863, %v5879
      %v5931 = vunpack.c.l.s4 1934713408
      %v5932 = vunpack.c.0.s8 %v5931
      %v5933 = vlaneseq
      %v5934 = vshrl.u32 %v5933, 7
      %v5935 = vsub.s32 %v5932, %v5934
      %v5936 = vrot.slane %v5928, %v5935
      %v5938 = vunpack.c.l.s4 1934713408
      %v5939 = vunpack.c.0.s8 %v5938
      %v5940 = vlaneseq
      %v5941 = vshrl.u32 %v5940, 7
      %v5942 = vsub.s32 %v5939, %v5941
      %v5943 = vrot.slane %v5929, %v5942
      %v5944 = vcombine.low %v5888, %v5904
      %v5945 = vcombine.high %v5888, %v5904
      %v5947 = vunpack.c.l.s4 1934713408
      %v5948 = vunpack.c.0.s8 %v5947
      %v5949 = vlaneseq
      %v5950 = vshrl.u32 %v5949, 7
      %v5951 = vsub.s32 %v5948, %v5950
      %v5952 = vrot.slane %v5944, %v5951
      %v5954 = vunpack.c.l.s4 1934713408
      %v5955 = vunpack.c.0.s8 %v5954
      %v5956 = vlaneseq
      %v5957 = vshrl.u32 %v5956, 7
      %v5958 = vsub.s32 %v5955, %v5957
      %v5959 = vrot.slane %v5945, %v5958
      %v5960 = vcombine.low %v5895, %v5911
      %v5961 = vcombine.high %v5895, %v5911
      %v5963 = vunpack.c.l.s4 1934713408
      %v5964 = vunpack.c.0.s8 %v5963
      %v5965 = vlaneseq
      %v5966 = vshrl.u32 %v5965, 7
      %v5967 = vsub.s32 %v5964, %v5966
      %v5968 = vrot.slane %v5960, %v5967
      %v5970 = vunpack.c.l.s4 1934713408
      %v5971 = vunpack.c.0.s8 %v5970
      %v5972 = vlaneseq
      %v5973 = vshrl.u32 %v5972, 7
      %v5974 = vsub.s32 %v5971, %v5973
      %v5975 = vrot.slane %v5961, %v5974
      %v5976 = vcombine.low %v5920, %v5952
      %v5977 = vcombine.high %v5920, %v5952
      %v5978 = vcombine.low %v5927, %v5959
      %v5979 = vcombine.high %v5927, %v5959
      %v5980 = vcombine.low %v5936, %v5968
      %v5981 = vcombine.high %v5936, %v5968
      %v5982 = vcombine.low %v5943, %v5975
      %v5983 = vcombine.high %v5943, %v5975
      %5985 = vrot.lane.b32.xlu0 %v5841, 16
      %v5986 = vpop.permute.xlu0 %5985
      %5989 = vrot.lane.b32.xlu0 %v5842, 32
      %v5990 = vpop.permute.xlu0 %5989
      %5993 = vrot.lane.b32.xlu0 %v5843, 48
      %v5994 = vpop.permute.xlu0 %5993
      %5997 = vrot.lane.b32.xlu0 %v5844, 64
      %v5998 = vpop.permute.xlu0 %5997
      %6001 = vrot.lane.b32.xlu0 %v5845, 80
      %v6002 = vpop.permute.xlu0 %6001
      %6005 = vrot.lane.b32.xlu0 %v5846, 96
      %v6006 = vpop.permute.xlu0 %6005
      %6009 = vrot.lane.b32.xlu0 %v5847, 112
      %v6010 = vpop.permute.xlu0 %6009
      %6013 = vrot.lane.b32.xlu0 %v5977, 16
      %v6014 = vpop.permute.xlu0 %6013
      %6017 = vrot.lane.b32.xlu0 %v5978, 32
      %v6018 = vpop.permute.xlu0 %6017
      %6021 = vrot.lane.b32.xlu0 %v5979, 48
      %v6022 = vpop.permute.xlu0 %6021
      %6025 = vrot.lane.b32.xlu0 %v5980, 64
      %v6026 = vpop.permute.xlu0 %6025
      %6029 = vrot.lane.b32.xlu0 %v5981, 80
      %v6030 = vpop.permute.xlu0 %6029
      %6033 = vrot.lane.b32.xlu0 %v5982, 96
      %v6034 = vpop.permute.xlu0 %6033
      %6037 = vrot.lane.b32.xlu0 %v5983, 112
      %v6038 = vpop.permute.xlu0 %6037
      %v6040 = vsel %vm733, %v5840, %v5986
      %v6041 = vsel %vm735, %v6040, %v5990
      %v6042 = vsel %vm737, %v6041, %v5994
      %v6043 = vsel %vm739, %v6042, %v5998
      %v6044 = vsel %vm741, %v6043, %v6002
      %v6045 = vsel %vm743, %v6044, %v6006
      %v6046 = vsel %vm745, %v6045, %v6010
      %v6047 = vsel %vm733, %v5976, %v6014
      %v6048 = vsel %vm735, %v6047, %v6018
      %v6049 = vsel %vm737, %v6048, %v6022
      %v6050 = vsel %vm739, %v6049, %v6026
      %v6051 = vsel %vm741, %v6050, %v6030
      %v6052 = vsel %vm743, %v6051, %v6034
      %v6053 = vsel %vm745, %v6052, %v6038
      %v6054 = vrot.slane %v3706, 2
      %v6055 = vrot.slane %v3707, 2
      %v6056 = vsel %vm2124, %v6054, %v6055
      %v6057 = vrot.slane %v3708, 2
      %v6058 = vsel %vm2124, %v6055, %v6057
      %v6059 = vrot.slane %v3709, 2
      %v6060 = vrot.slane %v3710, 2
      %v6061 = vsel %vm2124, %v6059, %v6060
      %v6062 = vrot.slane %v3711, 2
      %v6063 = vsel %vm2124, %v6060, %v6062
      %v6064 = vrot.slane %v3712, 2
      %v6065 = vrot.slane %v3713, 2
      %v6066 = vsel %vm2124, %v6064, %v6065
      %v6067 = vrot.slane %v3714, 2
      %v6068 = vsel %vm2124, %v6065, %v6067
      %v6069 = vrot.slane %v3715, 2
      %v6070 = vrot.slane %v3716, 2
      %v6071 = vsel %vm2124, %v6069, %v6070
      %v6072 = vrot.slane %v3717, 2
      %v6073 = vsel %vm2124, %v6070, %v6072
      %v6074 = vrot.slane %v3718, 2
      %v6075 = vrot.slane %v3719, 2
      %v6076 = vsel %vm2124, %v6074, %v6075
      %v6077 = vrot.slane %v3720, 2
      %v6078 = vsel %vm2124, %v6075, %v6077
      %v6079 = vrot.slane %v3721, 2
      %v6080 = vrot.slane %v3722, 2
      %v6081 = vsel %vm2124, %v6079, %v6080
      %v6082 = vrot.slane %v3723, 2
      %v6083 = vsel %vm2124, %v6080, %v6082
      %v6084 = vrot.slane %v3724, 2
      %v6085 = vrot.slane %v3725, 2
      %v6086 = vsel %vm2124, %v6084, %v6085
      %v6087 = vrot.slane %v3726, 2
      %v6088 = vsel %vm2124, %v6085, %v6087
      %v6089 = vrot.slane %v3727, 2
      %v6090 = vrot.slane %v3728, 2
      %v6091 = vsel %vm2124, %v6089, %v6090
      %v6092 = vrot.slane %v3729, 2
      %v6093 = vsel %vm2124, %v6090, %v6092
      %v6110 = vcombine.low %v6056, %v6066
      %v6111 = vcombine.high %v6056, %v6066
      %v6113 = vunpack.c.l.s4 1983009808
      %v6114 = vunpack.c.0.s8 %v6113
      %v6115 = vlaneseq
      %v6116 = vshrl.u32 %v6115, 7
      %v6117 = vsub.s32 %v6114, %v6116
      %v6118 = vrot.slane %v6110, %v6117
      %v6120 = vunpack.c.l.s4 1983009808
      %v6121 = vunpack.c.0.s8 %v6120
      %v6122 = vlaneseq
      %v6123 = vshrl.u32 %v6122, 7
      %v6124 = vsub.s32 %v6121, %v6123
      %v6125 = vrot.slane %v6111, %v6124
      %v6126 = vcombine.low %v6061, %v6071
      %v6127 = vcombine.high %v6061, %v6071
      %v6129 = vunpack.c.l.s4 1983009808
      %v6130 = vunpack.c.0.s8 %v6129
      %v6131 = vlaneseq
      %v6132 = vshrl.u32 %v6131, 7
      %v6133 = vsub.s32 %v6130, %v6132
      %v6134 = vrot.slane %v6126, %v6133
      %v6136 = vunpack.c.l.s4 1983009808
      %v6137 = vunpack.c.0.s8 %v6136
      %v6138 = vlaneseq
      %v6139 = vshrl.u32 %v6138, 7
      %v6140 = vsub.s32 %v6137, %v6139
      %v6141 = vrot.slane %v6127, %v6140
      %v6142 = vcombine.low %v6076, %v6086
      %v6143 = vcombine.high %v6076, %v6086
      %v6145 = vunpack.c.l.s4 1983009808
      %v6146 = vunpack.c.0.s8 %v6145
      %v6147 = vlaneseq
      %v6148 = vshrl.u32 %v6147, 7
      %v6149 = vsub.s32 %v6146, %v6148
      %v6150 = vrot.slane %v6142, %v6149
      %v6152 = vunpack.c.l.s4 1983009808
      %v6153 = vunpack.c.0.s8 %v6152
      %v6154 = vlaneseq
      %v6155 = vshrl.u32 %v6154, 7
      %v6156 = vsub.s32 %v6153, %v6155
      %v6157 = vrot.slane %v6143, %v6156
      %v6158 = vcombine.low %v6081, %v6091
      %v6159 = vcombine.high %v6081, %v6091
      %v6161 = vunpack.c.l.s4 1983009808
      %v6162 = vunpack.c.0.s8 %v6161
      %v6163 = vlaneseq
      %v6164 = vshrl.u32 %v6163, 7
      %v6165 = vsub.s32 %v6162, %v6164
      %v6166 = vrot.slane %v6158, %v6165
      %v6168 = vunpack.c.l.s4 1983009808
      %v6169 = vunpack.c.0.s8 %v6168
      %v6170 = vlaneseq
      %v6171 = vshrl.u32 %v6170, 7
      %v6172 = vsub.s32 %v6169, %v6171
      %v6173 = vrot.slane %v6159, %v6172
      %v6174 = vcombine.low %v6118, %v6134
      %v6175 = vcombine.high %v6118, %v6134
      %v6177 = vunpack.c.l.s4 1934713408
      %v6178 = vunpack.c.0.s8 %v6177
      %v6179 = vlaneseq
      %v6180 = vshrl.u32 %v6179, 7
      %v6181 = vsub.s32 %v6178, %v6180
      %v6182 = vrot.slane %v6174, %v6181
      %v6184 = vunpack.c.l.s4 1934713408
      %v6185 = vunpack.c.0.s8 %v6184
      %v6186 = vlaneseq
      %v6187 = vshrl.u32 %v6186, 7
      %v6188 = vsub.s32 %v6185, %v6187
      %v6189 = vrot.slane %v6175, %v6188
      %v6190 = vcombine.low %v6125, %v6141
      %v6191 = vcombine.high %v6125, %v6141
      %v6193 = vunpack.c.l.s4 1934713408
      %v6194 = vunpack.c.0.s8 %v6193
      %v6195 = vlaneseq
      %v6196 = vshrl.u32 %v6195, 7
      %v6197 = vsub.s32 %v6194, %v6196
      %v6198 = vrot.slane %v6190, %v6197
      %v6200 = vunpack.c.l.s4 1934713408
      %v6201 = vunpack.c.0.s8 %v6200
      %v6202 = vlaneseq
      %v6203 = vshrl.u32 %v6202, 7
      %v6204 = vsub.s32 %v6201, %v6203
      %v6205 = vrot.slane %v6191, %v6204
      %v6206 = vcombine.low %v6150, %v6166
      %v6207 = vcombine.high %v6150, %v6166
      %v6209 = vunpack.c.l.s4 1934713408
      %v6210 = vunpack.c.0.s8 %v6209
      %v6211 = vlaneseq
      %v6212 = vshrl.u32 %v6211, 7
      %v6213 = vsub.s32 %v6210, %v6212
      %v6214 = vrot.slane %v6206, %v6213
      %v6216 = vunpack.c.l.s4 1934713408
      %v6217 = vunpack.c.0.s8 %v6216
      %v6218 = vlaneseq
      %v6219 = vshrl.u32 %v6218, 7
      %v6220 = vsub.s32 %v6217, %v6219
      %v6221 = vrot.slane %v6207, %v6220
      %v6222 = vcombine.low %v6157, %v6173
      %v6223 = vcombine.high %v6157, %v6173
      %v6225 = vunpack.c.l.s4 1934713408
      %v6226 = vunpack.c.0.s8 %v6225
      %v6227 = vlaneseq
      %v6228 = vshrl.u32 %v6227, 7
      %v6229 = vsub.s32 %v6226, %v6228
      %v6230 = vrot.slane %v6222, %v6229
      %v6232 = vunpack.c.l.s4 1934713408
      %v6233 = vunpack.c.0.s8 %v6232
      %v6234 = vlaneseq
      %v6235 = vshrl.u32 %v6234, 7
      %v6236 = vsub.s32 %v6233, %v6235
      %v6237 = vrot.slane %v6223, %v6236
      %v6238 = vcombine.low %v6182, %v6214
      %v6239 = vcombine.high %v6182, %v6214
      %v6240 = vcombine.low %v6189, %v6221
      %v6241 = vcombine.high %v6189, %v6221
      %v6242 = vcombine.low %v6198, %v6230
      %v6243 = vcombine.high %v6198, %v6230
      %v6244 = vcombine.low %v6205, %v6237
      %v6245 = vcombine.high %v6205, %v6237
      %v6246 = vcombine.low %v6058, %v6068
      %v6247 = vcombine.high %v6058, %v6068
      %v6249 = vunpack.c.l.s4 1983009808
      %v6250 = vunpack.c.0.s8 %v6249
      %v6251 = vlaneseq
      %v6252 = vshrl.u32 %v6251, 7
      %v6253 = vsub.s32 %v6250, %v6252
      %v6254 = vrot.slane %v6246, %v6253
      %v6256 = vunpack.c.l.s4 1983009808
      %v6257 = vunpack.c.0.s8 %v6256
      %v6258 = vlaneseq
      %v6259 = vshrl.u32 %v6258, 7
      %v6260 = vsub.s32 %v6257, %v6259
      %v6261 = vrot.slane %v6247, %v6260
      %v6262 = vcombine.low %v6063, %v6073
      %v6263 = vcombine.high %v6063, %v6073
      %v6265 = vunpack.c.l.s4 1983009808
      %v6266 = vunpack.c.0.s8 %v6265
      %v6267 = vlaneseq
      %v6268 = vshrl.u32 %v6267, 7
      %v6269 = vsub.s32 %v6266, %v6268
      %v6270 = vrot.slane %v6262, %v6269
      %v6272 = vunpack.c.l.s4 1983009808
      %v6273 = vunpack.c.0.s8 %v6272
      %v6274 = vlaneseq
      %v6275 = vshrl.u32 %v6274, 7
      %v6276 = vsub.s32 %v6273, %v6275
      %v6277 = vrot.slane %v6263, %v6276
      %v6278 = vcombine.low %v6078, %v6088
      %v6279 = vcombine.high %v6078, %v6088
      %v6281 = vunpack.c.l.s4 1983009808
      %v6282 = vunpack.c.0.s8 %v6281
      %v6283 = vlaneseq
      %v6284 = vshrl.u32 %v6283, 7
      %v6285 = vsub.s32 %v6282, %v6284
      %v6286 = vrot.slane %v6278, %v6285
      %v6288 = vunpack.c.l.s4 1983009808
      %v6289 = vunpack.c.0.s8 %v6288
      %v6290 = vlaneseq
      %v6291 = vshrl.u32 %v6290, 7
      %v6292 = vsub.s32 %v6289, %v6291
      %v6293 = vrot.slane %v6279, %v6292
      %v6294 = vcombine.low %v6083, %v6093
      %v6295 = vcombine.high %v6083, %v6093
      %v6297 = vunpack.c.l.s4 1983009808
      %v6298 = vunpack.c.0.s8 %v6297
      %v6299 = vlaneseq
      %v6300 = vshrl.u32 %v6299, 7
      %v6301 = vsub.s32 %v6298, %v6300
      %v6302 = vrot.slane %v6294, %v6301
      %v6304 = vunpack.c.l.s4 1983009808
      %v6305 = vunpack.c.0.s8 %v6304
      %v6306 = vlaneseq
      %v6307 = vshrl.u32 %v6306, 7
      %v6308 = vsub.s32 %v6305, %v6307
      %v6309 = vrot.slane %v6295, %v6308
      %v6310 = vcombine.low %v6254, %v6270
      %v6311 = vcombine.high %v6254, %v6270
      %v6313 = vunpack.c.l.s4 1934713408
      %v6314 = vunpack.c.0.s8 %v6313
      %v6315 = vlaneseq
      %v6316 = vshrl.u32 %v6315, 7
      %v6317 = vsub.s32 %v6314, %v6316
      %v6318 = vrot.slane %v6310, %v6317
      %v6320 = vunpack.c.l.s4 1934713408
      %v6321 = vunpack.c.0.s8 %v6320
      %v6322 = vlaneseq
      %v6323 = vshrl.u32 %v6322, 7
      %v6324 = vsub.s32 %v6321, %v6323
      %v6325 = vrot.slane %v6311, %v6324
      %v6326 = vcombine.low %v6261, %v6277
      %v6327 = vcombine.high %v6261, %v6277
      %v6329 = vunpack.c.l.s4 1934713408
      %v6330 = vunpack.c.0.s8 %v6329
      %v6331 = vlaneseq
      %v6332 = vshrl.u32 %v6331, 7
      %v6333 = vsub.s32 %v6330, %v6332
      %v6334 = vrot.slane %v6326, %v6333
      %v6336 = vunpack.c.l.s4 1934713408
      %v6337 = vunpack.c.0.s8 %v6336
      %v6338 = vlaneseq
      %v6339 = vshrl.u32 %v6338, 7
      %v6340 = vsub.s32 %v6337, %v6339
      %v6341 = vrot.slane %v6327, %v6340
      %v6342 = vcombine.low %v6286, %v6302
      %v6343 = vcombine.high %v6286, %v6302
      %v6345 = vunpack.c.l.s4 1934713408
      %v6346 = vunpack.c.0.s8 %v6345
      %v6347 = vlaneseq
      %v6348 = vshrl.u32 %v6347, 7
      %v6349 = vsub.s32 %v6346, %v6348
      %v6350 = vrot.slane %v6342, %v6349
      %v6352 = vunpack.c.l.s4 1934713408
      %v6353 = vunpack.c.0.s8 %v6352
      %v6354 = vlaneseq
      %v6355 = vshrl.u32 %v6354, 7
      %v6356 = vsub.s32 %v6353, %v6355
      %v6357 = vrot.slane %v6343, %v6356
      %v6358 = vcombine.low %v6293, %v6309
      %v6359 = vcombine.high %v6293, %v6309
      %v6361 = vunpack.c.l.s4 1934713408
      %v6362 = vunpack.c.0.s8 %v6361
      %v6363 = vlaneseq
      %v6364 = vshrl.u32 %v6363, 7
      %v6365 = vsub.s32 %v6362, %v6364
      %v6366 = vrot.slane %v6358, %v6365
      %v6368 = vunpack.c.l.s4 1934713408
      %v6369 = vunpack.c.0.s8 %v6368
      %v6370 = vlaneseq
      %v6371 = vshrl.u32 %v6370, 7
      %v6372 = vsub.s32 %v6369, %v6371
      %v6373 = vrot.slane %v6359, %v6372
      %v6374 = vcombine.low %v6318, %v6350
      %v6375 = vcombine.high %v6318, %v6350
      %v6376 = vcombine.low %v6325, %v6357
      %v6377 = vcombine.high %v6325, %v6357
      %v6378 = vcombine.low %v6334, %v6366
      %v6379 = vcombine.high %v6334, %v6366
      %v6380 = vcombine.low %v6341, %v6373
      %v6381 = vcombine.high %v6341, %v6373
      %6383 = vrot.lane.b32.xlu0 %v6239, 16
      %v6384 = vpop.permute.xlu0 %6383
      %6387 = vrot.lane.b32.xlu0 %v6240, 32
      %v6388 = vpop.permute.xlu0 %6387
      %6391 = vrot.lane.b32.xlu0 %v6241, 48
      %v6392 = vpop.permute.xlu0 %6391
      %6395 = vrot.lane.b32.xlu0 %v6242, 64
      %v6396 = vpop.permute.xlu0 %6395
      %6399 = vrot.lane.b32.xlu0 %v6243, 80
      %v6400 = vpop.permute.xlu0 %6399
      %6403 = vrot.lane.b32.xlu0 %v6244, 96
      %v6404 = vpop.permute.xlu0 %6403
      %6407 = vrot.lane.b32.xlu0 %v6245, 112
      %v6408 = vpop.permute.xlu0 %6407
      %6411 = vrot.lane.b32.xlu0 %v6375, 16
      %v6412 = vpop.permute.xlu0 %6411
      %6415 = vrot.lane.b32.xlu0 %v6376, 32
      %v6416 = vpop.permute.xlu0 %6415
      %6419 = vrot.lane.b32.xlu0 %v6377, 48
      %v6420 = vpop.permute.xlu0 %6419
      %6423 = vrot.lane.b32.xlu0 %v6378, 64
      %v6424 = vpop.permute.xlu0 %6423
      %6427 = vrot.lane.b32.xlu0 %v6379, 80
      %v6428 = vpop.permute.xlu0 %6427
      %6431 = vrot.lane.b32.xlu0 %v6380, 96
      %v6432 = vpop.permute.xlu0 %6431
      %6435 = vrot.lane.b32.xlu0 %v6381, 112
      %v6436 = vpop.permute.xlu0 %6435
      %v6438 = vsel %vm733, %v6238, %v6384
      %v6439 = vsel %vm735, %v6438, %v6388
      %v6440 = vsel %vm737, %v6439, %v6392
      %v6441 = vsel %vm739, %v6440, %v6396
      %v6442 = vsel %vm741, %v6441, %v6400
      %v6443 = vsel %vm743, %v6442, %v6404
      %v6444 = vsel %vm745, %v6443, %v6408
      %v6445 = vsel %vm733, %v6374, %v6412
      %v6446 = vsel %vm735, %v6445, %v6416
      %v6447 = vsel %vm737, %v6446, %v6420
      %v6448 = vsel %vm739, %v6447, %v6424
      %v6449 = vsel %vm741, %v6448, %v6428
      %v6450 = vsel %vm743, %v6449, %v6432
      %v6451 = vsel %vm745, %v6450, %v6436
      %6452 = vrot.lane.b32.xlu0 %v6056, 127
      %v6453 = vpop.permute.xlu0 %6452
      %6454 = vrot.lane.b32.xlu0 %v6058, 127
      %v6455 = vpop.permute.xlu0 %6454
      %6456 = vrot.lane.b32.xlu0 %v6061, 127
      %v6457 = vpop.permute.xlu0 %6456
      %6458 = vrot.lane.b32.xlu0 %v6063, 127
      %v6459 = vpop.permute.xlu0 %6458
      %6460 = vrot.lane.b32.xlu0 %v6066, 127
      %v6461 = vpop.permute.xlu0 %6460
      %6462 = vrot.lane.b32.xlu0 %v6068, 127
      %v6463 = vpop.permute.xlu0 %6462
      %6464 = vrot.lane.b32.xlu0 %v6071, 127
      %v6465 = vpop.permute.xlu0 %6464
      %6466 = vrot.lane.b32.xlu0 %v6073, 127
      %v6467 = vpop.permute.xlu0 %6466
      %6468 = vrot.lane.b32.xlu0 %v6076, 127
      %v6469 = vpop.permute.xlu0 %6468
      %6470 = vrot.lane.b32.xlu0 %v6078, 127
      %v6471 = vpop.permute.xlu0 %6470
      %6472 = vrot.lane.b32.xlu0 %v6081, 127
      %v6473 = vpop.permute.xlu0 %6472
      %6474 = vrot.lane.b32.xlu0 %v6083, 127
      %v6475 = vpop.permute.xlu0 %6474
      %6476 = vrot.lane.b32.xlu0 %v6086, 127
      %v6477 = vpop.permute.xlu0 %6476
      %6478 = vrot.lane.b32.xlu0 %v6088, 127
      %v6479 = vpop.permute.xlu0 %6478
      %6480 = vrot.lane.b32.xlu0 %v6091, 127
      %v6481 = vpop.permute.xlu0 %6480
      %6482 = vrot.lane.b32.xlu0 %v6093, 127
      %v6483 = vpop.permute.xlu0 %6482
      %v6500 = vcombine.low %v6453, %v6461
      %v6501 = vcombine.high %v6453, %v6461
      %v6503 = vunpack.c.l.s4 1983009808
      %v6504 = vunpack.c.0.s8 %v6503
      %v6505 = vlaneseq
      %v6506 = vshrl.u32 %v6505, 7
      %v6507 = vsub.s32 %v6504, %v6506
      %v6508 = vrot.slane %v6500, %v6507
      %v6510 = vunpack.c.l.s4 1983009808
      %v6511 = vunpack.c.0.s8 %v6510
      %v6512 = vlaneseq
      %v6513 = vshrl.u32 %v6512, 7
      %v6514 = vsub.s32 %v6511, %v6513
      %v6515 = vrot.slane %v6501, %v6514
      %v6516 = vcombine.low %v6457, %v6465
      %v6517 = vcombine.high %v6457, %v6465
      %v6519 = vunpack.c.l.s4 1983009808
      %v6520 = vunpack.c.0.s8 %v6519
      %v6521 = vlaneseq
      %v6522 = vshrl.u32 %v6521, 7
      %v6523 = vsub.s32 %v6520, %v6522
      %v6524 = vrot.slane %v6516, %v6523
      %v6526 = vunpack.c.l.s4 1983009808
      %v6527 = vunpack.c.0.s8 %v6526
      %v6528 = vlaneseq
      %v6529 = vshrl.u32 %v6528, 7
      %v6530 = vsub.s32 %v6527, %v6529
      %v6531 = vrot.slane %v6517, %v6530
      %v6532 = vcombine.low %v6469, %v6477
      %v6533 = vcombine.high %v6469, %v6477
      %v6535 = vunpack.c.l.s4 1983009808
      %v6536 = vunpack.c.0.s8 %v6535
      %v6537 = vlaneseq
      %v6538 = vshrl.u32 %v6537, 7
      %v6539 = vsub.s32 %v6536, %v6538
      %v6540 = vrot.slane %v6532, %v6539
      %v6542 = vunpack.c.l.s4 1983009808
      %v6543 = vunpack.c.0.s8 %v6542
      %v6544 = vlaneseq
      %v6545 = vshrl.u32 %v6544, 7
      %v6546 = vsub.s32 %v6543, %v6545
      %v6547 = vrot.slane %v6533, %v6546
      %v6548 = vcombine.low %v6473, %v6481
      %v6549 = vcombine.high %v6473, %v6481
      %v6551 = vunpack.c.l.s4 1983009808
      %v6552 = vunpack.c.0.s8 %v6551
      %v6553 = vlaneseq
      %v6554 = vshrl.u32 %v6553, 7
      %v6555 = vsub.s32 %v6552, %v6554
      %v6556 = vrot.slane %v6548, %v6555
      %v6558 = vunpack.c.l.s4 1983009808
      %v6559 = vunpack.c.0.s8 %v6558
      %v6560 = vlaneseq
      %v6561 = vshrl.u32 %v6560, 7
      %v6562 = vsub.s32 %v6559, %v6561
      %v6563 = vrot.slane %v6549, %v6562
      %v6564 = vcombine.low %v6508, %v6524
      %v6565 = vcombine.high %v6508, %v6524
      %v6567 = vunpack.c.l.s4 1934713408
      %v6568 = vunpack.c.0.s8 %v6567
      %v6569 = vlaneseq
      %v6570 = vshrl.u32 %v6569, 7
      %v6571 = vsub.s32 %v6568, %v6570
      %v6572 = vrot.slane %v6564, %v6571
      %v6574 = vunpack.c.l.s4 1934713408
      %v6575 = vunpack.c.0.s8 %v6574
      %v6576 = vlaneseq
      %v6577 = vshrl.u32 %v6576, 7
      %v6578 = vsub.s32 %v6575, %v6577
      %v6579 = vrot.slane %v6565, %v6578
      %v6580 = vcombine.low %v6515, %v6531
      %v6581 = vcombine.high %v6515, %v6531
      %v6583 = vunpack.c.l.s4 1934713408
      %v6584 = vunpack.c.0.s8 %v6583
      %v6585 = vlaneseq
      %v6586 = vshrl.u32 %v6585, 7
      %v6587 = vsub.s32 %v6584, %v6586
      %v6588 = vrot.slane %v6580, %v6587
      %v6590 = vunpack.c.l.s4 1934713408
      %v6591 = vunpack.c.0.s8 %v6590
      %v6592 = vlaneseq
      %v6593 = vshrl.u32 %v6592, 7
      %v6594 = vsub.s32 %v6591, %v6593
      %v6595 = vrot.slane %v6581, %v6594
      %v6596 = vcombine.low %v6540, %v6556
      %v6597 = vcombine.high %v6540, %v6556
      %v6599 = vunpack.c.l.s4 1934713408
      %v6600 = vunpack.c.0.s8 %v6599
      %v6601 = vlaneseq
      %v6602 = vshrl.u32 %v6601, 7
      %v6603 = vsub.s32 %v6600, %v6602
      %v6604 = vrot.slane %v6596, %v6603
      %v6606 = vunpack.c.l.s4 1934713408
      %v6607 = vunpack.c.0.s8 %v6606
      %v6608 = vlaneseq
      %v6609 = vshrl.u32 %v6608, 7
      %v6610 = vsub.s32 %v6607, %v6609
      %v6611 = vrot.slane %v6597, %v6610
      %v6612 = vcombine.low %v6547, %v6563
      %v6613 = vcombine.high %v6547, %v6563
      %v6615 = vunpack.c.l.s4 1934713408
      %v6616 = vunpack.c.0.s8 %v6615
      %v6617 = vlaneseq
      %v6618 = vshrl.u32 %v6617, 7
      %v6619 = vsub.s32 %v6616, %v6618
      %v6620 = vrot.slane %v6612, %v6619
      %v6622 = vunpack.c.l.s4 1934713408
      %v6623 = vunpack.c.0.s8 %v6622
      %v6624 = vlaneseq
      %v6625 = vshrl.u32 %v6624, 7
      %v6626 = vsub.s32 %v6623, %v6625
      %v6627 = vrot.slane %v6613, %v6626
      %v6628 = vcombine.low %v6572, %v6604
      %v6629 = vcombine.high %v6572, %v6604
      %v6630 = vcombine.low %v6579, %v6611
      %v6631 = vcombine.high %v6579, %v6611
      %v6632 = vcombine.low %v6588, %v6620
      %v6633 = vcombine.high %v6588, %v6620
      %v6634 = vcombine.low %v6595, %v6627
      %v6635 = vcombine.high %v6595, %v6627
      %v6636 = vcombine.low %v6455, %v6463
      %v6637 = vcombine.high %v6455, %v6463
      %v6639 = vunpack.c.l.s4 1983009808
      %v6640 = vunpack.c.0.s8 %v6639
      %v6641 = vlaneseq
      %v6642 = vshrl.u32 %v6641, 7
      %v6643 = vsub.s32 %v6640, %v6642
      %v6644 = vrot.slane %v6636, %v6643
      %v6646 = vunpack.c.l.s4 1983009808
      %v6647 = vunpack.c.0.s8 %v6646
      %v6648 = vlaneseq
      %v6649 = vshrl.u32 %v6648, 7
      %v6650 = vsub.s32 %v6647, %v6649
      %v6651 = vrot.slane %v6637, %v6650
      %v6652 = vcombine.low %v6459, %v6467
      %v6653 = vcombine.high %v6459, %v6467
      %v6655 = vunpack.c.l.s4 1983009808
      %v6656 = vunpack.c.0.s8 %v6655
      %v6657 = vlaneseq
      %v6658 = vshrl.u32 %v6657, 7
      %v6659 = vsub.s32 %v6656, %v6658
      %v6660 = vrot.slane %v6652, %v6659
      %v6662 = vunpack.c.l.s4 1983009808
      %v6663 = vunpack.c.0.s8 %v6662
      %v6664 = vlaneseq
      %v6665 = vshrl.u32 %v6664, 7
      %v6666 = vsub.s32 %v6663, %v6665
      %v6667 = vrot.slane %v6653, %v6666
      %v6668 = vcombine.low %v6471, %v6479
      %v6669 = vcombine.high %v6471, %v6479
      %v6671 = vunpack.c.l.s4 1983009808
      %v6672 = vunpack.c.0.s8 %v6671
      %v6673 = vlaneseq
      %v6674 = vshrl.u32 %v6673, 7
      %v6675 = vsub.s32 %v6672, %v6674
      %v6676 = vrot.slane %v6668, %v6675
      %v6678 = vunpack.c.l.s4 1983009808
      %v6679 = vunpack.c.0.s8 %v6678
      %v6680 = vlaneseq
      %v6681 = vshrl.u32 %v6680, 7
      %v6682 = vsub.s32 %v6679, %v6681
      %v6683 = vrot.slane %v6669, %v6682
      %v6684 = vcombine.low %v6475, %v6483
      %v6685 = vcombine.high %v6475, %v6483
      %v6687 = vunpack.c.l.s4 1983009808
      %v6688 = vunpack.c.0.s8 %v6687
      %v6689 = vlaneseq
      %v6690 = vshrl.u32 %v6689, 7
      %v6691 = vsub.s32 %v6688, %v6690
      %v6692 = vrot.slane %v6684, %v6691
      %v6694 = vunpack.c.l.s4 1983009808
      %v6695 = vunpack.c.0.s8 %v6694
      %v6696 = vlaneseq
      %v6697 = vshrl.u32 %v6696, 7
      %v6698 = vsub.s32 %v6695, %v6697
      %v6699 = vrot.slane %v6685, %v6698
      %v6700 = vcombine.low %v6644, %v6660
      %v6701 = vcombine.high %v6644, %v6660
      %v6703 = vunpack.c.l.s4 1934713408
      %v6704 = vunpack.c.0.s8 %v6703
      %v6705 = vlaneseq
      %v6706 = vshrl.u32 %v6705, 7
      %v6707 = vsub.s32 %v6704, %v6706
      %v6708 = vrot.slane %v6700, %v6707
      %v6710 = vunpack.c.l.s4 1934713408
      %v6711 = vunpack.c.0.s8 %v6710
      %v6712 = vlaneseq
      %v6713 = vshrl.u32 %v6712, 7
      %v6714 = vsub.s32 %v6711, %v6713
      %v6715 = vrot.slane %v6701, %v6714
      %v6716 = vcombine.low %v6651, %v6667
      %v6717 = vcombine.high %v6651, %v6667
      %v6719 = vunpack.c.l.s4 1934713408
      %v6720 = vunpack.c.0.s8 %v6719
      %v6721 = vlaneseq
      %v6722 = vshrl.u32 %v6721, 7
      %v6723 = vsub.s32 %v6720, %v6722
      %v6724 = vrot.slane %v6716, %v6723
      %v6726 = vunpack.c.l.s4 1934713408
      %v6727 = vunpack.c.0.s8 %v6726
      %v6728 = vlaneseq
      %v6729 = vshrl.u32 %v6728, 7
      %v6730 = vsub.s32 %v6727, %v6729
      %v6731 = vrot.slane %v6717, %v6730
      %v6732 = vcombine.low %v6676, %v6692
      %v6733 = vcombine.high %v6676, %v6692
      %v6735 = vunpack.c.l.s4 1934713408
      %v6736 = vunpack.c.0.s8 %v6735
      %v6737 = vlaneseq
      %v6738 = vshrl.u32 %v6737, 7
      %v6739 = vsub.s32 %v6736, %v6738
      %v6740 = vrot.slane %v6732, %v6739
      %v6742 = vunpack.c.l.s4 1934713408
      %v6743 = vunpack.c.0.s8 %v6742
      %v6744 = vlaneseq
      %v6745 = vshrl.u32 %v6744, 7
      %v6746 = vsub.s32 %v6743, %v6745
      %v6747 = vrot.slane %v6733, %v6746
      %v6748 = vcombine.low %v6683, %v6699
      %v6749 = vcombine.high %v6683, %v6699
      %v6751 = vunpack.c.l.s4 1934713408
      %v6752 = vunpack.c.0.s8 %v6751
      %v6753 = vlaneseq
      %v6754 = vshrl.u32 %v6753, 7
      %v6755 = vsub.s32 %v6752, %v6754
      %v6756 = vrot.slane %v6748, %v6755
      %v6758 = vunpack.c.l.s4 1934713408
      %v6759 = vunpack.c.0.s8 %v6758
      %v6760 = vlaneseq
      %v6761 = vshrl.u32 %v6760, 7
      %v6762 = vsub.s32 %v6759, %v6761
      %v6763 = vrot.slane %v6749, %v6762
      %v6764 = vcombine.low %v6708, %v6740
      %v6765 = vcombine.high %v6708, %v6740
      %v6766 = vcombine.low %v6715, %v6747
      %v6767 = vcombine.high %v6715, %v6747
      %v6768 = vcombine.low %v6724, %v6756
      %v6769 = vcombine.high %v6724, %v6756
      %v6770 = vcombine.low %v6731, %v6763
      %v6771 = vcombine.high %v6731, %v6763
      %6773 = vrot.lane.b32.xlu0 %v6629, 16
      %v6774 = vpop.permute.xlu0 %6773
      %6777 = vrot.lane.b32.xlu0 %v6630, 32
      %v6778 = vpop.permute.xlu0 %6777
      %6781 = vrot.lane.b32.xlu0 %v6631, 48
      %v6782 = vpop.permute.xlu0 %6781
      %6785 = vrot.lane.b32.xlu0 %v6632, 64
      %v6786 = vpop.permute.xlu0 %6785
      %6789 = vrot.lane.b32.xlu0 %v6633, 80
      %v6790 = vpop.permute.xlu0 %6789
      %6793 = vrot.lane.b32.xlu0 %v6634, 96
      %v6794 = vpop.permute.xlu0 %6793
      %6797 = vrot.lane.b32.xlu0 %v6635, 112
      %v6798 = vpop.permute.xlu0 %6797
      %6801 = vrot.lane.b32.xlu0 %v6765, 16
      %v6802 = vpop.permute.xlu0 %6801
      %6805 = vrot.lane.b32.xlu0 %v6766, 32
      %v6806 = vpop.permute.xlu0 %6805
      %6809 = vrot.lane.b32.xlu0 %v6767, 48
      %v6810 = vpop.permute.xlu0 %6809
      %6813 = vrot.lane.b32.xlu0 %v6768, 64
      %v6814 = vpop.permute.xlu0 %6813
      %6817 = vrot.lane.b32.xlu0 %v6769, 80
      %v6818 = vpop.permute.xlu0 %6817
      %6821 = vrot.lane.b32.xlu0 %v6770, 96
      %v6822 = vpop.permute.xlu0 %6821
      %6825 = vrot.lane.b32.xlu0 %v6771, 112
      %v6826 = vpop.permute.xlu0 %6825
      %v6828 = vsel %vm733, %v6628, %v6774
      %v6829 = vsel %vm735, %v6828, %v6778
      %v6830 = vsel %vm737, %v6829, %v6782
      %v6831 = vsel %vm739, %v6830, %v6786
      %v6832 = vsel %vm741, %v6831, %v6790
      %v6833 = vsel %vm743, %v6832, %v6794
      %v6834 = vsel %vm745, %v6833, %v6798
      %v6835 = vsel %vm733, %v6764, %v6802
      %v6836 = vsel %vm735, %v6835, %v6806
      %v6837 = vsel %vm737, %v6836, %v6810
      %v6838 = vsel %vm739, %v6837, %v6814
      %v6839 = vsel %vm741, %v6838, %v6818
      %v6840 = vsel %vm743, %v6839, %v6822
      %v6841 = vsel %vm745, %v6840, %v6826
      %6842 = vrot.lane.b32.xlu0 %v6056, 126
      %v6843 = vpop.permute.xlu0 %6842
      %6844 = vrot.lane.b32.xlu0 %v6058, 126
      %v6845 = vpop.permute.xlu0 %6844
      %6846 = vrot.lane.b32.xlu0 %v6061, 126
      %v6847 = vpop.permute.xlu0 %6846
      %6848 = vrot.lane.b32.xlu0 %v6063, 126
      %v6849 = vpop.permute.xlu0 %6848
      %6850 = vrot.lane.b32.xlu0 %v6066, 126
      %v6851 = vpop.permute.xlu0 %6850
      %6852 = vrot.lane.b32.xlu0 %v6068, 126
      %v6853 = vpop.permute.xlu0 %6852
      %6854 = vrot.lane.b32.xlu0 %v6071, 126
      %v6855 = vpop.permute.xlu0 %6854
      %6856 = vrot.lane.b32.xlu0 %v6073, 126
      %v6857 = vpop.permute.xlu0 %6856
      %6858 = vrot.lane.b32.xlu0 %v6076, 126
      %v6859 = vpop.permute.xlu0 %6858
      %6860 = vrot.lane.b32.xlu0 %v6078, 126
      %v6861 = vpop.permute.xlu0 %6860
      %6862 = vrot.lane.b32.xlu0 %v6081, 126
      %v6863 = vpop.permute.xlu0 %6862
      %6864 = vrot.lane.b32.xlu0 %v6083, 126
      %v6865 = vpop.permute.xlu0 %6864
      %6866 = vrot.lane.b32.xlu0 %v6086, 126
      %v6867 = vpop.permute.xlu0 %6866
      %6868 = vrot.lane.b32.xlu0 %v6088, 126
      %v6869 = vpop.permute.xlu0 %6868
      %6870 = vrot.lane.b32.xlu0 %v6091, 126
      %v6871 = vpop.permute.xlu0 %6870
      %6872 = vrot.lane.b32.xlu0 %v6093, 126
      %v6873 = vpop.permute.xlu0 %6872
      %v6890 = vcombine.low %v6843, %v6851
      %v6891 = vcombine.high %v6843, %v6851
      %v6893 = vunpack.c.l.s4 1983009808
      %v6894 = vunpack.c.0.s8 %v6893
      %v6895 = vlaneseq
      %v6896 = vshrl.u32 %v6895, 7
      %v6897 = vsub.s32 %v6894, %v6896
      %v6898 = vrot.slane %v6890, %v6897
      %v6900 = vunpack.c.l.s4 1983009808
      %v6901 = vunpack.c.0.s8 %v6900
      %v6902 = vlaneseq
      %v6903 = vshrl.u32 %v6902, 7
      %v6904 = vsub.s32 %v6901, %v6903
      %v6905 = vrot.slane %v6891, %v6904
      %v6906 = vcombine.low %v6847, %v6855
      %v6907 = vcombine.high %v6847, %v6855
      %v6909 = vunpack.c.l.s4 1983009808
      %v6910 = vunpack.c.0.s8 %v6909
      %v6911 = vlaneseq
      %v6912 = vshrl.u32 %v6911, 7
      %v6913 = vsub.s32 %v6910, %v6912
      %v6914 = vrot.slane %v6906, %v6913
      %v6916 = vunpack.c.l.s4 1983009808
      %v6917 = vunpack.c.0.s8 %v6916
      %v6918 = vlaneseq
      %v6919 = vshrl.u32 %v6918, 7
      %v6920 = vsub.s32 %v6917, %v6919
      %v6921 = vrot.slane %v6907, %v6920
      %v6922 = vcombine.low %v6859, %v6867
      %v6923 = vcombine.high %v6859, %v6867
      %v6925 = vunpack.c.l.s4 1983009808
      %v6926 = vunpack.c.0.s8 %v6925
      %v6927 = vlaneseq
      %v6928 = vshrl.u32 %v6927, 7
      %v6929 = vsub.s32 %v6926, %v6928
      %v6930 = vrot.slane %v6922, %v6929
      %v6932 = vunpack.c.l.s4 1983009808
      %v6933 = vunpack.c.0.s8 %v6932
      %v6934 = vlaneseq
      %v6935 = vshrl.u32 %v6934, 7
      %v6936 = vsub.s32 %v6933, %v6935
      %v6937 = vrot.slane %v6923, %v6936
      %v6938 = vcombine.low %v6863, %v6871
      %v6939 = vcombine.high %v6863, %v6871
      %v6941 = vunpack.c.l.s4 1983009808
      %v6942 = vunpack.c.0.s8 %v6941
      %v6943 = vlaneseq
      %v6944 = vshrl.u32 %v6943, 7
      %v6945 = vsub.s32 %v6942, %v6944
      %v6946 = vrot.slane %v6938, %v6945
      %v6948 = vunpack.c.l.s4 1983009808
      %v6949 = vunpack.c.0.s8 %v6948
      %v6950 = vlaneseq
      %v6951 = vshrl.u32 %v6950, 7
      %v6952 = vsub.s32 %v6949, %v6951
      %v6953 = vrot.slane %v6939, %v6952
      %v6954 = vcombine.low %v6898, %v6914
      %v6955 = vcombine.high %v6898, %v6914
      %v6957 = vunpack.c.l.s4 1934713408
      %v6958 = vunpack.c.0.s8 %v6957
      %v6959 = vlaneseq
      %v6960 = vshrl.u32 %v6959, 7
      %v6961 = vsub.s32 %v6958, %v6960
      %v6962 = vrot.slane %v6954, %v6961
      %v6964 = vunpack.c.l.s4 1934713408
      %v6965 = vunpack.c.0.s8 %v6964
      %v6966 = vlaneseq
      %v6967 = vshrl.u32 %v6966, 7
      %v6968 = vsub.s32 %v6965, %v6967
      %v6969 = vrot.slane %v6955, %v6968
      %v6970 = vcombine.low %v6905, %v6921
      %v6971 = vcombine.high %v6905, %v6921
      %v6973 = vunpack.c.l.s4 1934713408
      %v6974 = vunpack.c.0.s8 %v6973
      %v6975 = vlaneseq
      %v6976 = vshrl.u32 %v6975, 7
      %v6977 = vsub.s32 %v6974, %v6976
      %v6978 = vrot.slane %v6970, %v6977
      %v6980 = vunpack.c.l.s4 1934713408
      %v6981 = vunpack.c.0.s8 %v6980
      %v6982 = vlaneseq
      %v6983 = vshrl.u32 %v6982, 7
      %v6984 = vsub.s32 %v6981, %v6983
      %v6985 = vrot.slane %v6971, %v6984
      %v6986 = vcombine.low %v6930, %v6946
      %v6987 = vcombine.high %v6930, %v6946
      %v6989 = vunpack.c.l.s4 1934713408
      %v6990 = vunpack.c.0.s8 %v6989
      %v6991 = vlaneseq
      %v6992 = vshrl.u32 %v6991, 7
      %v6993 = vsub.s32 %v6990, %v6992
      %v6994 = vrot.slane %v6986, %v6993
      %v6996 = vunpack.c.l.s4 1934713408
      %v6997 = vunpack.c.0.s8 %v6996
      %v6998 = vlaneseq
      %v6999 = vshrl.u32 %v6998, 7
      %v7000 = vsub.s32 %v6997, %v6999
      %v7001 = vrot.slane %v6987, %v7000
      %v7002 = vcombine.low %v6937, %v6953
      %v7003 = vcombine.high %v6937, %v6953
      %v7005 = vunpack.c.l.s4 1934713408
      %v7006 = vunpack.c.0.s8 %v7005
      %v7007 = vlaneseq
      %v7008 = vshrl.u32 %v7007, 7
      %v7009 = vsub.s32 %v7006, %v7008
      %v7010 = vrot.slane %v7002, %v7009
      %v7012 = vunpack.c.l.s4 1934713408
      %v7013 = vunpack.c.0.s8 %v7012
      %v7014 = vlaneseq
      %v7015 = vshrl.u32 %v7014, 7
      %v7016 = vsub.s32 %v7013, %v7015
      %v7017 = vrot.slane %v7003, %v7016
      %v7018 = vcombine.low %v6962, %v6994
      %v7019 = vcombine.high %v6962, %v6994
      %v7020 = vcombine.low %v6969, %v7001
      %v7021 = vcombine.high %v6969, %v7001
      %v7022 = vcombine.low %v6978, %v7010
      %v7023 = vcombine.high %v6978, %v7010
      %v7024 = vcombine.low %v6985, %v7017
      %v7025 = vcombine.high %v6985, %v7017
      %v7026 = vcombine.low %v6845, %v6853
      %v7027 = vcombine.high %v6845, %v6853
      %v7029 = vunpack.c.l.s4 1983009808
      %v7030 = vunpack.c.0.s8 %v7029
      %v7031 = vlaneseq
      %v7032 = vshrl.u32 %v7031, 7
      %v7033 = vsub.s32 %v7030, %v7032
      %v7034 = vrot.slane %v7026, %v7033
      %v7036 = vunpack.c.l.s4 1983009808
      %v7037 = vunpack.c.0.s8 %v7036
      %v7038 = vlaneseq
      %v7039 = vshrl.u32 %v7038, 7
      %v7040 = vsub.s32 %v7037, %v7039
      %v7041 = vrot.slane %v7027, %v7040
      %v7042 = vcombine.low %v6849, %v6857
      %v7043 = vcombine.high %v6849, %v6857
      %v7045 = vunpack.c.l.s4 1983009808
      %v7046 = vunpack.c.0.s8 %v7045
      %v7047 = vlaneseq
      %v7048 = vshrl.u32 %v7047, 7
      %v7049 = vsub.s32 %v7046, %v7048
      %v7050 = vrot.slane %v7042, %v7049
      %v7052 = vunpack.c.l.s4 1983009808
      %v7053 = vunpack.c.0.s8 %v7052
      %v7054 = vlaneseq
      %v7055 = vshrl.u32 %v7054, 7
      %v7056 = vsub.s32 %v7053, %v7055
      %v7057 = vrot.slane %v7043, %v7056
      %v7058 = vcombine.low %v6861, %v6869
      %v7059 = vcombine.high %v6861, %v6869
      %v7061 = vunpack.c.l.s4 1983009808
      %v7062 = vunpack.c.0.s8 %v7061
      %v7063 = vlaneseq
      %v7064 = vshrl.u32 %v7063, 7
      %v7065 = vsub.s32 %v7062, %v7064
      %v7066 = vrot.slane %v7058, %v7065
      %v7068 = vunpack.c.l.s4 1983009808
      %v7069 = vunpack.c.0.s8 %v7068
      %v7070 = vlaneseq
      %v7071 = vshrl.u32 %v7070, 7
      %v7072 = vsub.s32 %v7069, %v7071
      %v7073 = vrot.slane %v7059, %v7072
      %v7074 = vcombine.low %v6865, %v6873
      %v7075 = vcombine.high %v6865, %v6873
      %v7077 = vunpack.c.l.s4 1983009808
      %v7078 = vunpack.c.0.s8 %v7077
      %v7079 = vlaneseq
      %v7080 = vshrl.u32 %v7079, 7
      %v7081 = vsub.s32 %v7078, %v7080
      %v7082 = vrot.slane %v7074, %v7081
      %v7084 = vunpack.c.l.s4 1983009808
      %v7085 = vunpack.c.0.s8 %v7084
      %v7086 = vlaneseq
      %v7087 = vshrl.u32 %v7086, 7
      %v7088 = vsub.s32 %v7085, %v7087
      %v7089 = vrot.slane %v7075, %v7088
      %v7090 = vcombine.low %v7034, %v7050
      %v7091 = vcombine.high %v7034, %v7050
      %v7093 = vunpack.c.l.s4 1934713408
      %v7094 = vunpack.c.0.s8 %v7093
      %v7095 = vlaneseq
      %v7096 = vshrl.u32 %v7095, 7
      %v7097 = vsub.s32 %v7094, %v7096
      %v7098 = vrot.slane %v7090, %v7097
      %v7100 = vunpack.c.l.s4 1934713408
      %v7101 = vunpack.c.0.s8 %v7100
      %v7102 = vlaneseq
      %v7103 = vshrl.u32 %v7102, 7
      %v7104 = vsub.s32 %v7101, %v7103
      %v7105 = vrot.slane %v7091, %v7104
      %v7106 = vcombine.low %v7041, %v7057
      %v7107 = vcombine.high %v7041, %v7057
      %v7109 = vunpack.c.l.s4 1934713408
      %v7110 = vunpack.c.0.s8 %v7109
      %v7111 = vlaneseq
      %v7112 = vshrl.u32 %v7111, 7
      %v7113 = vsub.s32 %v7110, %v7112
      %v7114 = vrot.slane %v7106, %v7113
      %v7116 = vunpack.c.l.s4 1934713408
      %v7117 = vunpack.c.0.s8 %v7116
      %v7118 = vlaneseq
      %v7119 = vshrl.u32 %v7118, 7
      %v7120 = vsub.s32 %v7117, %v7119
      %v7121 = vrot.slane %v7107, %v7120
      %v7122 = vcombine.low %v7066, %v7082
      %v7123 = vcombine.high %v7066, %v7082
      %v7125 = vunpack.c.l.s4 1934713408
      %v7126 = vunpack.c.0.s8 %v7125
      %v7127 = vlaneseq
      %v7128 = vshrl.u32 %v7127, 7
      %v7129 = vsub.s32 %v7126, %v7128
      %v7130 = vrot.slane %v7122, %v7129
      %v7132 = vunpack.c.l.s4 1934713408
      %v7133 = vunpack.c.0.s8 %v7132
      %v7134 = vlaneseq
      %v7135 = vshrl.u32 %v7134, 7
      %v7136 = vsub.s32 %v7133, %v7135
      %v7137 = vrot.slane %v7123, %v7136
      %v7138 = vcombine.low %v7073, %v7089
      %v7139 = vcombine.high %v7073, %v7089
      %v7141 = vunpack.c.l.s4 1934713408
      %v7142 = vunpack.c.0.s8 %v7141
      %v7143 = vlaneseq
      %v7144 = vshrl.u32 %v7143, 7
      %v7145 = vsub.s32 %v7142, %v7144
      %v7146 = vrot.slane %v7138, %v7145
      %v7148 = vunpack.c.l.s4 1934713408
      %v7149 = vunpack.c.0.s8 %v7148
      %v7150 = vlaneseq
      %v7151 = vshrl.u32 %v7150, 7
      %v7152 = vsub.s32 %v7149, %v7151
      %v7153 = vrot.slane %v7139, %v7152
      %v7154 = vcombine.low %v7098, %v7130
      %v7155 = vcombine.high %v7098, %v7130
      %v7156 = vcombine.low %v7105, %v7137
      %v7157 = vcombine.high %v7105, %v7137
      %v7158 = vcombine.low %v7114, %v7146
      %v7159 = vcombine.high %v7114, %v7146
      %v7160 = vcombine.low %v7121, %v7153
      %v7161 = vcombine.high %v7121, %v7153
      %7163 = vrot.lane.b32.xlu0 %v7019, 16
      %v7164 = vpop.permute.xlu0 %7163
      %7167 = vrot.lane.b32.xlu0 %v7020, 32
      %v7168 = vpop.permute.xlu0 %7167
      %7171 = vrot.lane.b32.xlu0 %v7021, 48
      %v7172 = vpop.permute.xlu0 %7171
      %7175 = vrot.lane.b32.xlu0 %v7022, 64
      %v7176 = vpop.permute.xlu0 %7175
      %7179 = vrot.lane.b32.xlu0 %v7023, 80
      %v7180 = vpop.permute.xlu0 %7179
      %7183 = vrot.lane.b32.xlu0 %v7024, 96
      %v7184 = vpop.permute.xlu0 %7183
      %7187 = vrot.lane.b32.xlu0 %v7025, 112
      %v7188 = vpop.permute.xlu0 %7187
      %7191 = vrot.lane.b32.xlu0 %v7155, 16
      %v7192 = vpop.permute.xlu0 %7191
      %7195 = vrot.lane.b32.xlu0 %v7156, 32
      %v7196 = vpop.permute.xlu0 %7195
      %7199 = vrot.lane.b32.xlu0 %v7157, 48
      %v7200 = vpop.permute.xlu0 %7199
      %7203 = vrot.lane.b32.xlu0 %v7158, 64
      %v7204 = vpop.permute.xlu0 %7203
      %7207 = vrot.lane.b32.xlu0 %v7159, 80
      %v7208 = vpop.permute.xlu0 %7207
      %7211 = vrot.lane.b32.xlu0 %v7160, 96
      %v7212 = vpop.permute.xlu0 %7211
      %7215 = vrot.lane.b32.xlu0 %v7161, 112
      %v7216 = vpop.permute.xlu0 %7215
      %v7218 = vsel %vm733, %v7018, %v7164
      %v7219 = vsel %vm735, %v7218, %v7168
      %v7220 = vsel %vm737, %v7219, %v7172
      %v7221 = vsel %vm739, %v7220, %v7176
      %v7222 = vsel %vm741, %v7221, %v7180
      %v7223 = vsel %vm743, %v7222, %v7184
      %v7224 = vsel %vm745, %v7223, %v7188
      %v7225 = vsel %vm733, %v7154, %v7192
      %v7226 = vsel %vm735, %v7225, %v7196
      %v7227 = vsel %vm737, %v7226, %v7200
      %v7228 = vsel %vm739, %v7227, %v7204
      %v7229 = vsel %vm741, %v7228, %v7208
      %v7230 = vsel %vm743, %v7229, %v7212
      %v7231 = vsel %vm745, %v7230, %v7216
      %v7232 = vld [vmem:[%s3] sm:$0xff]
      %v7233 = vld [vmem:[%s4] sm:$0xff]
      %7235 = vset.pattern.permute.xlu0 0
      %7236 = vperm.xlu0 %7235, %v7233
      %v7237 = vpop.permute.xlu0 %7236
      %vm7239 = vcmask 588800
      %v7241 = vsel %vm7239, %v7232, 0
      %7243 = vmatprep.subr.mxu0 %v4071
      %7244 = vmatpush1.msra.mxu0 %v4064
      %7245 = vmatprep.subr.mxu0 %v4477
      %7246 = vmatpush1.msra.mxu0 %v4470
      %7247 = vmatprep.subr.mxu0 %v4867
      %7248 = vmatpush1.msra.mxu0 %v4860
      %7249 = vmatprep.subr.mxu0 %v5273
      %7250 = vmatpush1.msra.mxu0 %v5266
      %7251 = vmatprep.subr.mxu0 %v5663
      %7252 = vmatpush1.msra.mxu0 %v5656
      %7253 = vmatprep.subr.mxu0 %v6053
      %7254 = vmatpush1.msra.mxu0 %v6046
      %7255 = vmatprep.subr.mxu0 %v6451
      %7256 = vmatpush1.msra.mxu0 %v6444
      %7257 = vmatprep.subr.mxu0 %v6841
      %7258 = vmatpush1.msra.mxu0 %v6834
      %7259 = vmatprep.subr.mxu0 %v7231
      %7260 = vmatpush1.msra.mxu0 %v7224
      %7261 = vmatprep.subr.mxu0 0.0
      %7262 = vmatpush1.msra.mxu0 0.0
      %7263 = vmatprep.subr.mxu0 0.0
      %7264 = vmatpush1.msra.mxu0 0.0
      %7265 = vmatprep.subr.mxu0 0.0
      %7266 = vmatpush1.msra.mxu0 0.0
      %7267 = vmatprep.subr.mxu0 0.0
      %7268 = vmatpush1.msra.mxu0 0.0
      %7269 = vmatprep.subr.mxu0 0.0
      %7270 = vmatpush1.msra.mxu0 0.0
      %7271 = vmatprep.subr.mxu0 0.0
      %7272 = vmatpush1.msra.mxu0 0.0
      %7273 = vmatprep.subr.mxu0 0.0
      %7274 = vmatpush1.msra.mxu0 0.0
      %7275 = vmatprep.subr.mxu0 0.0
      %7276 = vmatpush1.msra.mxu0 0.0
      %7277 = vmatprep.subr.mxu0 0.0
      %7278 = vmatpush1.msra.mxu0 0.0
      %7279 = vmatprep.subr.mxu0 0.0
      %7280 = vmatpush1.msra.mxu0 0.0
      %7281 = vmatprep.subr.mxu0 0.0
      %7282 = vmatpush1.msra.mxu0 0.0
      %7283 = vmatprep.subr.mxu0 0.0
      %7284 = vmatpush1.msra.mxu0 0.0
      %7285 = vmatprep.subr.mxu0 0.0
      %7286 = vmatpush1.msra.mxu0 0.0
      %7287 = vmatprep.subr.mxu0 0.0
      %7288 = vmatpush1.msra.mxu0 0.0
      %7289 = vmatprep.subr.mxu0 0.0
      %7290 = vmatpush1.msra.mxu0 0.0
      %7291 = vmatprep.subr.mxu0 0.0
      %7292 = vmatpush1.msra.mxu0 0.0
      %7293 = vmatprep.subr.mxu0 0.0
      %7294 = vmatpush1.msra.mxu0 0.0
      %7295 = vmatprep.subr.mxu0 0.0
      %7296 = vmatpush1.msra.mxu0 0.0
      %7297 = vmatprep.subr.mxu0 0.0
      %7298 = vmatpush1.msra.mxu0 0.0
      %7299 = vmatprep.subr.mxu0 0.0
      %7300 = vmatpush1.msra.mxu0 0.0
      %7301 = vmatprep.subr.mxu0 0.0
      %7302 = vmatpush1.msra.mxu0 0.0
      %7303 = vmatprep.subr.mxu0 0.0
      %7304 = vmatpush1.msra.mxu0 0.0
      %7305 = vmatprep.subr.mxu0 0.0
      %7306 = vmatpush1.msra.mxu0 0.0
      %7307 = vmatprep.mubr.f32.mxu0 0.0
      %7308 = vmatmul.mubr.f32.gmra.mrb[0].mxu0 %v7241
      %v7309 = vpop.f32.mrb[0].mxu0
      %v7310 = vadd.f32 %v7237, %v7309
      %v7311 = vpop.f32.mrb[0].mxu0
      %v7312 = vadd.f32 %v7237, %v7311
      %7313 = vdwg.mxu0
      %v7314 = vmax.f32 %v7310, 0.0
      %v7315 = vmax.f32 %v7312, 0.0
      %7316 = vst [vmem:[%s246] sm:$0xff] %v7314
      %7317 = vst [vmem:[%s246 + $0x8] sm:$0xff] %v7315
      %s7318 = smul.u32 2, %s21
      %p7319 = scmp.lt.s32.totalorder %s20, 1
      %s7320 = scalar_select %p7319, %s20, 1
      %p7321 = scmp.lt.s32.totalorder %s7318, 1
      %s7322 = scalar_select %p7321, %s7318, 1
      %s7323 = smul.addr %s7320, 2
      %s7324 = sadd.s32 %s7322, %s7323
      %s7325 = smul.addr %s7324, 8
      %s7326 = scalar_lea.vmem %s5, %s7325
      // Predicated region
      $region45: #{double_conv.1} parent=39 // pred_check
        %p7327 = pneg %p158
      $region46: #{double_conv.1} parent=39 // pred_check_branch
        %7329 = sbr.rel (%p7327) target = $region48
      $region47: #{double_conv.1} parent=39 // pred_region
        %s7330 = smul.u32 2, %s21
      $region48: #{double_conv.1} parent=39 // pred_fallthru
        _
    $region40: #{double_conv.1} parent=5 // pred_fallthru
      _
    %p7331 = scmp.le.s32.totalorder 2, %s11
    // Predicated region
    $region49: #{double_conv.1} parent=5 // pred_check
      %p7332 = pneg %p7331
    $region50: #{double_conv.1} parent=5 // pred_check_branch
      %7334 = sbr.rel (%p7332) target = $region52
    $region51: #{double_conv.1} parent=5 // pred_region
      %s7335 = ssub.s32 %s11, 2
      // Predicated region
      $region53: #{double_conv.1} parent=51 // pred_check
        %p7336 = pneg %p164
      $region54: #{double_conv.1} parent=51 // pred_check_branch
        %7338 = sbr.rel (%p7336) target = $region56
      $region55: #{double_conv.1} parent=51 // pred_region
        %s7339 = smul.u32 2, %s23
        %p7340 = scmp.lt.s32.totalorder %s22, 1
        %s7341 = scalar_select %p7340, %s22, 1
        %p7342 = scmp.lt.s32.totalorder %s7339, 1
        %s7343 = scalar_select %p7342, %s7339, 1
        %s7344 = smul.addr %s7341, 2
        %s7345 = sadd.s32 %s7343, %s7344
        %s7346 = smul.addr %s7345, 8
        %s7347 = scalar_lea.vmem %s5, %s7346
      $region56: #{double_conv.1} parent=51 // pred_fallthru
        _
    $region52: #{double_conv.1} parent=5 // pred_fallthru
      _
  $region6: #{double_conv.1} parent=0 // loop_footer
    %s15 = sadd.s32 1, %s11
  $region7: #{double_conv.1} parent=0 // loop_footer_branch
    %10 = sbr.rel target = $region3
  $region8: #{double_conv.1} parent=0 // loop_exit
    _

</llo_original>
